<compile_context>
chip_gen: v7x
topology: tpu7x:2x2x1
jax: 0.10.0
libtpu: 0.0.40
codegen_flags: <defaults>
</compile_context>

<pallas_src>
import jax
import jax.numpy as jnp
from jax import lax
from jax.experimental import pallas as pl
from jax.experimental.pallas import tpu as pltpu


def _take_cols(a, start, size):
    """Static column extraction from a 2-D value.

    At production channel counts E is a multiple of 128 and this is a free lane slice.
    For tiny E (as in the test, E=8) the slice offset would be lane-unaligned, so we
    fall back to an exact one-hot selector matmul, which always lowers cleanly.
    """
    if start % 128 == 0:
        return a[:, start:start + size]
    k = a.shape[1]
    sel = (lax.broadcasted_iota(jnp.int32, (k, size), 0)
           == lax.broadcasted_iota(jnp.int32, (k, size), 1) + start)
    return jnp.dot(a, sel.astype(a.dtype), preferred_element_type=a.dtype)


def _make_kernel(H, W, C, E, TQ, N_KV, N_KV_PAD):
    HW = H * W

    def pool2x2(a):
        # a: (H*W, n), rows in row-major (h, w) order -> (H/2 * W/2, n)
        # NOTE: the review suggested a stride-2-slice formulation; the reshape chain is
        # kept because it is the form already proven to lower on Mosaic, and it runs
        # only once per batch element (off the per-tile critical path).
        hw, n = a.shape
        a2 = a.reshape(hw // 2, 2, n)                        # pair adjacent w
        aw = jnp.maximum(a2[:, 0, :], a2[:, 1, :])           # (H * W/2, n)
        ah = aw.reshape(H // 2, W, n)                        # rows: [h even | h odd]
        ap = jnp.maximum(ah[:, :W // 2, :], ah[:, W // 2:, :])
        return ap.reshape((H // 2) * (W // 2), n)

    def kernel(xf_ref, wqkv_ref, bqkv_ref, wwt_ref, bw_ref, mask_ref, out_ref,
               theta_scr, phi_scr, g_scr):
        q = pl.program_id(1)

        # ---- once per batch element: fused QKV projection + 2x2 max-pool of phi/g ----
        @pl.when(q == 0)
        def _():
            # x / weights already bf16 (cast in the wrapper); f32 accumulation on MXU.
            qkv = jnp.dot(xf_ref[...], wqkv_ref[...],
                          preferred_element_type=jnp.float32) + bqkv_ref[...]
            theta = _take_cols(qkv, 0, E)
            phi = _take_cols(qkv, E, E)
            g = _take_cols(qkv, 2 * E, E)
            theta_scr[...] = theta.astype(jnp.bfloat16)
            if N_KV_PAD != N_KV:
                # pad rows must be finite (additive -1e30 mask assumes bounded scores)
                # and pad g rows must be exactly zero.
                phi_scr[...] = jnp.zeros_like(phi_scr)
                g_scr[...] = jnp.zeros_like(g_scr)
            phi_scr[0:N_KV, :] = pool2x2(phi).astype(jnp.bfloat16)
            g_scr[0:N_KV, :] = pool2x2(g).astype(jnp.bfloat16)

        # ---- per query tile: attention + output (W) projection ----
        row0 = pl.multiple_of(q * TQ, TQ)
        theta_q = theta_scr[pl.ds(row0, TQ), :]                        # (TQ, E) bf16

        # f = theta @ phi^T  (bf16 operands, f32 accumulation)
        # TODO(synk): pre-transposing phi to (E, N_KV_PAD) at q == 0 (review item) is
        # deferred pending a pl.lower_as_mlir check that this contraction actually
        # relayouts phi per step.
        f = lax.dot_general(theta_q, phi_scr[...],
                            (((1,), (1,)), ((), ())),
                            preferred_element_type=jnp.float32)        # (TQ, N_KV_PAD)
        if N_KV_PAD != N_KV:
            f = f + mask_ref[...]            # additive pad-column bias (0 / -1e30)

        # softmax with DEFERRED normalization: scale the (TQ, E) result, not the
        # (TQ, N_KV_PAD) probabilities.
        m = jnp.max(f, axis=-1, keepdims=True)
        ef = jnp.exp(f - m)                                            # f32
        denom = jnp.sum(ef, axis=-1, keepdims=True)                    # (TQ, 1) f32
        y = jnp.dot(ef.astype(jnp.bfloat16), g_scr[...],
                    preferred_element_type=jnp.float32)                # (TQ, E)
        y = y * pl.reciprocal(denom, approx=True)

        # W (1x1 conv inter -> in_channels), emitted channel-first -> lane-dense store
        wy = lax.dot_general(wwt_ref[...], y.astype(jnp.bfloat16),
                             (((1,), (1,)), ((), ())),
                             preferred_element_type=jnp.float32)       # (C, TQ)
        out_ref[...] = (wy + bw_ref[...]).astype(out_ref.dtype)

    return kernel


def _choose_tq(HW, C, E, N_KV_PAD):
    """Pick the query tile: 256 on the 256-wide-MXU generations when VMEM allows."""
    if HW % 128 != 0:
        # TODO(synk): pad HW up to a multiple of 128 (masking pad query rows) instead
        # of a single whole-image tile for large odd-sized images.
        return HW

    def vmem_bytes(tq):
        return (2 * HW * C * 2             # double-buffered bf16 x block
                + HW * E * 2               # theta scratch (bf16)
                + 2 * N_KV_PAD * E * 2     # phi / g scratch (bf16)
                + 2 * C * tq * 2           # double-buffered bf16 output block
                + 3 * tq * N_KV_PAD * 4)   # f / exp / temps (f32)

    # v7x has only 64 MiB VMEM per TC; keep the estimated working set well under it.
    if HW % 256 == 0 and vmem_bytes(256) < 40 * 1024 * 1024:
        return 256
    return 128


def nonlocal_block_pallas(x_nchw, params):
    """Forward pass of NonLocalBlockND (2D, sub_sample=True, bn_layer=True)."""
    B, C, H, W = x_nchw.shape
    E = params["w_theta"].shape[1]
    # TODO(synk): PyTorch MaxPool2d(2) floors odd spatial dims; this path assumes even H, W.
    assert H % 2 == 0 and W % 2 == 0, "even H, W required"
    HW = H * W
    N_KV = (H // 2) * (W // 2)
    N_KV_PAD = ((N_KV + 127) // 128) * 128        # lane-dense scores / MXU-friendly K
    TQ = _choose_tq(HW, C, E, N_KV_PAD)
    NQ = HW // TQ

    # channels-last, spatially flattened, bf16 (halves x DMA bytes + VMEM residency)
    x_flat = jnp.transpose(x_nchw, (0, 2, 3, 1)).reshape(B, HW, C).astype(jnp.bfloat16)

    # Fuse the three 1x1 projections into one (C, 3E) bf16 weight (single MXU pass over x).
    w_qkv = jnp.concatenate([params["w_theta"], params["w_phi"], params["w_g"]],
                            axis=1).astype(jnp.bfloat16)
    b_qkv = jnp.concatenate([params["b_theta"], params["b_phi"], params["b_g"]],
                            axis=1).astype(jnp.float32)
    # W projection pre-transposed so the kernel emits channel-first (C, TQ) tiles.
    w_w_t = params["w_w"].T.astype(jnp.bfloat16)          # (C, E)
    b_w_col = params["b_w"].reshape(C, 1).astype(jnp.float32)
    # Additive pad-column bias for the softmax (0 for valid kv columns, -1e30 for pad).
    mask_row = jnp.where(jnp.arange(N_KV_PAD) < N_KV, 0.0, -1e30).astype(
        jnp.float32).reshape(1, N_KV_PAD)

    kernel = _make_kernel(H, W, C, E, TQ, N_KV, N_KV_PAD)

    # TODO(synk): on v7x (2 TCs, 64 MiB VMEM) the QKV/pool prologue could be split into
    # its own pallas_call (both axes "parallel"), q-invariant blocks single-buffered
    # with pl.Buffered(1), and very large images handled with a flash-style KV chunk
    # loop; deferred to keep this version's lowering identical to the verified one.
    wy_cf = pl.pallas_call(
        kernel,
        out_shape=jax.ShapeDtypeStruct((B, C, HW), jnp.bfloat16),
        grid=(B, NQ),
        in_specs=[
            # full image, resident across the query-tile axis (needed once per batch)
            pl.BlockSpec((pl.Squeezed(), HW, C), lambda b, q: (b, 0, 0)),
            pl.BlockSpec((C, 3 * E), lambda b, q: (0, 0)),   # fused w_theta|w_phi|w_g
            pl.BlockSpec((1, 3 * E), lambda b, q: (0, 0)),   # fused biases
            pl.BlockSpec((C, E), lambda b, q: (0, 0)),       # w_w^T
            pl.BlockSpec((C, 1), lambda b, q: (0, 0)),       # b_w (column)
            pl.BlockSpec((1, N_KV_PAD), lambda b, q: (0, 0)),  # pad-column bias row
        ],
        out_specs=pl.BlockSpec((pl.Squeezed(), C, TQ), lambda b, q: (b, 0, q)),
        scratch_shapes=[
            pltpu.VMEM((HW, E), jnp.bfloat16),         # theta, cached per batch element
            pltpu.VMEM((N_KV_PAD, E), jnp.bfloat16),   # pooled phi (padded rows)
            pltpu.VMEM((N_KV_PAD, E), jnp.bfloat16),   # pooled g   (padded rows)
        ],
        compiler_params=pltpu.CompilerParams(
            # batch axis parallel (megacore); query-tile axis must stay "arbitrary"
            # because the kv/theta scratch written at q == 0 is reused at q > 0.
            dimension_semantics=("parallel", "arbitrary"),
            vmem_limit_bytes=48 * 1024 * 1024,
        ),
    )(x_flat, w_qkv, b_qkv, w_w_t, b_w_col, mask_row)

    # bf16 writeback halves the (B, C, HW) HBM traffic; BN statistics stay in f32 here.
    w_y = wy_cf.astype(jnp.float32).reshape(B, C, H, W)   # already NCHW-ordered

    # BatchNorm2d (gamma=beta=0 at init) + residual in plain JAX (whole-batch stats).
    # TODO(synk): BatchNorm uses training-mode batch statistics; identical to the
    #             PyTorch module here only because gamma=beta=0 at init.
    mean = jnp.mean(w_y, axis=(0, 2, 3), keepdims=True)
    var = jnp.var(w_y, axis=(0, 2, 3), keepdims=True)
    gamma = params["bn_gamma"].reshape(1, C, 1, 1)
    beta = params["bn_beta"].reshape(1, C, 1, 1)
    bn = gamma * (w_y - mean) * lax.rsqrt(var + 1e-5) + beta
    return bn + x_nchw, w_y


def nonlocal_block_reference(x, params):
    """Pure-JAX f32 reference mirroring the PyTorch forward."""
    B, C, H, W = x.shape

    def conv1x1(a, w, b):               # a: NCHW, w: (C_in, C_out)
        return jnp.einsum("bchw,ce->behw", a, w) + b.reshape(1, -1, 1, 1)

    def maxpool2x2(a):
        B_, E_, H_, W_ = a.shape
        return jnp.max(a.reshape(B_, E_, H_ // 2, 2, W_ // 2, 2), axis=(3, 5))

    g = maxpool2x2(conv1x1(x, params["w_g"], params["b_g"]))
    theta = conv1x1(x, params["w_theta"], params["b_theta"])
    phi = maxpool2x2(conv1x1(x, params["w_phi"], params["b_phi"]))

    E = theta.shape[1]
    g_x = g.reshape(B, E, -1).transpose(0, 2, 1)
    theta_x = theta.reshape(B, E, -1).transpose(0, 2, 1)
    phi_x = phi.reshape(B, E, -1)

    f = theta_x @ phi_x
    p = jax.nn.softmax(f, axis=-1)
    y = (p @ g_x).transpose(0, 2, 1).reshape(B, E, H, W)

    w_y = jnp.einsum("behw,ec->bchw", y, params["w_w"]) + params["b_w"].reshape(1, -1, 1, 1)

    mean = jnp.mean(w_y, axis=(0, 2, 3), keepdims=True)
    var = jnp.var(w_y, axis=(0, 2, 3), keepdims=True)
    bn = (params["bn_gamma"].reshape(1, C, 1, 1) * (w_y - mean) * lax.rsqrt(var + 1e-5)
          + params["bn_beta"].reshape(1, C, 1, 1))
    return bn + x, w_y


if __name__ == "__main__":
    # Small shapes consistent with the module (NCHW input, inter_channels = C // 2)
    B, C, H, W = 2, 16, 16, 16
    E = C // 2

    key = jax.random.PRNGKey(0)
    kx, kg, kt, kp, kw, kbg, kbt, kbp, kbw = jax.random.split(key, 9)

    x = jax.random.normal(kx, (B, C, H, W), dtype=jnp.float32)

    params = {
        # 1x1 conv weights stored as (C_in, C_out) matrices; biases as (1, C_out)
        "w_g":     0.1 * jax.random.normal(kg, (C, E), dtype=jnp.float32),
        "b_g":     0.1 * jax.random.normal(kbg, (1, E), dtype=jnp.float32),
        "w_theta": 0.1 * jax.random.normal(kt, (C, E), dtype=jnp.float32),
        "b_theta": 0.1 * jax.random.normal(kbt, (1, E), dtype=jnp.float32),
        "w_phi":   0.1 * jax.random.normal(kp, (C, E), dtype=jnp.float32),
        "b_phi":   0.1 * jax.random.normal(kbp, (1, E), dtype=jnp.float32),
        "w_w":     0.1 * jax.random.normal(kw, (E, C), dtype=jnp.float32),
        "b_w":     0.1 * jax.random.normal(kbw, (1, C), dtype=jnp.float32),
        # BatchNorm2d(in_channels) with nn.init.constant_(weight, 0), constant_(bias, 0)
        "bn_gamma": jnp.zeros((C,), dtype=jnp.float32),
        "bn_beta":  jnp.zeros((C,), dtype=jnp.float32),
    }

    z, w_y = nonlocal_block_pallas(x, params)
    z = jax.block_until_ready(z)
    w_y = jax.block_until_ready(w_y)

    z_ref, w_y_ref = nonlocal_block_reference(x, params)
    # bf16 MXU operands + bf16 output + approx reciprocal -> compare loosely vs f32 ref
    assert jnp.allclose(w_y, w_y_ref, rtol=3e-2, atol=3e-2), "W_y mismatch"
    assert jnp.allclose(z, z_ref, rtol=3e-2, atol=3e-2), "z mismatch"

    print("KERNEL_OK")
</pallas_src>

<mosaic_0001>
module attributes {stable_mosaic.version = 11 : i64} {
  func.func @kernel(%arg0: i32, %arg1: i32, %arg2: memref<1x256x16xbf16, #tpu.memory_space<vmem>>, %arg3: memref<16x24xbf16, #tpu.memory_space<vmem>>, %arg4: memref<1x24xf32, #tpu.memory_space<vmem>>, %arg5: memref<16x8xbf16, #tpu.memory_space<vmem>>, %arg6: memref<16x1xf32, #tpu.memory_space<vmem>>, %arg7: memref<1x128xf32, #tpu.memory_space<vmem>>, %arg8: memref<1x16x256xbf16, #tpu.memory_space<vmem>>, %arg9: memref<256x8xbf16, #tpu.memory_space<vmem>>, %arg10: memref<128x8xbf16, #tpu.memory_space<vmem>>, %arg11: memref<128x8xbf16, #tpu.memory_space<vmem>>) attributes {dimension_semantics = [#tpu.dimension_semantics<parallel>, #tpu.dimension_semantics<arbitrary>], iteration_bounds = array<i64: 2, 1>, scalar_prefetch = 0 : i64, scratch_operands = 3 : i64, tpu.core_type = #tpu.core_type<tc>, window_params = [{transform_indices = @transform_0, window_bounds = array<i64: 1, 256, 16>}, {pipeline_mode = #tpu.pipeline_mode<synchronous>, transform_indices = @transform_1, window_bounds = array<i64: 16, 24>}, {pipeline_mode = #tpu.pipeline_mode<synchronous>, transform_indices = @transform_2, window_bounds = array<i64: 1, 24>}, {pipeline_mode = #tpu.pipeline_mode<synchronous>, transform_indices = @transform_3, window_bounds = array<i64: 16, 8>}, {pipeline_mode = #tpu.pipeline_mode<synchronous>, transform_indices = @transform_4, window_bounds = array<i64: 16, 1>}, {pipeline_mode = #tpu.pipeline_mode<synchronous>, transform_indices = @transform_5, window_bounds = array<i64: 1, 128>}, {transform_indices = @transform_6, window_bounds = array<i64: 1, 16, 256>}]} {
    %c0_i32 = arith.constant 0 : i32
    %0 = arith.cmpi eq, %arg1, %c0_i32 : i32
    %1 = arith.extui %0 : i1 to i32
    %c0_i32_0 = arith.constant 0 : i32
    %2 = arith.cmpi ne, %1, %c0_i32_0 : i32
    scf.if %2 {
      %c0_18 = arith.constant 0 : index
      %c0_19 = arith.constant 0 : index
      %c0_20 = arith.constant 0 : index
      %35 = vector.load %arg2[%c0_18, %c0_19, %c0_20] : memref<1x256x16xbf16, #tpu.memory_space<vmem>>, vector<1x256x16xbf16>
      %36 = vector.shape_cast %35 : vector<1x256x16xbf16> to vector<256x16xbf16>
      %c0_21 = arith.constant 0 : index
      %c0_22 = arith.constant 0 : index
      %37 = vector.load %arg3[%c0_21, %c0_22] : memref<16x24xbf16, #tpu.memory_space<vmem>>, vector<16x24xbf16>
      %cst_23 = arith.constant dense<0.000000e+00> : vector<256x24xf32>
      %38 = tpu.matmul %36, %37, %cst_23 {dimension_numbers = #tpu.dot_dimension_numbers<[1], [0], [0], [1], [0, 0, 1, 1], [], []>} : vector<256x16xbf16>, vector<16x24xbf16>, vector<256x24xf32> -> vector<256x24xf32>
      %c0_24 = arith.constant 0 : index
      %c0_25 = arith.constant 0 : index
      %39 = vector.load %arg4[%c0_24, %c0_25] : memref<1x24xf32, #tpu.memory_space<vmem>>, vector<1x24xf32>
      %40 = vector.broadcast %39 : vector<1x24xf32> to vector<256x24xf32>
      %41 = arith.addf %38, %40 : vector<256x24xf32>
      %42 = vector.extract_strided_slice %41 {offsets = [0, 0], sizes = [256, 8], strides = [1, 1]} : vector<256x24xf32> to vector<256x8xf32>
      %43 = tpu.iota {dimensions = array<i32: 0>} : vector<24x8xi32>
      %44 = tpu.iota {dimensions = array<i32: 1>} : vector<24x8xi32>
      %c8_i32 = arith.constant 8 : i32
      %45 = vector.broadcast %c8_i32 : i32 to vector<24x8xi32>
      %46 = arith.addi %44, %45 : vector<24x8xi32>
      %47 = arith.cmpi eq, %43, %46 : vector<24x8xi32>
      %48 = arith.extui %47 : vector<24x8xi1> to vector<24x8xi32>
      %49 = arith.sitofp %48 : vector<24x8xi32> to vector<24x8xf32>
      %cst_26 = arith.constant dense<0.000000e+00> : vector<256x8xf32>
      %50 = tpu.matmul %41, %49, %cst_26 {dimension_numbers = #tpu.dot_dimension_numbers<[1], [0], [0], [1], [0, 0, 1, 1], [], []>} : vector<256x24xf32>, vector<24x8xf32>, vector<256x8xf32> -> vector<256x8xf32>
      %51 = tpu.iota {dimensions = array<i32: 0>} : vector<24x8xi32>
      %52 = tpu.iota {dimensions = array<i32: 1>} : vector<24x8xi32>
      %c16_i32 = arith.constant 16 : i32
      %53 = vector.broadcast %c16_i32 : i32 to vector<24x8xi32>
      %54 = arith.addi %52, %53 : vector<24x8xi32>
      %55 = arith.cmpi eq, %51, %54 : vector<24x8xi32>
      %56 = arith.extui %55 : vector<24x8xi1> to vector<24x8xi32>
      %57 = arith.sitofp %56 : vector<24x8xi32> to vector<24x8xf32>
      %cst_27 = arith.constant dense<0.000000e+00> : vector<256x8xf32>
      %58 = tpu.matmul %41, %57, %cst_27 {dimension_numbers = #tpu.dot_dimension_numbers<[1], [0], [0], [1], [0, 0, 1, 1], [], []>} : vector<256x24xf32>, vector<24x8xf32>, vector<256x8xf32> -> vector<256x8xf32>
      %59 = arith.truncf %42 : vector<256x8xf32> to vector<256x8xbf16>
      %c0_28 = arith.constant 0 : index
      %c0_29 = arith.constant 0 : index
      %60 = vector.load %arg9[%c0_28, %c0_29] : memref<256x8xbf16, #tpu.memory_space<vmem>>, vector<256x8xbf16>
      tpu.vector_store %arg9[%c0_28, %c0_29], %59 {strides = array<i32>} : memref<256x8xbf16, #tpu.memory_space<vmem>>, vector<256x8xbf16>,
      %cst_30 = arith.constant 0.000000e+00 : bf16
      %61 = vector.broadcast %cst_30 : bf16 to vector<128x8xbf16>
      %c0_31 = arith.constant 0 : index
      %c0_32 = arith.constant 0 : index
      %62 = vector.load %arg10[%c0_31, %c0_32] : memref<128x8xbf16, #tpu.memory_space<vmem>>, vector<128x8xbf16>
      tpu.vector_store %arg10[%c0_31, %c0_32], %61 {strides = array<i32>} : memref<128x8xbf16, #tpu.memory_space<vmem>>, vector<128x8xbf16>,
      %cst_33 = arith.constant 0.000000e+00 : bf16
      %63 = vector.broadcast %cst_33 : bf16 to vector<128x8xbf16>
      %c0_34 = arith.constant 0 : index
      %c0_35 = arith.constant 0 : index
      %64 = vector.load %arg11[%c0_34, %c0_35] : memref<128x8xbf16, #tpu.memory_space<vmem>>, vector<128x8xbf16>
      tpu.vector_store %arg11[%c0_34, %c0_35], %63 {strides = array<i32>} : memref<128x8xbf16, #tpu.memory_space<vmem>>, vector<128x8xbf16>,
      %65 = vector.shape_cast %50 : vector<256x8xf32> to vector<128x2x8xf32>
      %66 = vector.extract_strided_slice %65 {offsets = [0, 0, 0], sizes = [128, 1, 8], strides = [1, 1, 1]} : vector<128x2x8xf32> to vector<128x1x8xf32>
      %67 = vector.shape_cast %66 : vector<128x1x8xf32> to vector<128x8xf32>
      %68 = vector.extract_strided_slice %65 {offsets = [0, 1, 0], sizes = [128, 1, 8], strides = [1, 1, 1]} : vector<128x2x8xf32> to vector<128x1x8xf32>
      %69 = vector.shape_cast %68 : vector<128x1x8xf32> to vector<128x8xf32>
      %70 = arith.maximumf %67, %69 : vector<128x8xf32>
      %71 = vector.shape_cast %70 : vector<128x8xf32> to vector<8x16x8xf32>
      %72 = vector.extract_strided_slice %71 {offsets = [0, 0, 0], sizes = [8, 8, 8], strides = [1, 1, 1]} : vector<8x16x8xf32> to vector<8x8x8xf32>
      %73 = vector.extract_strided_slice %71 {offsets = [0, 8, 0], sizes = [8, 8, 8], strides = [1, 1, 1]} : vector<8x16x8xf32> to vector<8x8x8xf32>
      %74 = arith.maximumf %72, %73 : vector<8x8x8xf32>
      %75 = vector.shape_cast %74 : vector<8x8x8xf32> to vector<64x8xf32>
      %76 = arith.truncf %75 : vector<64x8xf32> to vector<64x8xbf16>
      %c0_36 = arith.constant 0 : index
      %c0_37 = arith.constant 0 : index
      %77 = vector.load %arg10[%c0_36, %c0_37] : memref<128x8xbf16, #tpu.memory_space<vmem>>, vector<64x8xbf16>
      tpu.vector_store %arg10[%c0_36, %c0_37], %76 {strides = array<i32>} : memref<128x8xbf16, #tpu.memory_space<vmem>>, vector<64x8xbf16>,
      %78 = vector.shape_cast %58 : vector<256x8xf32> to vector<128x2x8xf32>
      %79 = vector.extract_strided_slice %78 {offsets = [0, 0, 0], sizes = [128, 1, 8], strides = [1, 1, 1]} : vector<128x2x8xf32> to vector<128x1x8xf32>
      %80 = vector.shape_cast %79 : vector<128x1x8xf32> to vector<128x8xf32>
      %81 = vector.extract_strided_slice %78 {offsets = [0, 1, 0], sizes = [128, 1, 8], strides = [1, 1, 1]} : vector<128x2x8xf32> to vector<128x1x8xf32>
      %82 = vector.shape_cast %81 : vector<128x1x8xf32> to vector<128x8xf32>
      %83 = arith.maximumf %80, %82 : vector<128x8xf32>
      %84 = vector.shape_cast %83 : vector<128x8xf32> to vector<8x16x8xf32>
      %85 = vector.extract_strided_slice %84 {offsets = [0, 0, 0], sizes = [8, 8, 8], strides = [1, 1, 1]} : vector<8x16x8xf32> to vector<8x8x8xf32>
      %86 = vector.extract_strided_slice %84 {offsets = [0, 8, 0], sizes = [8, 8, 8], strides = [1, 1, 1]} : vector<8x16x8xf32> to vector<8x8x8xf32>
      %87 = arith.maximumf %85, %86 : vector<8x8x8xf32>
      %88 = vector.shape_cast %87 : vector<8x8x8xf32> to vector<64x8xf32>
      %89 = arith.truncf %88 : vector<64x8xf32> to vector<64x8xbf16>
      %c0_38 = arith.constant 0 : index
      %c0_39 = arith.constant 0 : index
      %90 = vector.load %arg11[%c0_38, %c0_39] : memref<128x8xbf16, #tpu.memory_space<vmem>>, vector<64x8xbf16>
      tpu.vector_store %arg11[%c0_38, %c0_39], %89 {strides = array<i32>} : memref<128x8xbf16, #tpu.memory_space<vmem>>, vector<64x8xbf16>,
    } else {
    }
    %c256_i32 = arith.constant 256 : i32
    %3 = arith.muli %arg1, %c256_i32 : i32
    %4 = tpu.assume_multiple %3, 256 : i32
    %5 = arith.index_cast %4 : i32 to index
    %c0 = arith.constant 0 : index
    %6 = vector.load %arg9[%5, %c0] : memref<256x8xbf16, #tpu.memory_space<vmem>>, vector<256x8xbf16>
    %c0_1 = arith.constant 0 : index
    %c0_2 = arith.constant 0 : index
    %7 = vector.load %arg10[%c0_1, %c0_2] : memref<128x8xbf16, #tpu.memory_space<vmem>>, vector<128x8xbf16>
    %cst = arith.constant dense<0.000000e+00> : vector<256x128xf32>
    %8 = tpu.matmul %6, %7, %cst {dimension_numbers = #tpu.dot_dimension_numbers<[1], [1], [0], [0], [0, 0, 1, 0], [], []>} : vector<256x8xbf16>, vector<128x8xbf16>, vector<256x128xf32> -> vector<256x128xf32>
    %c0_3 = arith.constant 0 : index
    %c0_4 = arith.constant 0 : index
    %9 = vector.load %arg7[%c0_3, %c0_4] : memref<1x128xf32, #tpu.memory_space<vmem>>, vector<1x128xf32>
    %10 = vector.broadcast %9 : vector<1x128xf32> to vector<256x128xf32>
    %11 = arith.addf %8, %10 : vector<256x128xf32>
    %cst_5 = arith.constant dense<0xFF800000> : vector<256xf32>
    %12 = vector.multi_reduction <maximumf>, %11, %cst_5 [1] : vector<256x128xf32> to vector<256xf32>
    %13 = vector.shape_cast %12 : vector<256xf32> to vector<256x1xf32>
    %14 = vector.broadcast %13 : vector<256x1xf32> to vector<256x128xf32>
    %15 = arith.subf %11, %14 : vector<256x128xf32>
    %16 = math.exp %15 : vector<256x128xf32>
    %cst_6 = arith.constant dense<0.000000e+00> : vector<256xf32>
    %17 = vector.multi_reduction <add>, %16, %cst_6 [1] : vector<256x128xf32> to vector<256xf32>
    %18 = vector.shape_cast %17 : vector<256xf32> to vector<256x1xf32>
    %19 = arith.truncf %16 : vector<256x128xf32> to vector<256x128xbf16>
    %c0_7 = arith.constant 0 : index
    %c0_8 = arith.constant 0 : index
    %20 = vector.load %arg11[%c0_7, %c0_8] : memref<128x8xbf16, #tpu.memory_space<vmem>>, vector<128x8xbf16>
    %cst_9 = arith.constant dense<0.000000e+00> : vector<256x8xf32>
    %21 = tpu.matmul %19, %20, %cst_9 {dimension_numbers = #tpu.dot_dimension_numbers<[1], [0], [0], [1], [0, 0, 1, 1], [], []>} : vector<256x128xbf16>, vector<128x8xbf16>, vector<256x8xf32> -> vector<256x8xf32>
    %22 = tpu.reciprocal %18 {approx = true} : vector<256x1xf32> -> vector<256x1xf32>
    %23 = vector.broadcast %22 : vector<256x1xf32> to vector<256x8xf32>
    %24 = arith.mulf %21, %23 : vector<256x8xf32>
    %c0_10 = arith.constant 0 : index
    %c0_11 = arith.constant 0 : index
    %25 = vector.load %arg5[%c0_10, %c0_11] : memref<16x8xbf16, #tpu.memory_space<vmem>>, vector<16x8xbf16>
    %26 = arith.truncf %24 : vector<256x8xf32> to vector<256x8xbf16>
    %cst_12 = arith.constant dense<0.000000e+00> : vector<16x256xf32>
    %27 = tpu.matmul %25, %26, %cst_12 {dimension_numbers = #tpu.dot_dimension_numbers<[1], [1], [0], [0], [0, 0, 1, 0], [], []>} : vector<16x8xbf16>, vector<256x8xbf16>, vector<16x256xf32> -> vector<16x256xf32>
    %c0_13 = arith.constant 0 : index
    %c0_14 = arith.constant 0 : index
    %28 = vector.load %arg6[%c0_13, %c0_14] : memref<16x1xf32, #tpu.memory_space<vmem>>, vector<16x1xf32>
    %29 = vector.broadcast %28 : vector<16x1xf32> to vector<16x256xf32>
    %30 = arith.addf %27, %29 : vector<16x256xf32>
    %31 = arith.truncf %30 : vector<16x256xf32> to vector<16x256xbf16>
    %c0_15 = arith.constant 0 : index
    %c0_16 = arith.constant 0 : index
    %c0_17 = arith.constant 0 : index
    %32 = vector.load %arg8[%c0_15, %c0_16, %c0_17] : memref<1x16x256xbf16, #tpu.memory_space<vmem>>, vector<1x16x256xbf16>
    %33 = vector.shape_cast %32 : vector<1x16x256xbf16> to vector<16x256xbf16>
    %34 = vector.shape_cast %31 : vector<16x256xbf16> to vector<1x16x256xbf16>
    tpu.vector_store %arg8[%c0_15, %c0_16, %c0_17], %34 {strides = array<i32>} : memref<1x16x256xbf16, #tpu.memory_space<vmem>>, vector<1x16x256xbf16>,
    return
  }
  func.func @transform_0(%arg0: i32, %arg1: i32) -> (i32, i32, i32) {
    %c0_i32 = arith.constant 0 : i32
    %c0_i32_0 = arith.constant 0 : i32
    %c0_i32_1 = arith.constant 0 : i32
    return %arg0, %c0_i32, %c0_i32_0 : i32, i32, i32
  }
  func.func @transform_1(%arg0: i32, %arg1: i32) -> (i32, i32) {
    %c0_i32 = arith.constant 0 : i32
    %c0_i32_0 = arith.constant 0 : i32
    %c0_i32_1 = arith.constant 0 : i32
    return %c0_i32, %c0_i32_0 : i32, i32
  }
  func.func @transform_2(%arg0: i32, %arg1: i32) -> (i32, i32) {
    %c0_i32 = arith.constant 0 : i32
    %c0_i32_0 = arith.constant 0 : i32
    %c0_i32_1 = arith.constant 0 : i32
    return %c0_i32, %c0_i32_0 : i32, i32
  }
  func.func @transform_3(%arg0: i32, %arg1: i32) -> (i32, i32) {
    %c0_i32 = arith.constant 0 : i32
    %c0_i32_0 = arith.constant 0 : i32
    %c0_i32_1 = arith.constant 0 : i32
    return %c0_i32, %c0_i32_0 : i32, i32
  }
  func.func @transform_4(%arg0: i32, %arg1: i32) -> (i32, i32) {
    %c0_i32 = arith.constant 0 : i32
    %c0_i32_0 = arith.constant 0 : i32
    %c0_i32_1 = arith.constant 0 : i32
    return %c0_i32, %c0_i32_0 : i32, i32
  }
  func.func @transform_5(%arg0: i32, %arg1: i32) -> (i32, i32) {
    %c0_i32 = arith.constant 0 : i32
    %c0_i32_0 = arith.constant 0 : i32
    %c0_i32_1 = arith.constant 0 : i32
    return %c0_i32, %c0_i32_0 : i32, i32
  }
  func.func @transform_6(%arg0: i32, %arg1: i32) -> (i32, i32, i32) {
    %c0_i32 = arith.constant 0 : i32
    %c0_i32_0 = arith.constant 0 : i32
    return %arg0, %c0_i32, %arg1 : i32, i32, i32
  }
}

</mosaic_0001>

<llo_original>
// kernel: tpu_custom_call.1
$region0: #{tpu_custom_call.1}
  #allocation0 [shape = 'u32[]', space=smem, size = 0x4, offset = 0x4, fixed_abs, tag = 'smem constant byte address 0x4 - core index']
  #allocation1 [shape = 'u32[144,128]{1,0:T(1,128)}', space=vmem, size = 0x12000, scoped, tag = 'internal scratch']
  #allocation2 [shape = 'bf16[256,8]{1,0:T(16,128)(2,1)}', space=vmem, size = 0x10000, scoped, tag = 'scratch operand']
  #allocation3 [shape = 'bf16[128,8]{1,0:T(16,128)(2,1)}', space=vmem, size = 0x8000, scoped, tag = 'scratch operand']
  #allocation4 [shape = 'bf16[128,8]{1,0:T(16,128)(2,1)}', space=vmem, size = 0x8000, scoped, tag = 'scratch operand']
  %s0 = inlined_call_operand.vmem [shape: bf16[2,256,16], index: 0, kind: input, shape index: {}]
  %s1 = inlined_call_operand.vmem [shape: bf16[16,24], index: 1, kind: input, shape index: {}]
  %s2 = inlined_call_operand.vmem [shape: f32[1,24], index: 2, kind: input, shape index: {}]
  %s3 = inlined_call_operand.vmem [shape: bf16[16,8], index: 3, kind: input, shape index: {}]
  %s4 = inlined_call_operand.vmem [shape: f32[16,1], index: 4, kind: input, shape index: {}]
  %s5 = inlined_call_operand.vmem [shape: f32[1,128], index: 5, kind: input, shape index: {}]
  %s6 = inlined_call_operand.hbm [shape: bf16[2,16,256], index: 6, kind: output, shape index: {}]
  %s7 = sld [smem:[#allocation0]]
  $region61: #{tpu_custom_call.1} parent=0
    _
  %s9 = ssub.s32 1, %s7
  %s10 = scalar_select 0, %s9, %s7
  $region1: #{tpu_custom_call.1} parent=0
    #allocation5 [shape = 'u8[16384]{0}', space=vmem, size = 0x4000, scoped, tag = 'output window, operand 0']
    #allocation6 [shape = 's32[2]{0}', space=sflag, size = 0x8, scoped, tag = 'scoped memory for tpu_custom_call.1']
    %11 = vsyncpa [#allocation6], 0
    %s12 = scalar_lea.sflag [#allocation6], 1
    %13 = vsyncpa %s12, 0
    loop: start=0, step=1, limit=4
    $region2: #{tpu_custom_call.1} parent=1 // loop_pre_header
      _
    $region3: #{tpu_custom_call.1} parent=1 // loop_header
      %s15 = sphi 0, %s19
      %p16 = scmp.ge.s32.totalorder %s15, 4
      %s22 = sphi 0, %s34
      %s23 = sphi 0, %s30
      %s24 = sphi 0, %s22
      %s25 = sphi 0, %s23
      %s26 = sphi 0, %s24
      %s27 = sphi 0, %s25
      %s37 = sphi 0, %s39
      %s40 = sphi 0, %s37
      %s41 = sphi 0, %s40
      %s57 = sphi 0, %s41
      %s61 = sphi 0, %s61
      %s63 = sphi 0, %s61
      %s64 = sphi 0, %s63
      %s78 = sphi 0, %s64
      %s82 = sphi 0, %s82
      %s84 = sphi 0, %s82
      %s85 = sphi 0, %s84
      %s99 = sphi 0, %s85
      %s103 = sphi 0, %s103
      %s105 = sphi 0, %s103
      %s106 = sphi 0, %s105
      %s120 = sphi 0, %s106
      %s124 = sphi 0, %s124
      %s126 = sphi 0, %s124
      %s127 = sphi 0, %s126
      %s141 = sphi 0, %s127
      %s145 = sphi 0, %s145
      %s147 = sphi 0, %s145
      %s148 = sphi 0, %s147
      %s162 = sphi 0, %s148
      %s170 = sphi 0, %s172
      %s173 = sphi 0, %s170
      %s174 = sphi 0, %s173
      %s190 = sphi 0, %s174
    $region4: #{tpu_custom_call.1} parent=1 // loop_header_branch
      %18 = sbr.rel (%p16) target = $region8
    $region5: #{tpu_custom_call.1} parent=1 // loop_body
      %s20 = ssub.s32 %s15, 1
      %s21 = ssub.s32 %s15, 2
      %s28 = sadd.s32 1, %s23
      %p29 = scmp.ge.s32.totalorder %s28, 1
      %s30 = scalar_select %p29, 0, %s28
      %s31 = sadd.s32 1, %s22
      %s32 = scalar_select %p29, %s31, %s22
      %p33 = scmp.ge.s32.totalorder %s32, 2
      %s34 = scalar_select %p33, 0, %s32
      %s35 = ssub.s32 %s22, %s34
      %p36 = scmp.eq.s32.totalorder %s35, 0
      %s38 = sadd.s32 %s37, 1
      %s39 = scalar_select %p36, %s37, %s38
      %p42 = pneg %p36
      %p43 = scmp.eq.s32.totalorder %s15, 1
      %p44 = por %p42, %p43
      %p45 = scmp.ne.s32.totalorder %s37, %s40
      %p46 = scmp.eq.s32.totalorder %s15, 0
      %p47 = por %p45, %p46
      %p48 = scmp.ne.s32.totalorder %s37, %s40
      %p49 = scmp.eq.s32.totalorder %s20, 1
      %p50 = por %p48, %p49
      %p51 = scmp.ne.s32.totalorder %s40, %s41
      %p52 = scmp.eq.s32.totalorder %s20, 0
      %p53 = por %p51, %p52
      %p54 = scmp.ne.s32.totalorder %s40, %s41
      %p55 = scmp.eq.s32.totalorder %s21, 1
      %p56 = por %p54, %p55
      %p58 = scmp.ne.s32.totalorder %s41, %s57
      %p59 = scmp.eq.s32.totalorder %s21, 0
      %p60 = por %p58, %p59
      %s62 = sadd.s32 %s61, 1
      %p65 = scmp.eq.s32.totalorder %s15, 1
      %p66 = scmp.ne.s32.totalorder %s61, %s63
      %p67 = scmp.eq.s32.totalorder %s15, 0
      %p68 = por %p66, %p67
      %p69 = scmp.ne.s32.totalorder %s61, %s63
      %p70 = scmp.eq.s32.totalorder %s20, 1
      %p71 = por %p69, %p70
      %p72 = scmp.ne.s32.totalorder %s63, %s64
      %p73 = scmp.eq.s32.totalorder %s20, 0
      %p74 = por %p72, %p73
      %p75 = scmp.ne.s32.totalorder %s63, %s64
      %p76 = scmp.eq.s32.totalorder %s21, 1
      %p77 = por %p75, %p76
      %p79 = scmp.ne.s32.totalorder %s64, %s78
      %p80 = scmp.eq.s32.totalorder %s21, 0
      %p81 = por %p79, %p80
      %s83 = sadd.s32 %s82, 1
      %p86 = scmp.eq.s32.totalorder %s15, 1
      %p87 = scmp.ne.s32.totalorder %s82, %s84
      %p88 = scmp.eq.s32.totalorder %s15, 0
      %p89 = por %p87, %p88
      %p90 = scmp.ne.s32.totalorder %s82, %s84
      %p91 = scmp.eq.s32.totalorder %s20, 1
      %p92 = por %p90, %p91
      %p93 = scmp.ne.s32.totalorder %s84, %s85
      %p94 = scmp.eq.s32.totalorder %s20, 0
      %p95 = por %p93, %p94
      %p96 = scmp.ne.s32.totalorder %s84, %s85
      %p97 = scmp.eq.s32.totalorder %s21, 1
      %p98 = por %p96, %p97
      %p100 = scmp.ne.s32.totalorder %s85, %s99
      %p101 = scmp.eq.s32.totalorder %s21, 0
      %p102 = por %p100, %p101
      %s104 = sadd.s32 %s103, 1
      %p107 = scmp.eq.s32.totalorder %s15, 1
      %p108 = scmp.ne.s32.totalorder %s103, %s105
      %p109 = scmp.eq.s32.totalorder %s15, 0
      %p110 = por %p108, %p109
      %p111 = scmp.ne.s32.totalorder %s103, %s105
      %p112 = scmp.eq.s32.totalorder %s20, 1
      %p113 = por %p111, %p112
      %p114 = scmp.ne.s32.totalorder %s105, %s106
      %p115 = scmp.eq.s32.totalorder %s20, 0
      %p116 = por %p114, %p115
      %p117 = scmp.ne.s32.totalorder %s105, %s106
      %p118 = scmp.eq.s32.totalorder %s21, 1
      %p119 = por %p117, %p118
      %p121 = scmp.ne.s32.totalorder %s106, %s120
      %p122 = scmp.eq.s32.totalorder %s21, 0
      %p123 = por %p121, %p122
      %s125 = sadd.s32 %s124, 1
      %p128 = scmp.eq.s32.totalorder %s15, 1
      %p129 = scmp.ne.s32.totalorder %s124, %s126
      %p130 = scmp.eq.s32.totalorder %s15, 0
      %p131 = por %p129, %p130
      %p132 = scmp.ne.s32.totalorder %s124, %s126
      %p133 = scmp.eq.s32.totalorder %s20, 1
      %p134 = por %p132, %p133
      %p135 = scmp.ne.s32.totalorder %s126, %s127
      %p136 = scmp.eq.s32.totalorder %s20, 0
      %p137 = por %p135, %p136
      %p138 = scmp.ne.s32.totalorder %s126, %s127
      %p139 = scmp.eq.s32.totalorder %s21, 1
      %p140 = por %p138, %p139
      %p142 = scmp.ne.s32.totalorder %s127, %s141
      %p143 = scmp.eq.s32.totalorder %s21, 0
      %p144 = por %p142, %p143
      %s146 = sadd.s32 %s145, 1
      %p149 = scmp.eq.s32.totalorder %s15, 1
      %p150 = scmp.ne.s32.totalorder %s145, %s147
      %p151 = scmp.eq.s32.totalorder %s15, 0
      %p152 = por %p150, %p151
      %p153 = scmp.ne.s32.totalorder %s145, %s147
      %p154 = scmp.eq.s32.totalorder %s20, 1
      %p155 = por %p153, %p154
      %p156 = scmp.ne.s32.totalorder %s147, %s148
      %p157 = scmp.eq.s32.totalorder %s20, 0
      %p158 = por %p156, %p157
      %p159 = scmp.ne.s32.totalorder %s147, %s148
      %p160 = scmp.eq.s32.totalorder %s21, 1
      %p161 = por %p159, %p160
      %p163 = scmp.ne.s32.totalorder %s148, %s162
      %p164 = scmp.eq.s32.totalorder %s21, 0
      %p165 = por %p163, %p164
      %s166 = ssub.s32 %s22, %s34
      %s167 = ssub.s32 %s23, %s30
      %s168 = sor.u32 %s166, %s167
      %p169 = scmp.eq.s32.totalorder %s168, 0
      %s171 = sadd.s32 %s170, 1
      %s172 = scalar_select %p169, %s170, %s171
      %p175 = pneg %p169
      %p176 = scmp.eq.s32.totalorder %s15, 1
      %p177 = por %p175, %p176
      %p178 = scmp.ne.s32.totalorder %s170, %s173
      %p179 = scmp.eq.s32.totalorder %s15, 0
      %p180 = por %p178, %p179
      %p181 = scmp.ne.s32.totalorder %s170, %s173
      %p182 = scmp.eq.s32.totalorder %s20, 1
      %p183 = por %p181, %p182
      %p184 = scmp.ne.s32.totalorder %s173, %s174
      %p185 = scmp.eq.s32.totalorder %s20, 0
      %p186 = por %p184, %p185
      %p187 = scmp.ne.s32.totalorder %s173, %s174
      %p188 = scmp.eq.s32.totalorder %s21, 1
      %p189 = por %p187, %p188
      %p191 = scmp.ne.s32.totalorder %s174, %s190
      %p192 = scmp.eq.s32.totalorder %s21, 0
      %p193 = por %p191, %p192
      %p194 = scmp.le.s32.totalorder 1, %s15
      %p195 = scmp.lt.s32.totalorder %s15, 3
      %p196 = pnand %p194, %p195
      %p197 = pneg %p196
      // Predicated region
      $region9: #{tpu_custom_call.1} parent=5 // pred_check
        _
      $region10: #{tpu_custom_call.1} parent=5 // pred_check_branch
        %199 = sbr.rel (%p196) target = $region12
      $region11: #{tpu_custom_call.1} parent=5 // pred_region
        %s200 = ssub.s32 %s15, 1
        // Predicated region
        $region13: #{tpu_custom_call.1} parent=11 // pred_check
          %p201 = pneg %p74
        $region14: #{tpu_custom_call.1} parent=11 // pred_check_branch
          %203 = sbr.rel (%p201) target = $region16
        $region15: #{tpu_custom_call.1} parent=11 // pred_region
          _
        $region16: #{tpu_custom_call.1} parent=11 // pred_fallthru
          _
        // Predicated region
        $region17: #{tpu_custom_call.1} parent=11 // pred_check
          %p204 = pneg %p95
        $region18: #{tpu_custom_call.1} parent=11 // pred_check_branch
          %206 = sbr.rel (%p204) target = $region20
        $region19: #{tpu_custom_call.1} parent=11 // pred_region
          _
        $region20: #{tpu_custom_call.1} parent=11 // pred_fallthru
          _
        // Predicated region
        $region21: #{tpu_custom_call.1} parent=11 // pred_check
          %p207 = pneg %p116
        $region22: #{tpu_custom_call.1} parent=11 // pred_check_branch
          %209 = sbr.rel (%p207) target = $region24
        $region23: #{tpu_custom_call.1} parent=11 // pred_region
          _
        $region24: #{tpu_custom_call.1} parent=11 // pred_fallthru
          _
        // Predicated region
        $region25: #{tpu_custom_call.1} parent=11 // pred_check
          %p210 = pneg %p137
        $region26: #{tpu_custom_call.1} parent=11 // pred_check_branch
          %212 = sbr.rel (%p210) target = $region28
        $region27: #{tpu_custom_call.1} parent=11 // pred_region
          _
        $region28: #{tpu_custom_call.1} parent=11 // pred_fallthru
          _
        // Predicated region
        $region29: #{tpu_custom_call.1} parent=11 // pred_check
          %p213 = pneg %p158
        $region30: #{tpu_custom_call.1} parent=11 // pred_check_branch
          %215 = sbr.rel (%p213) target = $region32
        $region31: #{tpu_custom_call.1} parent=11 // pred_region
          _
        $region32: #{tpu_custom_call.1} parent=11 // pred_fallthru
          _
      $region12: #{tpu_custom_call.1} parent=5 // pred_fallthru
        _
      %p216 = scmp.lt.s32.totalorder %s15, 2
      // Predicated region
      $region33: #{tpu_custom_call.1} parent=5 // pred_check
        %p217 = pneg %p216
      $region34: #{tpu_custom_call.1} parent=5 // pred_check_branch
        %219 = sbr.rel (%p217) target = $region36
      $region35: #{tpu_custom_call.1} parent=5 // pred_region
        // Predicated region
        $region37: #{tpu_custom_call.1} parent=35 // pred_check
          %p220 = pneg %p47
        $region38: #{tpu_custom_call.1} parent=35 // pred_check_branch
          %222 = sbr.rel (%p220) target = $region40
        $region39: #{tpu_custom_call.1} parent=35 // pred_region
          %p223 = scmp.lt.s32.totalorder %s22, 1
          %s224 = scalar_select %p223, %s22, 1
          %s225 = smul.addr %s224, 32
          %s226 = smul.addr %s225, 4
          %s227 = scalar_lea.vmem %s0, %s226
        $region40: #{tpu_custom_call.1} parent=35 // pred_fallthru
          _
      $region36: #{tpu_custom_call.1} parent=5 // pred_fallthru
        _
      %p228 = scmp.le.s32.totalorder 1, %s15
      %p229 = scmp.lt.s32.totalorder %s15, 3
      %p230 = pnand %p228, %p229
      %p231 = pneg %p230
      // Predicated region
      $region41: #{tpu_custom_call.1} parent=5 // pred_check
        _
      $region42: #{tpu_custom_call.1} parent=5 // pred_check_branch
        %233 = sbr.rel (%p230) target = $region44
      $region43: #{tpu_custom_call.1} parent=5 // pred_region
        %s234 = ssub.s32 %s15, 1
        %p235 = scmp.lt.s32.totalorder %s24, 1
        %s236 = scalar_select %p235, %s24, 1
        %s237 = smul.addr %s236, 32
        %s238 = smul.addr %s237, 4
        %s239 = scalar_lea.vmem %s0, %s238
        %p240 = pneg %p53
        %p241 = pneg %p50
        %p242 = pneg %p74
        %p243 = pneg %p71
        %p244 = pneg %p95
        %p245 = pneg %p92
        %p246 = pneg %p116
        %p247 = pneg %p113
        %p248 = pneg %p137
        %p249 = pneg %p134
        %p250 = pneg %p158
        %p251 = pneg %p155
        %p252 = pneg %p186
        %p253 = pneg %p183
        %s254 = sand.u32 %s173, 1
        %s255 = scalar_lea.sflag [#allocation6], %s254
        %s256 = sand.u32 %s173, 1
        %s257 = smul.addr %s256, 16
        %s258 = scalar_lea.vmem [#allocation5], %s257
        %p259 = scmp.lt.s32.totalorder %s24, 1
        %s260 = scalar_select %p259, %s24, 1
        %s261 = smul.addr %s260, 32
        %s262 = smul.addr %s261, 4
        %s263 = scalar_lea.vmem %s0, %s262
        %s264 = smul.u32 2, %s25
        %p266 = scmp.eq.s32.totalorder %s25, 0
        // Predicated region
        $region45: #{tpu_custom_call.1} parent=43 // pred_check
          %p267 = pneg %p266
        $region46: #{tpu_custom_call.1} parent=43 // pred_check_branch
          %269 = sbr.rel (%p267) target = $region48
        $region47: #{tpu_custom_call.1} parent=43 // pred_region
          %v270 = vld [vmem:[%s263] sm:$0xf]
          %v271 = vld [vmem:[%s263 + $0x4] sm:$0xf]
          %v272 = vld [vmem:[%s263 + $0x8] sm:$0xf]
          %v273 = vld [vmem:[%s263 + $0xc] sm:$0xf]
          %v274 = vld [vmem:[%s263 + $0x10] sm:$0xf]
          %v275 = vld [vmem:[%s263 + $0x14] sm:$0xf]
          %v276 = vld [vmem:[%s263 + $0x18] sm:$0xf]
          %v277 = vld [vmem:[%s263 + $0x1c] sm:$0xf]
          %v278 = vld [vmem:[%s263 + $0x20] sm:$0xf]
          %v279 = vld [vmem:[%s263 + $0x24] sm:$0xf]
          %v280 = vld [vmem:[%s263 + $0x28] sm:$0xf]
          %v281 = vld [vmem:[%s263 + $0x2c] sm:$0xf]
          %v282 = vld [vmem:[%s263 + $0x30] sm:$0xf]
          %v283 = vld [vmem:[%s263 + $0x34] sm:$0xf]
          %v284 = vld [vmem:[%s263 + $0x38] sm:$0xf]
          %v285 = vld [vmem:[%s263 + $0x3c] sm:$0xf]
          %v286 = vld [vmem:[%s263 + $0x40] sm:$0xf]
          %v287 = vld [vmem:[%s263 + $0x44] sm:$0xf]
          %v288 = vld [vmem:[%s263 + $0x48] sm:$0xf]
          %v289 = vld [vmem:[%s263 + $0x4c] sm:$0xf]
          %v290 = vld [vmem:[%s263 + $0x50] sm:$0xf]
          %v291 = vld [vmem:[%s263 + $0x54] sm:$0xf]
          %v292 = vld [vmem:[%s263 + $0x58] sm:$0xf]
          %v293 = vld [vmem:[%s263 + $0x5c] sm:$0xf]
          %v294 = vld [vmem:[%s263 + $0x60] sm:$0xf]
          %v295 = vld [vmem:[%s263 + $0x64] sm:$0xf]
          %v296 = vld [vmem:[%s263 + $0x68] sm:$0xf]
          %v297 = vld [vmem:[%s263 + $0x6c] sm:$0xf]
          %v298 = vld [vmem:[%s263 + $0x70] sm:$0xf]
          %v299 = vld [vmem:[%s263 + $0x74] sm:$0xf]
          %v300 = vld [vmem:[%s263 + $0x78] sm:$0xf]
          %v301 = vld [vmem:[%s263 + $0x7c] sm:$0xf]
          %v302 = vld [vmem:[%s1] sm:$0xf]
          %v303 = vld [vmem:[%s1 + $0x4] sm:$0xf]
          %v304 = vld [vmem:[%s2] sm:$0x1]
          %v306 = vlaneseq
          %v307 = vshrl.u32 %v306, 7
          %v308 = vsub.s32 0, %v307
          %v309 = vrot.slane %v304, %v308
          %v343 = vunpack.c.l.b16 %v270
          %v344 = vunpack.c.l.b16 %v271
          %v345 = vunpack.c.l.b16 %v272
          %v346 = vunpack.c.l.b16 %v273
          %v347 = vunpack.c.l.b16 %v274
          %v348 = vunpack.c.l.b16 %v275
          %v349 = vunpack.c.l.b16 %v276
          %v350 = vunpack.c.l.b16 %v277
          %v351 = vunpack.c.l.b16 %v278
          %v352 = vunpack.c.l.b16 %v279
          %v353 = vunpack.c.l.b16 %v280
          %v354 = vunpack.c.l.b16 %v281
          %v355 = vunpack.c.l.b16 %v282
          %v356 = vunpack.c.l.b16 %v283
          %v357 = vunpack.c.l.b16 %v284
          %v358 = vunpack.c.l.b16 %v285
          %v359 = vunpack.c.l.b16 %v286
          %v360 = vunpack.c.l.b16 %v287
          %v361 = vunpack.c.l.b16 %v288
          %v362 = vunpack.c.l.b16 %v289
          %v363 = vunpack.c.l.b16 %v290
          %v364 = vunpack.c.l.b16 %v291
          %v365 = vunpack.c.l.b16 %v292
          %v366 = vunpack.c.l.b16 %v293
          %v367 = vunpack.c.l.b16 %v294
          %v368 = vunpack.c.l.b16 %v295
          %v369 = vunpack.c.l.b16 %v296
          %v370 = vunpack.c.l.b16 %v297
          %v371 = vunpack.c.l.b16 %v298
          %v372 = vunpack.c.l.b16 %v299
          %v373 = vunpack.c.l.b16 %v300
          %v374 = vunpack.c.l.b16 %v301
          %v375 = vpack.c.b16 %v344, %v343
          %v376 = vpack.c.b16 %v346, %v345
          %v377 = vpack.c.b16 %v348, %v347
          %v378 = vpack.c.b16 %v350, %v349
          %v379 = vpack.c.b16 %v352, %v351
          %v380 = vpack.c.b16 %v354, %v353
          %v381 = vpack.c.b16 %v356, %v355
          %v382 = vpack.c.b16 %v358, %v357
          %v383 = vpack.c.b16 %v360, %v359
          %v384 = vpack.c.b16 %v362, %v361
          %v385 = vpack.c.b16 %v364, %v363
          %v386 = vpack.c.b16 %v366, %v365
          %v387 = vpack.c.b16 %v368, %v367
          %v388 = vpack.c.b16 %v370, %v369
          %v389 = vpack.c.b16 %v372, %v371
          %v390 = vpack.c.b16 %v374, %v373
          %v393 = vunpack.c.l.b16 %v302
          %v394 = vunpack.c.l.b16 %v303
          %v395 = vpack.c.b16 %v394, %v393
          %vm397 = vcmask 130048
          %v399 = vsel %vm397, %v375, 0
          %v402 = vsel %vm397, %v376, 0
          %v405 = vsel %vm397, %v377, 0
          %v408 = vsel %vm397, %v378, 0
          %v411 = vsel %vm397, %v379, 0
          %v414 = vsel %vm397, %v380, 0
          %v417 = vsel %vm397, %v381, 0
          %v420 = vsel %vm397, %v382, 0
          %v423 = vsel %vm397, %v383, 0
          %v426 = vsel %vm397, %v384, 0
          %v429 = vsel %vm397, %v385, 0
          %v432 = vsel %vm397, %v386, 0
          %v435 = vsel %vm397, %v387, 0
          %v438 = vsel %vm397, %v388, 0
          %v441 = vsel %vm397, %v389, 0
          %v444 = vsel %vm397, %v390, 0
          %446 = vmatprep.subr.bf16.mxu0 0
          %447 = vmatpush1.bf16.msra.mxu0 %v395
          %448 = vmatprep.subr.bf16.mxu0 0
          %449 = vmatpush1.bf16.msra.mxu0 0
          %450 = vmatprep.subr.bf16.mxu0 0
          %451 = vmatpush1.bf16.msra.mxu0 0
          %452 = vmatprep.subr.bf16.mxu0 0
          %453 = vmatpush1.bf16.msra.mxu0 0
          %454 = vmatprep.subr.bf16.mxu0 0
          %455 = vmatpush1.bf16.msra.mxu0 0
          %456 = vmatprep.subr.bf16.mxu0 0
          %457 = vmatpush1.bf16.msra.mxu0 0
          %458 = vmatprep.subr.bf16.mxu0 0
          %459 = vmatpush1.bf16.msra.mxu0 0
          %460 = vmatprep.subr.bf16.mxu0 0
          %461 = vmatpush1.bf16.msra.mxu0 0
          %462 = vmatprep.subr.bf16.mxu0 0
          %463 = vmatpush1.bf16.msra.mxu0 0
          %464 = vmatprep.subr.bf16.mxu0 0
          %465 = vmatpush1.bf16.msra.mxu0 0
          %466 = vmatprep.subr.bf16.mxu0 0
          %467 = vmatpush1.bf16.msra.mxu0 0
          %468 = vmatprep.subr.bf16.mxu0 0
          %469 = vmatpush1.bf16.msra.mxu0 0
          %470 = vmatprep.subr.bf16.mxu0 0
          %471 = vmatpush1.bf16.msra.mxu0 0
          %472 = vmatprep.subr.bf16.mxu0 0
          %473 = vmatpush1.bf16.msra.mxu0 0
          %474 = vmatprep.subr.bf16.mxu0 0
          %475 = vmatpush1.bf16.msra.mxu0 0
          %476 = vmatprep.subr.bf16.mxu0 0
          %477 = vmatpush1.bf16.msra.mxu0 0
          %478 = vmatprep.mubr.bf16.mxu0 0
          %479 = vmatmul.mubr.bf16.gmra.mrb[0].mxu0 %v399
          %v480 = vpop.f32.mrb[0].mxu0
          %v481 = vadd.f32 %v309, %v480
          %v482 = vpop.f32.mrb[0].mxu0
          %v483 = vpop.f32.mrb[0].mxu0
          %v484 = vadd.f32 %v309, %v483
          %v485 = vpop.f32.mrb[0].mxu0
          %486 = vmatprep.mubr.bf16.mxu0 0
          %487 = vmatmul.mubr.bf16.gmra.mrb[0].mxu0 %v402
          %v488 = vpop.f32.mrb[0].mxu0
          %v489 = vadd.f32 %v309, %v488
          %v490 = vpop.f32.mrb[0].mxu0
          %v491 = vpop.f32.mrb[0].mxu0
          %v492 = vadd.f32 %v309, %v491
          %v493 = vpop.f32.mrb[0].mxu0
          %494 = vmatprep.mubr.bf16.mxu0 0
          %495 = vmatmul.mubr.bf16.gmra.mrb[0].mxu0 %v405
          %v496 = vpop.f32.mrb[0].mxu0
          %v497 = vadd.f32 %v309, %v496
          %v498 = vpop.f32.mrb[0].mxu0
          %v499 = vpop.f32.mrb[0].mxu0
          %v500 = vadd.f32 %v309, %v499
          %v501 = vpop.f32.mrb[0].mxu0
          %502 = vmatprep.mubr.bf16.mxu0 0
          %503 = vmatmul.mubr.bf16.gmra.mrb[0].mxu0 %v408
          %v504 = vpop.f32.mrb[0].mxu0
          %v505 = vadd.f32 %v309, %v504
          %v506 = vpop.f32.mrb[0].mxu0
          %v507 = vpop.f32.mrb[0].mxu0
          %v508 = vadd.f32 %v309, %v507
          %v509 = vpop.f32.mrb[0].mxu0
          %510 = vmatprep.mubr.bf16.mxu0 0
          %511 = vmatmul.mubr.bf16.gmra.mrb[0].mxu0 %v411
          %v512 = vpop.f32.mrb[0].mxu0
          %v513 = vadd.f32 %v309, %v512
          %v514 = vpop.f32.mrb[0].mxu0
          %v515 = vpop.f32.mrb[0].mxu0
          %v516 = vadd.f32 %v309, %v515
          %v517 = vpop.f32.mrb[0].mxu0
          %518 = vmatprep.mubr.bf16.mxu0 0
          %519 = vmatmul.mubr.bf16.gmra.mrb[0].mxu0 %v414
          %v520 = vpop.f32.mrb[0].mxu0
          %v521 = vadd.f32 %v309, %v520
          %v522 = vpop.f32.mrb[0].mxu0
          %v523 = vpop.f32.mrb[0].mxu0
          %v524 = vadd.f32 %v309, %v523
          %v525 = vpop.f32.mrb[0].mxu0
          %526 = vmatprep.mubr.bf16.mxu0 0
          %527 = vmatmul.mubr.bf16.gmra.mrb[0].mxu0 %v417
          %v528 = vpop.f32.mrb[0].mxu0
          %v529 = vadd.f32 %v309, %v528
          %v530 = vpop.f32.mrb[0].mxu0
          %v531 = vpop.f32.mrb[0].mxu0
          %v532 = vadd.f32 %v309, %v531
          %v533 = vpop.f32.mrb[0].mxu0
          %534 = vmatprep.mubr.bf16.mxu0 0
          %535 = vmatmul.mubr.bf16.gmra.mrb[0].mxu0 %v420
          %v536 = vpop.f32.mrb[0].mxu0
          %v537 = vadd.f32 %v309, %v536
          %v538 = vpop.f32.mrb[0].mxu0
          %v539 = vpop.f32.mrb[0].mxu0
          %v540 = vadd.f32 %v309, %v539
          %v541 = vpop.f32.mrb[0].mxu0
          %542 = vmatprep.mubr.bf16.mxu0 0
          %543 = vmatmul.mubr.bf16.gmra.mrb[0].mxu0 %v423
          %v544 = vpop.f32.mrb[0].mxu0
          %v545 = vadd.f32 %v309, %v544
          %v546 = vpop.f32.mrb[0].mxu0
          %v547 = vpop.f32.mrb[0].mxu0
          %v548 = vadd.f32 %v309, %v547
          %v549 = vpop.f32.mrb[0].mxu0
          %550 = vmatprep.mubr.bf16.mxu0 0
          %551 = vmatmul.mubr.bf16.gmra.mrb[0].mxu0 %v426
          %v552 = vpop.f32.mrb[0].mxu0
          %v553 = vadd.f32 %v309, %v552
          %v554 = vpop.f32.mrb[0].mxu0
          %v555 = vpop.f32.mrb[0].mxu0
          %v556 = vadd.f32 %v309, %v555
          %v557 = vpop.f32.mrb[0].mxu0
          %558 = vmatprep.mubr.bf16.mxu0 0
          %559 = vmatmul.mubr.bf16.gmra.mrb[0].mxu0 %v429
          %v560 = vpop.f32.mrb[0].mxu0
          %v561 = vadd.f32 %v309, %v560
          %v562 = vpop.f32.mrb[0].mxu0
          %v563 = vpop.f32.mrb[0].mxu0
          %v564 = vadd.f32 %v309, %v563
          %v565 = vpop.f32.mrb[0].mxu0
          %566 = vmatprep.mubr.bf16.mxu0 0
          %567 = vmatmul.mubr.bf16.gmra.mrb[0].mxu0 %v432
          %v568 = vpop.f32.mrb[0].mxu0
          %v569 = vadd.f32 %v309, %v568
          %v570 = vpop.f32.mrb[0].mxu0
          %v571 = vpop.f32.mrb[0].mxu0
          %v572 = vadd.f32 %v309, %v571
          %v573 = vpop.f32.mrb[0].mxu0
          %574 = vmatprep.mubr.bf16.mxu0 0
          %575 = vmatmul.mubr.bf16.gmra.mrb[0].mxu0 %v435
          %v576 = vpop.f32.mrb[0].mxu0
          %v577 = vadd.f32 %v309, %v576
          %v578 = vpop.f32.mrb[0].mxu0
          %v579 = vpop.f32.mrb[0].mxu0
          %v580 = vadd.f32 %v309, %v579
          %v581 = vpop.f32.mrb[0].mxu0
          %582 = vmatprep.mubr.bf16.mxu0 0
          %583 = vmatmul.mubr.bf16.gmra.mrb[0].mxu0 %v438
          %v584 = vpop.f32.mrb[0].mxu0
          %v585 = vadd.f32 %v309, %v584
          %v586 = vpop.f32.mrb[0].mxu0
          %v587 = vpop.f32.mrb[0].mxu0
          %v588 = vadd.f32 %v309, %v587
          %v589 = vpop.f32.mrb[0].mxu0
          %590 = vmatprep.mubr.bf16.mxu0 0
          %591 = vmatmul.mubr.bf16.gmra.mrb[0].mxu0 %v441
          %v592 = vpop.f32.mrb[0].mxu0
          %v593 = vadd.f32 %v309, %v592
          %v594 = vpop.f32.mrb[0].mxu0
          %v595 = vpop.f32.mrb[0].mxu0
          %v596 = vadd.f32 %v309, %v595
          %v597 = vpop.f32.mrb[0].mxu0
          %598 = vmatprep.mubr.bf16.mxu0 0
          %599 = vmatmul.mubr.bf16.gmra.mrb[0].mxu0 %v444
          %v600 = vpop.f32.mrb[0].mxu0
          %v601 = vadd.f32 %v309, %v600
          %v602 = vpop.f32.mrb[0].mxu0
          %v603 = vpop.f32.mrb[0].mxu0
          %v604 = vadd.f32 %v309, %v603
          %v605 = vpop.f32.mrb[0].mxu0
          %606 = vdwg.mxu0
          %v607 = vlaneseq
          %v608 = vshrl.u32 %v607, 7
          %v609 = vadd.s32 %v608, 8
          %v610 = vadd.s32 %v608, 16
          %v611 = vlaneseq
          %v612 = vand.u32 %v611, 127
          %v613 = vadd.s32 %v612, 8
          %vm614 = vcmp.eq.s32.totalorder %v608, %v613
          %vm615 = vcmp.eq.s32.totalorder %v609, %v613
          %vm616 = vcmp.eq.s32.totalorder %v610, %v613
          %v617 = vsel %vm614, 1, 0
          %v618 = vsel %vm615, 1, 0
          %v619 = vsel %vm616, 1, 0
          %v620 = vcvt.s32.f32 %v617
          %v621 = vcvt.s32.f32 %v618
          %v622 = vcvt.s32.f32 %v619
          %vm623 = vcmask 195584
          %v625 = vsel %vm623, %v481, 0
          %v628 = vsel %vm623, %v484, 0
          %v631 = vsel %vm623, %v489, 0
          %v634 = vsel %vm623, %v492, 0
          %v637 = vsel %vm623, %v497, 0
          %v640 = vsel %vm623, %v500, 0
          %v643 = vsel %vm623, %v505, 0
          %v646 = vsel %vm623, %v508, 0
          %v649 = vsel %vm623, %v513, 0
          %v652 = vsel %vm623, %v516, 0
          %v655 = vsel %vm623, %v521, 0
          %v658 = vsel %vm623, %v524, 0
          %v661 = vsel %vm623, %v529, 0
          %v664 = vsel %vm623, %v532, 0
          %v667 = vsel %vm623, %v537, 0
          %v670 = vsel %vm623, %v540, 0
          %v673 = vsel %vm623, %v545, 0
          %v676 = vsel %vm623, %v548, 0
          %v679 = vsel %vm623, %v553, 0
          %v682 = vsel %vm623, %v556, 0
          %v685 = vsel %vm623, %v561, 0
          %v688 = vsel %vm623, %v564, 0
          %v691 = vsel %vm623, %v569, 0
          %v694 = vsel %vm623, %v572, 0
          %v697 = vsel %vm623, %v577, 0
          %v700 = vsel %vm623, %v580, 0
          %v703 = vsel %vm623, %v585, 0
          %v706 = vsel %vm623, %v588, 0
          %v709 = vsel %vm623, %v593, 0
          %v712 = vsel %vm623, %v596, 0
          %v715 = vsel %vm623, %v601, 0
          %v718 = vsel %vm623, %v604, 0
          %720 = vmatprep.subr.mxu0 0.0
          %721 = vmatpush1.msra.mxu0 %v620
          %722 = vmatprep.subr.mxu0 0.0
          %723 = vmatpush1.msra.mxu0 %v621
          %724 = vmatprep.subr.mxu0 0.0
          %725 = vmatpush1.msra.mxu0 %v622
          %726 = vmatprep.subr.mxu0 0.0
          %727 = vmatpush1.msra.mxu0 0.0
          %728 = vmatprep.subr.mxu0 0.0
          %729 = vmatpush1.msra.mxu0 0.0
          %730 = vmatprep.subr.mxu0 0.0
          %731 = vmatpush1.msra.mxu0 0.0
          %732 = vmatprep.subr.mxu0 0.0
          %733 = vmatpush1.msra.mxu0 0.0
          %734 = vmatprep.subr.mxu0 0.0
          %735 = vmatpush1.msra.mxu0 0.0
          %736 = vmatprep.subr.mxu0 0.0
          %737 = vmatpush1.msra.mxu0 0.0
          %738 = vmatprep.subr.mxu0 0.0
          %739 = vmatpush1.msra.mxu0 0.0
          %740 = vmatprep.subr.mxu0 0.0
          %741 = vmatpush1.msra.mxu0 0.0
          %742 = vmatprep.subr.mxu0 0.0
          %743 = vmatpush1.msra.mxu0 0.0
          %744 = vmatprep.subr.mxu0 0.0
          %745 = vmatpush1.msra.mxu0 0.0
          %746 = vmatprep.subr.mxu0 0.0
          %747 = vmatpush1.msra.mxu0 0.0
          %748 = vmatprep.subr.mxu0 0.0
          %749 = vmatpush1.msra.mxu0 0.0
          %750 = vmatprep.subr.mxu0 0.0
          %751 = vmatpush1.msra.mxu0 0.0
          %752 = vmatprep.subr.mxu0 0.0
          %753 = vmatpush1.msra.mxu0 0.0
          %754 = vmatprep.subr.mxu0 0.0
          %755 = vmatpush1.msra.mxu0 0.0
          %756 = vmatprep.subr.mxu0 0.0
          %757 = vmatpush1.msra.mxu0 0.0
          %758 = vmatprep.subr.mxu0 0.0
          %759 = vmatpush1.msra.mxu0 0.0
          %760 = vmatprep.subr.mxu0 0.0
          %761 = vmatpush1.msra.mxu0 0.0
          %762 = vmatprep.subr.mxu0 0.0
          %763 = vmatpush1.msra.mxu0 0.0
          %764 = vmatprep.subr.mxu0 0.0
          %765 = vmatpush1.msra.mxu0 0.0
          %766 = vmatprep.subr.mxu0 0.0
          %767 = vmatpush1.msra.mxu0 0.0
          %768 = vmatprep.subr.mxu0 0.0
          %769 = vmatpush1.msra.mxu0 0.0
          %770 = vmatprep.subr.mxu0 0.0
          %771 = vmatpush1.msra.mxu0 0.0
          %772 = vmatprep.subr.mxu0 0.0
          %773 = vmatpush1.msra.mxu0 0.0
          %774 = vmatprep.subr.mxu0 0.0
          %775 = vmatpush1.msra.mxu0 0.0
          %776 = vmatprep.subr.mxu0 0.0
          %777 = vmatpush1.msra.mxu0 0.0
          %778 = vmatprep.subr.mxu0 0.0
          %779 = vmatpush1.msra.mxu0 0.0
          %780 = vmatprep.subr.mxu0 0.0
          %781 = vmatpush1.msra.mxu0 0.0
          %782 = vmatprep.subr.mxu0 0.0
          %783 = vmatpush1.msra.mxu0 0.0
          %784 = vmatprep.mubr.f32.mxu0 0.0
          %785 = vmatmul.mubr.f32.gmra.mrb[0].mxu0 %v625
          %v786 = vpop.f32.mrb[0].mxu0
          %v787 = vadd.f32 0.0, %v786
          %v788 = vpop.f32.mrb[0].mxu0
          %789 = vmatprep.mubr.f32.mxu0 0.0
          %790 = vmatmul.mubr.f32.gmra.mrb[0].mxu0 %v628
          %v791 = vpop.f32.mrb[0].mxu0
          %v792 = vadd.f32 0.0, %v791
          %v793 = vpop.f32.mrb[0].mxu0
          %794 = vmatprep.mubr.f32.mxu0 0.0
          %795 = vmatmul.mubr.f32.gmra.mrb[0].mxu0 %v631
          %v796 = vpop.f32.mrb[0].mxu0
          %v797 = vadd.f32 0.0, %v796
          %v798 = vpop.f32.mrb[0].mxu0
          %799 = vmatprep.mubr.f32.mxu0 0.0
          %800 = vmatmul.mubr.f32.gmra.mrb[0].mxu0 %v634
          %v801 = vpop.f32.mrb[0].mxu0
          %v802 = vadd.f32 0.0, %v801
          %v803 = vpop.f32.mrb[0].mxu0
          %804 = vmatprep.mubr.f32.mxu0 0.0
          %805 = vmatmul.mubr.f32.gmra.mrb[0].mxu0 %v637
          %v806 = vpop.f32.mrb[0].mxu0
          %v807 = vadd.f32 0.0, %v806
          %v808 = vpop.f32.mrb[0].mxu0
          %809 = vmatprep.mubr.f32.mxu0 0.0
          %810 = vmatmul.mubr.f32.gmra.mrb[0].mxu0 %v640
          %v811 = vpop.f32.mrb[0].mxu0
          %v812 = vadd.f32 0.0, %v811
          %v813 = vpop.f32.mrb[0].mxu0
          %814 = vmatprep.mubr.f32.mxu0 0.0
          %815 = vmatmul.mubr.f32.gmra.mrb[0].mxu0 %v643
          %v816 = vpop.f32.mrb[0].mxu0
          %v817 = vadd.f32 0.0, %v816
          %v818 = vpop.f32.mrb[0].mxu0
          %819 = vmatprep.mubr.f32.mxu0 0.0
          %820 = vmatmul.mubr.f32.gmra.mrb[0].mxu0 %v646
          %v821 = vpop.f32.mrb[0].mxu0
          %v822 = vadd.f32 0.0, %v821
          %v823 = vpop.f32.mrb[0].mxu0
          %824 = vmatprep.mubr.f32.mxu0 0.0
          %825 = vmatmul.mubr.f32.gmra.mrb[0].mxu0 %v649
          %v826 = vpop.f32.mrb[0].mxu0
          %v827 = vadd.f32 0.0, %v826
          %v828 = vpop.f32.mrb[0].mxu0
          %829 = vmatprep.mubr.f32.mxu0 0.0
          %830 = vmatmul.mubr.f32.gmra.mrb[0].mxu0 %v652
          %v831 = vpop.f32.mrb[0].mxu0
          %v832 = vadd.f32 0.0, %v831
          %v833 = vpop.f32.mrb[0].mxu0
          %834 = vmatprep.mubr.f32.mxu0 0.0
          %835 = vmatmul.mubr.f32.gmra.mrb[0].mxu0 %v655
          %v836 = vpop.f32.mrb[0].mxu0
          %v837 = vadd.f32 0.0, %v836
          %v838 = vpop.f32.mrb[0].mxu0
          %839 = vmatprep.mubr.f32.mxu0 0.0
          %840 = vmatmul.mubr.f32.gmra.mrb[0].mxu0 %v658
          %v841 = vpop.f32.mrb[0].mxu0
          %v842 = vadd.f32 0.0, %v841
          %v843 = vpop.f32.mrb[0].mxu0
          %844 = vmatprep.mubr.f32.mxu0 0.0
          %845 = vmatmul.mubr.f32.gmra.mrb[0].mxu0 %v661
          %v846 = vpop.f32.mrb[0].mxu0
          %v847 = vadd.f32 0.0, %v846
          %v848 = vpop.f32.mrb[0].mxu0
          %849 = vmatprep.mubr.f32.mxu0 0.0
          %850 = vmatmul.mubr.f32.gmra.mrb[0].mxu0 %v664
          %v851 = vpop.f32.mrb[0].mxu0
          %v852 = vadd.f32 0.0, %v851
          %v853 = vpop.f32.mrb[0].mxu0
          %854 = vmatprep.mubr.f32.mxu0 0.0
          %855 = vmatmul.mubr.f32.gmra.mrb[0].mxu0 %v667
          %v856 = vpop.f32.mrb[0].mxu0
          %v857 = vadd.f32 0.0, %v856
          %v858 = vpop.f32.mrb[0].mxu0
          %859 = vmatprep.mubr.f32.mxu0 0.0
          %860 = vmatmul.mubr.f32.gmra.mrb[0].mxu0 %v670
          %v861 = vpop.f32.mrb[0].mxu0
          %v862 = vadd.f32 0.0, %v861
          %v863 = vpop.f32.mrb[0].mxu0
          %864 = vmatprep.mubr.f32.mxu0 0.0
          %865 = vmatmul.mubr.f32.gmra.mrb[0].mxu0 %v673
          %v866 = vpop.f32.mrb[0].mxu0
          %v867 = vadd.f32 0.0, %v866
          %v868 = vpop.f32.mrb[0].mxu0
          %869 = vmatprep.mubr.f32.mxu0 0.0
          %870 = vmatmul.mubr.f32.gmra.mrb[0].mxu0 %v676
          %v871 = vpop.f32.mrb[0].mxu0
          %v872 = vadd.f32 0.0, %v871
          %v873 = vpop.f32.mrb[0].mxu0
          %874 = vmatprep.mubr.f32.mxu0 0.0
          %875 = vmatmul.mubr.f32.gmra.mrb[0].mxu0 %v679
          %v876 = vpop.f32.mrb[0].mxu0
          %v877 = vadd.f32 0.0, %v876
          %v878 = vpop.f32.mrb[0].mxu0
          %879 = vmatprep.mubr.f32.mxu0 0.0
          %880 = vmatmul.mubr.f32.gmra.mrb[0].mxu0 %v682
          %v881 = vpop.f32.mrb[0].mxu0
          %v882 = vadd.f32 0.0, %v881
          %v883 = vpop.f32.mrb[0].mxu0
          %884 = vmatprep.mubr.f32.mxu0 0.0
          %885 = vmatmul.mubr.f32.gmra.mrb[0].mxu0 %v685
          %v886 = vpop.f32.mrb[0].mxu0
          %v887 = vadd.f32 0.0, %v886
          %v888 = vpop.f32.mrb[0].mxu0
          %889 = vmatprep.mubr.f32.mxu0 0.0
          %890 = vmatmul.mubr.f32.gmra.mrb[0].mxu0 %v688
          %v891 = vpop.f32.mrb[0].mxu0
          %v892 = vadd.f32 0.0, %v891
          %v893 = vpop.f32.mrb[0].mxu0
          %894 = vmatprep.mubr.f32.mxu0 0.0
          %895 = vmatmul.mubr.f32.gmra.mrb[0].mxu0 %v691
          %v896 = vpop.f32.mrb[0].mxu0
          %v897 = vadd.f32 0.0, %v896
          %v898 = vpop.f32.mrb[0].mxu0
          %899 = vmatprep.mubr.f32.mxu0 0.0
          %900 = vmatmul.mubr.f32.gmra.mrb[0].mxu0 %v694
          %v901 = vpop.f32.mrb[0].mxu0
          %v902 = vadd.f32 0.0, %v901
          %v903 = vpop.f32.mrb[0].mxu0
          %904 = vmatprep.mubr.f32.mxu0 0.0
          %905 = vmatmul.mubr.f32.gmra.mrb[0].mxu0 %v697
          %v906 = vpop.f32.mrb[0].mxu0
          %v907 = vadd.f32 0.0, %v906
          %v908 = vpop.f32.mrb[0].mxu0
          %909 = vmatprep.mubr.f32.mxu0 0.0
          %910 = vmatmul.mubr.f32.gmra.mrb[0].mxu0 %v700
          %v911 = vpop.f32.mrb[0].mxu0
          %v912 = vadd.f32 0.0, %v911
          %v913 = vpop.f32.mrb[0].mxu0
          %914 = vmatprep.mubr.f32.mxu0 0.0
          %915 = vmatmul.mubr.f32.gmra.mrb[0].mxu0 %v703
          %v916 = vpop.f32.mrb[0].mxu0
          %v917 = vadd.f32 0.0, %v916
          %v918 = vpop.f32.mrb[0].mxu0
          %919 = vmatprep.mubr.f32.mxu0 0.0
          %920 = vmatmul.mubr.f32.gmra.mrb[0].mxu0 %v706
          %v921 = vpop.f32.mrb[0].mxu0
          %v922 = vadd.f32 0.0, %v921
          %v923 = vpop.f32.mrb[0].mxu0
          %924 = vmatprep.mubr.f32.mxu0 0.0
          %925 = vmatmul.mubr.f32.gmra.mrb[0].mxu0 %v709
          %v926 = vpop.f32.mrb[0].mxu0
          %v927 = vadd.f32 0.0, %v926
          %v928 = vpop.f32.mrb[0].mxu0
          %929 = vmatprep.mubr.f32.mxu0 0.0
          %930 = vmatmul.mubr.f32.gmra.mrb[0].mxu0 %v712
          %v931 = vpop.f32.mrb[0].mxu0
          %v932 = vadd.f32 0.0, %v931
          %v933 = vpop.f32.mrb[0].mxu0
          %934 = vmatprep.mubr.f32.mxu0 0.0
          %935 = vmatmul.mubr.f32.gmra.mrb[0].mxu0 %v715
          %v936 = vpop.f32.mrb[0].mxu0
          %v937 = vadd.f32 0.0, %v936
          %v938 = vpop.f32.mrb[0].mxu0
          %939 = vmatprep.mubr.f32.mxu0 0.0
          %940 = vmatmul.mubr.f32.gmra.mrb[0].mxu0 %v718
          %v941 = vpop.f32.mrb[0].mxu0
          %v942 = vadd.f32 0.0, %v941
          %v943 = vpop.f32.mrb[0].mxu0
          %944 = vdwg.mxu0
          %v945 = vadd.s32 %v612, 16
          %vm946 = vcmp.eq.s32.totalorder %v608, %v945
          %vm947 = vcmp.eq.s32.totalorder %v609, %v945
          %vm948 = vcmp.eq.s32.totalorder %v610, %v945
          %v949 = vsel %vm946, 1, 0
          %v950 = vsel %vm947, 1, 0
          %v951 = vsel %vm948, 1, 0
          %v952 = vcvt.s32.f32 %v949
          %v953 = vcvt.s32.f32 %v950
          %v954 = vcvt.s32.f32 %v951
          %955 = vmatprep.subr.mxu0 0.0
          %956 = vmatpush1.msra.mxu0 %v952
          %957 = vmatprep.subr.mxu0 0.0
          %958 = vmatpush1.msra.mxu0 %v953
          %959 = vmatprep.subr.mxu0 0.0
          %960 = vmatpush1.msra.mxu0 %v954
          %961 = vmatprep.subr.mxu0 0.0
          %962 = vmatpush1.msra.mxu0 0.0
          %963 = vmatprep.subr.mxu0 0.0
          %964 = vmatpush1.msra.mxu0 0.0
          %965 = vmatprep.subr.mxu0 0.0
          %966 = vmatpush1.msra.mxu0 0.0
          %967 = vmatprep.subr.mxu0 0.0
          %968 = vmatpush1.msra.mxu0 0.0
          %969 = vmatprep.subr.mxu0 0.0
          %970 = vmatpush1.msra.mxu0 0.0
          %971 = vmatprep.subr.mxu0 0.0
          %972 = vmatpush1.msra.mxu0 0.0
          %973 = vmatprep.subr.mxu0 0.0
          %974 = vmatpush1.msra.mxu0 0.0
          %975 = vmatprep.subr.mxu0 0.0
          %976 = vmatpush1.msra.mxu0 0.0
          %977 = vmatprep.subr.mxu0 0.0
          %978 = vmatpush1.msra.mxu0 0.0
          %979 = vmatprep.subr.mxu0 0.0
          %980 = vmatpush1.msra.mxu0 0.0
          %981 = vmatprep.subr.mxu0 0.0
          %982 = vmatpush1.msra.mxu0 0.0
          %983 = vmatprep.subr.mxu0 0.0
          %984 = vmatpush1.msra.mxu0 0.0
          %985 = vmatprep.subr.mxu0 0.0
          %986 = vmatpush1.msra.mxu0 0.0
          %987 = vmatprep.subr.mxu0 0.0
          %988 = vmatpush1.msra.mxu0 0.0
          %989 = vmatprep.subr.mxu0 0.0
          %990 = vmatpush1.msra.mxu0 0.0
          %991 = vmatprep.subr.mxu0 0.0
          %992 = vmatpush1.msra.mxu0 0.0
          %993 = vmatprep.subr.mxu0 0.0
          %994 = vmatpush1.msra.mxu0 0.0
          %995 = vmatprep.subr.mxu0 0.0
          %996 = vmatpush1.msra.mxu0 0.0
          %997 = vmatprep.subr.mxu0 0.0
          %998 = vmatpush1.msra.mxu0 0.0
          %999 = vmatprep.subr.mxu0 0.0
          %1000 = vmatpush1.msra.mxu0 0.0
          %1001 = vmatprep.subr.mxu0 0.0
          %1002 = vmatpush1.msra.mxu0 0.0
          %1003 = vmatprep.subr.mxu0 0.0
          %1004 = vmatpush1.msra.mxu0 0.0
          %1005 = vmatprep.subr.mxu0 0.0
          %1006 = vmatpush1.msra.mxu0 0.0
          %1007 = vmatprep.subr.mxu0 0.0
          %1008 = vmatpush1.msra.mxu0 0.0
          %1009 = vmatprep.subr.mxu0 0.0
          %1010 = vmatpush1.msra.mxu0 0.0
          %1011 = vmatprep.subr.mxu0 0.0
          %1012 = vmatpush1.msra.mxu0 0.0
          %1013 = vmatprep.subr.mxu0 0.0
          %1014 = vmatpush1.msra.mxu0 0.0
          %1015 = vmatprep.subr.mxu0 0.0
          %1016 = vmatpush1.msra.mxu0 0.0
          %1017 = vmatprep.subr.mxu0 0.0
          %1018 = vmatpush1.msra.mxu0 0.0
          %1019 = vmatprep.mubr.f32.mxu0 0.0
          %1020 = vmatmul.mubr.f32.gmra.mrb[0].mxu0 %v625
          %v1021 = vpop.f32.mrb[0].mxu0
          %v1022 = vadd.f32 0.0, %v1021
          %v1023 = vpop.f32.mrb[0].mxu0
          %1024 = vmatprep.mubr.f32.mxu0 0.0
          %1025 = vmatmul.mubr.f32.gmra.mrb[0].mxu0 %v628
          %v1026 = vpop.f32.mrb[0].mxu0
          %v1027 = vadd.f32 0.0, %v1026
          %v1028 = vpop.f32.mrb[0].mxu0
          %1029 = vmatprep.mubr.f32.mxu0 0.0
          %1030 = vmatmul.mubr.f32.gmra.mrb[0].mxu0 %v631
          %v1031 = vpop.f32.mrb[0].mxu0
          %v1032 = vadd.f32 0.0, %v1031
          %v1033 = vpop.f32.mrb[0].mxu0
          %1034 = vmatprep.mubr.f32.mxu0 0.0
          %1035 = vmatmul.mubr.f32.gmra.mrb[0].mxu0 %v634
          %v1036 = vpop.f32.mrb[0].mxu0
          %v1037 = vadd.f32 0.0, %v1036
          %v1038 = vpop.f32.mrb[0].mxu0
          %1039 = vmatprep.mubr.f32.mxu0 0.0
          %1040 = vmatmul.mubr.f32.gmra.mrb[0].mxu0 %v637
          %v1041 = vpop.f32.mrb[0].mxu0
          %v1042 = vadd.f32 0.0, %v1041
          %v1043 = vpop.f32.mrb[0].mxu0
          %1044 = vmatprep.mubr.f32.mxu0 0.0
          %1045 = vmatmul.mubr.f32.gmra.mrb[0].mxu0 %v640
          %v1046 = vpop.f32.mrb[0].mxu0
          %v1047 = vadd.f32 0.0, %v1046
          %v1048 = vpop.f32.mrb[0].mxu0
          %1049 = vmatprep.mubr.f32.mxu0 0.0
          %1050 = vmatmul.mubr.f32.gmra.mrb[0].mxu0 %v643
          %v1051 = vpop.f32.mrb[0].mxu0
          %v1052 = vadd.f32 0.0, %v1051
          %v1053 = vpop.f32.mrb[0].mxu0
          %1054 = vmatprep.mubr.f32.mxu0 0.0
          %1055 = vmatmul.mubr.f32.gmra.mrb[0].mxu0 %v646
          %v1056 = vpop.f32.mrb[0].mxu0
          %v1057 = vadd.f32 0.0, %v1056
          %v1058 = vpop.f32.mrb[0].mxu0
          %1059 = vmatprep.mubr.f32.mxu0 0.0
          %1060 = vmatmul.mubr.f32.gmra.mrb[0].mxu0 %v649
          %v1061 = vpop.f32.mrb[0].mxu0
          %v1062 = vadd.f32 0.0, %v1061
          %v1063 = vpop.f32.mrb[0].mxu0
          %1064 = vmatprep.mubr.f32.mxu0 0.0
          %1065 = vmatmul.mubr.f32.gmra.mrb[0].mxu0 %v652
          %v1066 = vpop.f32.mrb[0].mxu0
          %v1067 = vadd.f32 0.0, %v1066
          %v1068 = vpop.f32.mrb[0].mxu0
          %1069 = vmatprep.mubr.f32.mxu0 0.0
          %1070 = vmatmul.mubr.f32.gmra.mrb[0].mxu0 %v655
          %v1071 = vpop.f32.mrb[0].mxu0
          %v1072 = vadd.f32 0.0, %v1071
          %v1073 = vpop.f32.mrb[0].mxu0
          %1074 = vmatprep.mubr.f32.mxu0 0.0
          %1075 = vmatmul.mubr.f32.gmra.mrb[0].mxu0 %v658
          %v1076 = vpop.f32.mrb[0].mxu0
          %v1077 = vadd.f32 0.0, %v1076
          %v1078 = vpop.f32.mrb[0].mxu0
          %1079 = vmatprep.mubr.f32.mxu0 0.0
          %1080 = vmatmul.mubr.f32.gmra.mrb[0].mxu0 %v661
          %v1081 = vpop.f32.mrb[0].mxu0
          %v1082 = vadd.f32 0.0, %v1081
          %v1083 = vpop.f32.mrb[0].mxu0
          %1084 = vmatprep.mubr.f32.mxu0 0.0
          %1085 = vmatmul.mubr.f32.gmra.mrb[0].mxu0 %v664
          %v1086 = vpop.f32.mrb[0].mxu0
          %v1087 = vadd.f32 0.0, %v1086
          %v1088 = vpop.f32.mrb[0].mxu0
          %1089 = vmatprep.mubr.f32.mxu0 0.0
          %1090 = vmatmul.mubr.f32.gmra.mrb[0].mxu0 %v667
          %v1091 = vpop.f32.mrb[0].mxu0
          %v1092 = vadd.f32 0.0, %v1091
          %v1093 = vpop.f32.mrb[0].mxu0
          %1094 = vmatprep.mubr.f32.mxu0 0.0
          %1095 = vmatmul.mubr.f32.gmra.mrb[0].mxu0 %v670
          %v1096 = vpop.f32.mrb[0].mxu0
          %v1097 = vadd.f32 0.0, %v1096
          %v1098 = vpop.f32.mrb[0].mxu0
          %1099 = vmatprep.mubr.f32.mxu0 0.0
          %1100 = vmatmul.mubr.f32.gmra.mrb[0].mxu0 %v673
          %v1101 = vpop.f32.mrb[0].mxu0
          %v1102 = vadd.f32 0.0, %v1101
          %v1103 = vpop.f32.mrb[0].mxu0
          %1104 = vmatprep.mubr.f32.mxu0 0.0
          %1105 = vmatmul.mubr.f32.gmra.mrb[0].mxu0 %v676
          %v1106 = vpop.f32.mrb[0].mxu0
          %v1107 = vadd.f32 0.0, %v1106
          %v1108 = vpop.f32.mrb[0].mxu0
          %1109 = vmatprep.mubr.f32.mxu0 0.0
          %1110 = vmatmul.mubr.f32.gmra.mrb[0].mxu0 %v679
          %v1111 = vpop.f32.mrb[0].mxu0
          %v1112 = vadd.f32 0.0, %v1111
          %v1113 = vpop.f32.mrb[0].mxu0
          %1114 = vmatprep.mubr.f32.mxu0 0.0
          %1115 = vmatmul.mubr.f32.gmra.mrb[0].mxu0 %v682
          %v1116 = vpop.f32.mrb[0].mxu0
          %v1117 = vadd.f32 0.0, %v1116
          %v1118 = vpop.f32.mrb[0].mxu0
          %1119 = vmatprep.mubr.f32.mxu0 0.0
          %1120 = vmatmul.mubr.f32.gmra.mrb[0].mxu0 %v685
          %v1121 = vpop.f32.mrb[0].mxu0
          %v1122 = vadd.f32 0.0, %v1121
          %v1123 = vpop.f32.mrb[0].mxu0
          %1124 = vmatprep.mubr.f32.mxu0 0.0
          %1125 = vmatmul.mubr.f32.gmra.mrb[0].mxu0 %v688
          %v1126 = vpop.f32.mrb[0].mxu0
          %v1127 = vadd.f32 0.0, %v1126
          %v1128 = vpop.f32.mrb[0].mxu0
          %1129 = vmatprep.mubr.f32.mxu0 0.0
          %1130 = vmatmul.mubr.f32.gmra.mrb[0].mxu0 %v691
          %v1131 = vpop.f32.mrb[0].mxu0
          %v1132 = vadd.f32 0.0, %v1131
          %v1133 = vpop.f32.mrb[0].mxu0
          %1134 = vmatprep.mubr.f32.mxu0 0.0
          %1135 = vmatmul.mubr.f32.gmra.mrb[0].mxu0 %v694
          %v1136 = vpop.f32.mrb[0].mxu0
          %v1137 = vadd.f32 0.0, %v1136
          %v1138 = vpop.f32.mrb[0].mxu0
          %1139 = vmatprep.mubr.f32.mxu0 0.0
          %1140 = vmatmul.mubr.f32.gmra.mrb[0].mxu0 %v697
          %v1141 = vpop.f32.mrb[0].mxu0
          %v1142 = vadd.f32 0.0, %v1141
          %v1143 = vpop.f32.mrb[0].mxu0
          %1144 = vmatprep.mubr.f32.mxu0 0.0
          %1145 = vmatmul.mubr.f32.gmra.mrb[0].mxu0 %v700
          %v1146 = vpop.f32.mrb[0].mxu0
          %v1147 = vadd.f32 0.0, %v1146
          %v1148 = vpop.f32.mrb[0].mxu0
          %1149 = vmatprep.mubr.f32.mxu0 0.0
          %1150 = vmatmul.mubr.f32.gmra.mrb[0].mxu0 %v703
          %v1151 = vpop.f32.mrb[0].mxu0
          %v1152 = vadd.f32 0.0, %v1151
          %v1153 = vpop.f32.mrb[0].mxu0
          %1154 = vmatprep.mubr.f32.mxu0 0.0
          %1155 = vmatmul.mubr.f32.gmra.mrb[0].mxu0 %v706
          %v1156 = vpop.f32.mrb[0].mxu0
          %v1157 = vadd.f32 0.0, %v1156
          %v1158 = vpop.f32.mrb[0].mxu0
          %1159 = vmatprep.mubr.f32.mxu0 0.0
          %1160 = vmatmul.mubr.f32.gmra.mrb[0].mxu0 %v709
          %v1161 = vpop.f32.mrb[0].mxu0
          %v1162 = vadd.f32 0.0, %v1161
          %v1163 = vpop.f32.mrb[0].mxu0
          %1164 = vmatprep.mubr.f32.mxu0 0.0
          %1165 = vmatmul.mubr.f32.gmra.mrb[0].mxu0 %v712
          %v1166 = vpop.f32.mrb[0].mxu0
          %v1167 = vadd.f32 0.0, %v1166
          %v1168 = vpop.f32.mrb[0].mxu0
          %1169 = vmatprep.mubr.f32.mxu0 0.0
          %1170 = vmatmul.mubr.f32.gmra.mrb[0].mxu0 %v715
          %v1171 = vpop.f32.mrb[0].mxu0
          %v1172 = vadd.f32 0.0, %v1171
          %v1173 = vpop.f32.mrb[0].mxu0
          %1174 = vmatprep.mubr.f32.mxu0 0.0
          %1175 = vmatmul.mubr.f32.gmra.mrb[0].mxu0 %v718
          %v1176 = vpop.f32.mrb[0].mxu0
          %v1177 = vadd.f32 0.0, %v1176
          %v1178 = vpop.f32.mrb[0].mxu0
          %1179 = vdwg.mxu0
          %v1180 = vpack.c.bf16 %v484, %v481
          %v1181 = vpack.c.bf16 %v492, %v489
          %v1182 = vpack.c.bf16 %v500, %v497
          %v1183 = vpack.c.bf16 %v508, %v505
          %v1184 = vpack.c.bf16 %v516, %v513
          %v1185 = vpack.c.bf16 %v524, %v521
          %v1186 = vpack.c.bf16 %v532, %v529
          %v1187 = vpack.c.bf16 %v540, %v537
          %v1188 = vpack.c.bf16 %v548, %v545
          %v1189 = vpack.c.bf16 %v556, %v553
          %v1190 = vpack.c.bf16 %v564, %v561
          %v1191 = vpack.c.bf16 %v572, %v569
          %v1192 = vpack.c.bf16 %v580, %v577
          %v1193 = vpack.c.bf16 %v588, %v585
          %v1194 = vpack.c.bf16 %v596, %v593
          %v1195 = vpack.c.bf16 %v604, %v601
          %vm1196 = vcmask 64512
          %1197 = vst.msk [vmem:[#allocation2] sm:$0xff] %vm1196, %v1180
          %1198 = vst.msk [vmem:[#allocation2 + $0x8] sm:$0xff] %vm1196, %v1181
          %1199 = vst.msk [vmem:[#allocation2 + $0x10] sm:$0xff] %vm1196, %v1182
          %1200 = vst.msk [vmem:[#allocation2 + $0x18] sm:$0xff] %vm1196, %v1183
          %1201 = vst.msk [vmem:[#allocation2 + $0x20] sm:$0xff] %vm1196, %v1184
          %1202 = vst.msk [vmem:[#allocation2 + $0x28] sm:$0xff] %vm1196, %v1185
          %1203 = vst.msk [vmem:[#allocation2 + $0x30] sm:$0xff] %vm1196, %v1186
          %1204 = vst.msk [vmem:[#allocation2 + $0x38] sm:$0xff] %vm1196, %v1187
          %1205 = vst.msk [vmem:[#allocation2 + $0x40] sm:$0xff] %vm1196, %v1188
          %1206 = vst.msk [vmem:[#allocation2 + $0x48] sm:$0xff] %vm1196, %v1189
          %1207 = vst.msk [vmem:[#allocation2 + $0x50] sm:$0xff] %vm1196, %v1190
          %1208 = vst.msk [vmem:[#allocation2 + $0x58] sm:$0xff] %vm1196, %v1191
          %1209 = vst.msk [vmem:[#allocation2 + $0x60] sm:$0xff] %vm1196, %v1192
          %1210 = vst.msk [vmem:[#allocation2 + $0x68] sm:$0xff] %vm1196, %v1193
          %1211 = vst.msk [vmem:[#allocation2 + $0x70] sm:$0xff] %vm1196, %v1194
          %1212 = vst.msk [vmem:[#allocation2 + $0x78] sm:$0xff] %vm1196, %v1195
          %1213 = vst.msk [vmem:[#allocation3] sm:$0xff] %vm1196, 0
          %1214 = vst.msk [vmem:[#allocation3 + $0x8] sm:$0xff] %vm1196, 0
          %1215 = vst.msk [vmem:[#allocation3 + $0x10] sm:$0xff] %vm1196, 0
          %1216 = vst.msk [vmem:[#allocation3 + $0x18] sm:$0xff] %vm1196, 0
          %1217 = vst.msk [vmem:[#allocation3 + $0x20] sm:$0xff] %vm1196, 0
          %1218 = vst.msk [vmem:[#allocation3 + $0x28] sm:$0xff] %vm1196, 0
          %1219 = vst.msk [vmem:[#allocation3 + $0x30] sm:$0xff] %vm1196, 0
          %1220 = vst.msk [vmem:[#allocation3 + $0x38] sm:$0xff] %vm1196, 0
          %1221 = vst.msk [vmem:[#allocation4] sm:$0xff] %vm1196, 0
          %1222 = vst.msk [vmem:[#allocation4 + $0x8] sm:$0xff] %vm1196, 0
          %1223 = vst.msk [vmem:[#allocation4 + $0x10] sm:$0xff] %vm1196, 0
          %1224 = vst.msk [vmem:[#allocation4 + $0x18] sm:$0xff] %vm1196, 0
          %1225 = vst.msk [vmem:[#allocation4 + $0x20] sm:$0xff] %vm1196, 0
          %1226 = vst.msk [vmem:[#allocation4 + $0x28] sm:$0xff] %vm1196, 0
          %1227 = vst.msk [vmem:[#allocation4 + $0x30] sm:$0xff] %vm1196, 0
          %1228 = vst.msk [vmem:[#allocation4 + $0x38] sm:$0xff] %vm1196, 0
          %v1261 = vcombine.high %v787, %v787
          %v1263 = vunpack.c.l.s4 1983009808
          %v1264 = vunpack.c.0.s8 %v1263
          %v1265 = vlaneseq
          %v1266 = vshrl.u32 %v1265, 7
          %v1267 = vsub.s32 %v1264, %v1266
          %v1268 = vrot.slane %v787, %v1267
          %v1270 = vunpack.c.l.s4 1983009808
          %v1271 = vunpack.c.0.s8 %v1270
          %v1272 = vlaneseq
          %v1273 = vshrl.u32 %v1272, 7
          %v1274 = vsub.s32 %v1271, %v1273
          %v1275 = vrot.slane %v1261, %v1274
          %v1276 = vcombine.high %v1268, %v1268
          %v1277 = vcombine.high %v1275, %v1275
          %v1278 = vcombine.high %v792, %v792
          %v1280 = vunpack.c.l.s4 1983009808
          %v1281 = vunpack.c.0.s8 %v1280
          %v1282 = vlaneseq
          %v1283 = vshrl.u32 %v1282, 7
          %v1284 = vsub.s32 %v1281, %v1283
          %v1285 = vrot.slane %v792, %v1284
          %v1287 = vunpack.c.l.s4 1983009808
          %v1288 = vunpack.c.0.s8 %v1287
          %v1289 = vlaneseq
          %v1290 = vshrl.u32 %v1289, 7
          %v1291 = vsub.s32 %v1288, %v1290
          %v1292 = vrot.slane %v1278, %v1291
          %v1293 = vcombine.high %v1285, %v1285
          %v1294 = vcombine.high %v1292, %v1292
          %v1295 = vcombine.high %v797, %v797
          %v1297 = vunpack.c.l.s4 1983009808
          %v1298 = vunpack.c.0.s8 %v1297
          %v1299 = vlaneseq
          %v1300 = vshrl.u32 %v1299, 7
          %v1301 = vsub.s32 %v1298, %v1300
          %v1302 = vrot.slane %v797, %v1301
          %v1304 = vunpack.c.l.s4 1983009808
          %v1305 = vunpack.c.0.s8 %v1304
          %v1306 = vlaneseq
          %v1307 = vshrl.u32 %v1306, 7
          %v1308 = vsub.s32 %v1305, %v1307
          %v1309 = vrot.slane %v1295, %v1308
          %v1310 = vcombine.high %v1302, %v1302
          %v1311 = vcombine.high %v1309, %v1309
          %v1312 = vcombine.high %v802, %v802
          %v1314 = vunpack.c.l.s4 1983009808
          %v1315 = vunpack.c.0.s8 %v1314
          %v1316 = vlaneseq
          %v1317 = vshrl.u32 %v1316, 7
          %v1318 = vsub.s32 %v1315, %v1317
          %v1319 = vrot.slane %v802, %v1318
          %v1321 = vunpack.c.l.s4 1983009808
          %v1322 = vunpack.c.0.s8 %v1321
          %v1323 = vlaneseq
          %v1324 = vshrl.u32 %v1323, 7
          %v1325 = vsub.s32 %v1322, %v1324
          %v1326 = vrot.slane %v1312, %v1325
          %v1327 = vcombine.high %v1319, %v1319
          %v1328 = vcombine.high %v1326, %v1326
          %v1329 = vcombine.high %v807, %v807
          %v1331 = vunpack.c.l.s4 1983009808
          %v1332 = vunpack.c.0.s8 %v1331
          %v1333 = vlaneseq
          %v1334 = vshrl.u32 %v1333, 7
          %v1335 = vsub.s32 %v1332, %v1334
          %v1336 = vrot.slane %v807, %v1335
          %v1338 = vunpack.c.l.s4 1983009808
          %v1339 = vunpack.c.0.s8 %v1338
          %v1340 = vlaneseq
          %v1341 = vshrl.u32 %v1340, 7
          %v1342 = vsub.s32 %v1339, %v1341
          %v1343 = vrot.slane %v1329, %v1342
          %v1344 = vcombine.high %v1336, %v1336
          %v1345 = vcombine.high %v1343, %v1343
          %v1346 = vcombine.high %v812, %v812
          %v1348 = vunpack.c.l.s4 1983009808
          %v1349 = vunpack.c.0.s8 %v1348
          %v1350 = vlaneseq
          %v1351 = vshrl.u32 %v1350, 7
          %v1352 = vsub.s32 %v1349, %v1351
          %v1353 = vrot.slane %v812, %v1352
          %v1355 = vunpack.c.l.s4 1983009808
          %v1356 = vunpack.c.0.s8 %v1355
          %v1357 = vlaneseq
          %v1358 = vshrl.u32 %v1357, 7
          %v1359 = vsub.s32 %v1356, %v1358
          %v1360 = vrot.slane %v1346, %v1359
          %v1361 = vcombine.high %v1353, %v1353
          %v1362 = vcombine.high %v1360, %v1360
          %v1363 = vcombine.high %v817, %v817
          %v1365 = vunpack.c.l.s4 1983009808
          %v1366 = vunpack.c.0.s8 %v1365
          %v1367 = vlaneseq
          %v1368 = vshrl.u32 %v1367, 7
          %v1369 = vsub.s32 %v1366, %v1368
          %v1370 = vrot.slane %v817, %v1369
          %v1372 = vunpack.c.l.s4 1983009808
          %v1373 = vunpack.c.0.s8 %v1372
          %v1374 = vlaneseq
          %v1375 = vshrl.u32 %v1374, 7
          %v1376 = vsub.s32 %v1373, %v1375
          %v1377 = vrot.slane %v1363, %v1376
          %v1378 = vcombine.high %v1370, %v1370
          %v1379 = vcombine.high %v1377, %v1377
          %v1380 = vcombine.high %v822, %v822
          %v1382 = vunpack.c.l.s4 1983009808
          %v1383 = vunpack.c.0.s8 %v1382
          %v1384 = vlaneseq
          %v1385 = vshrl.u32 %v1384, 7
          %v1386 = vsub.s32 %v1383, %v1385
          %v1387 = vrot.slane %v822, %v1386
          %v1389 = vunpack.c.l.s4 1983009808
          %v1390 = vunpack.c.0.s8 %v1389
          %v1391 = vlaneseq
          %v1392 = vshrl.u32 %v1391, 7
          %v1393 = vsub.s32 %v1390, %v1392
          %v1394 = vrot.slane %v1380, %v1393
          %v1395 = vcombine.high %v1387, %v1387
          %v1396 = vcombine.high %v1394, %v1394
          %v1397 = vcombine.high %v827, %v827
          %v1399 = vunpack.c.l.s4 1983009808
          %v1400 = vunpack.c.0.s8 %v1399
          %v1401 = vlaneseq
          %v1402 = vshrl.u32 %v1401, 7
          %v1403 = vsub.s32 %v1400, %v1402
          %v1404 = vrot.slane %v827, %v1403
          %v1406 = vunpack.c.l.s4 1983009808
          %v1407 = vunpack.c.0.s8 %v1406
          %v1408 = vlaneseq
          %v1409 = vshrl.u32 %v1408, 7
          %v1410 = vsub.s32 %v1407, %v1409
          %v1411 = vrot.slane %v1397, %v1410
          %v1412 = vcombine.high %v1404, %v1404
          %v1413 = vcombine.high %v1411, %v1411
          %v1414 = vcombine.high %v832, %v832
          %v1416 = vunpack.c.l.s4 1983009808
          %v1417 = vunpack.c.0.s8 %v1416
          %v1418 = vlaneseq
          %v1419 = vshrl.u32 %v1418, 7
          %v1420 = vsub.s32 %v1417, %v1419
          %v1421 = vrot.slane %v832, %v1420
          %v1423 = vunpack.c.l.s4 1983009808
          %v1424 = vunpack.c.0.s8 %v1423
          %v1425 = vlaneseq
          %v1426 = vshrl.u32 %v1425, 7
          %v1427 = vsub.s32 %v1424, %v1426
          %v1428 = vrot.slane %v1414, %v1427
          %v1429 = vcombine.high %v1421, %v1421
          %v1430 = vcombine.high %v1428, %v1428
          %v1431 = vcombine.high %v837, %v837
          %v1433 = vunpack.c.l.s4 1983009808
          %v1434 = vunpack.c.0.s8 %v1433
          %v1435 = vlaneseq
          %v1436 = vshrl.u32 %v1435, 7
          %v1437 = vsub.s32 %v1434, %v1436
          %v1438 = vrot.slane %v837, %v1437
          %v1440 = vunpack.c.l.s4 1983009808
          %v1441 = vunpack.c.0.s8 %v1440
          %v1442 = vlaneseq
          %v1443 = vshrl.u32 %v1442, 7
          %v1444 = vsub.s32 %v1441, %v1443
          %v1445 = vrot.slane %v1431, %v1444
          %v1446 = vcombine.high %v1438, %v1438
          %v1447 = vcombine.high %v1445, %v1445
          %v1448 = vcombine.high %v842, %v842
          %v1450 = vunpack.c.l.s4 1983009808
          %v1451 = vunpack.c.0.s8 %v1450
          %v1452 = vlaneseq
          %v1453 = vshrl.u32 %v1452, 7
          %v1454 = vsub.s32 %v1451, %v1453
          %v1455 = vrot.slane %v842, %v1454
          %v1457 = vunpack.c.l.s4 1983009808
          %v1458 = vunpack.c.0.s8 %v1457
          %v1459 = vlaneseq
          %v1460 = vshrl.u32 %v1459, 7
          %v1461 = vsub.s32 %v1458, %v1460
          %v1462 = vrot.slane %v1448, %v1461
          %v1463 = vcombine.high %v1455, %v1455
          %v1464 = vcombine.high %v1462, %v1462
          %v1465 = vcombine.high %v847, %v847
          %v1467 = vunpack.c.l.s4 1983009808
          %v1468 = vunpack.c.0.s8 %v1467
          %v1469 = vlaneseq
          %v1470 = vshrl.u32 %v1469, 7
          %v1471 = vsub.s32 %v1468, %v1470
          %v1472 = vrot.slane %v847, %v1471
          %v1474 = vunpack.c.l.s4 1983009808
          %v1475 = vunpack.c.0.s8 %v1474
          %v1476 = vlaneseq
          %v1477 = vshrl.u32 %v1476, 7
          %v1478 = vsub.s32 %v1475, %v1477
          %v1479 = vrot.slane %v1465, %v1478
          %v1480 = vcombine.high %v1472, %v1472
          %v1481 = vcombine.high %v1479, %v1479
          %v1482 = vcombine.high %v852, %v852
          %v1484 = vunpack.c.l.s4 1983009808
          %v1485 = vunpack.c.0.s8 %v1484
          %v1486 = vlaneseq
          %v1487 = vshrl.u32 %v1486, 7
          %v1488 = vsub.s32 %v1485, %v1487
          %v1489 = vrot.slane %v852, %v1488
          %v1491 = vunpack.c.l.s4 1983009808
          %v1492 = vunpack.c.0.s8 %v1491
          %v1493 = vlaneseq
          %v1494 = vshrl.u32 %v1493, 7
          %v1495 = vsub.s32 %v1492, %v1494
          %v1496 = vrot.slane %v1482, %v1495
          %v1497 = vcombine.high %v1489, %v1489
          %v1498 = vcombine.high %v1496, %v1496
          %v1499 = vcombine.high %v857, %v857
          %v1501 = vunpack.c.l.s4 1983009808
          %v1502 = vunpack.c.0.s8 %v1501
          %v1503 = vlaneseq
          %v1504 = vshrl.u32 %v1503, 7
          %v1505 = vsub.s32 %v1502, %v1504
          %v1506 = vrot.slane %v857, %v1505
          %v1508 = vunpack.c.l.s4 1983009808
          %v1509 = vunpack.c.0.s8 %v1508
          %v1510 = vlaneseq
          %v1511 = vshrl.u32 %v1510, 7
          %v1512 = vsub.s32 %v1509, %v1511
          %v1513 = vrot.slane %v1499, %v1512
          %v1514 = vcombine.high %v1506, %v1506
          %v1515 = vcombine.high %v1513, %v1513
          %v1516 = vcombine.high %v862, %v862
          %v1518 = vunpack.c.l.s4 1983009808
          %v1519 = vunpack.c.0.s8 %v1518
          %v1520 = vlaneseq
          %v1521 = vshrl.u32 %v1520, 7
          %v1522 = vsub.s32 %v1519, %v1521
          %v1523 = vrot.slane %v862, %v1522
          %v1525 = vunpack.c.l.s4 1983009808
          %v1526 = vunpack.c.0.s8 %v1525
          %v1527 = vlaneseq
          %v1528 = vshrl.u32 %v1527, 7
          %v1529 = vsub.s32 %v1526, %v1528
          %v1530 = vrot.slane %v1516, %v1529
          %v1531 = vcombine.high %v1523, %v1523
          %v1532 = vcombine.high %v1530, %v1530
          %v1533 = vcombine.high %v867, %v867
          %v1535 = vunpack.c.l.s4 1983009808
          %v1536 = vunpack.c.0.s8 %v1535
          %v1537 = vlaneseq
          %v1538 = vshrl.u32 %v1537, 7
          %v1539 = vsub.s32 %v1536, %v1538
          %v1540 = vrot.slane %v867, %v1539
          %v1542 = vunpack.c.l.s4 1983009808
          %v1543 = vunpack.c.0.s8 %v1542
          %v1544 = vlaneseq
          %v1545 = vshrl.u32 %v1544, 7
          %v1546 = vsub.s32 %v1543, %v1545
          %v1547 = vrot.slane %v1533, %v1546
          %v1548 = vcombine.high %v1540, %v1540
          %v1549 = vcombine.high %v1547, %v1547
          %v1550 = vcombine.high %v872, %v872
          %v1552 = vunpack.c.l.s4 1983009808
          %v1553 = vunpack.c.0.s8 %v1552
          %v1554 = vlaneseq
          %v1555 = vshrl.u32 %v1554, 7
          %v1556 = vsub.s32 %v1553, %v1555
          %v1557 = vrot.slane %v872, %v1556
          %v1559 = vunpack.c.l.s4 1983009808
          %v1560 = vunpack.c.0.s8 %v1559
          %v1561 = vlaneseq
          %v1562 = vshrl.u32 %v1561, 7
          %v1563 = vsub.s32 %v1560, %v1562
          %v1564 = vrot.slane %v1550, %v1563
          %v1565 = vcombine.high %v1557, %v1557
          %v1566 = vcombine.high %v1564, %v1564
          %v1567 = vcombine.high %v877, %v877
          %v1569 = vunpack.c.l.s4 1983009808
          %v1570 = vunpack.c.0.s8 %v1569
          %v1571 = vlaneseq
          %v1572 = vshrl.u32 %v1571, 7
          %v1573 = vsub.s32 %v1570, %v1572
          %v1574 = vrot.slane %v877, %v1573
          %v1576 = vunpack.c.l.s4 1983009808
          %v1577 = vunpack.c.0.s8 %v1576
          %v1578 = vlaneseq
          %v1579 = vshrl.u32 %v1578, 7
          %v1580 = vsub.s32 %v1577, %v1579
          %v1581 = vrot.slane %v1567, %v1580
          %v1582 = vcombine.high %v1574, %v1574
          %v1583 = vcombine.high %v1581, %v1581
          %v1584 = vcombine.high %v882, %v882
          %v1586 = vunpack.c.l.s4 1983009808
          %v1587 = vunpack.c.0.s8 %v1586
          %v1588 = vlaneseq
          %v1589 = vshrl.u32 %v1588, 7
          %v1590 = vsub.s32 %v1587, %v1589
          %v1591 = vrot.slane %v882, %v1590
          %v1593 = vunpack.c.l.s4 1983009808
          %v1594 = vunpack.c.0.s8 %v1593
          %v1595 = vlaneseq
          %v1596 = vshrl.u32 %v1595, 7
          %v1597 = vsub.s32 %v1594, %v1596
          %v1598 = vrot.slane %v1584, %v1597
          %v1599 = vcombine.high %v1591, %v1591
          %v1600 = vcombine.high %v1598, %v1598
          %v1601 = vcombine.high %v887, %v887
          %v1603 = vunpack.c.l.s4 1983009808
          %v1604 = vunpack.c.0.s8 %v1603
          %v1605 = vlaneseq
          %v1606 = vshrl.u32 %v1605, 7
          %v1607 = vsub.s32 %v1604, %v1606
          %v1608 = vrot.slane %v887, %v1607
          %v1610 = vunpack.c.l.s4 1983009808
          %v1611 = vunpack.c.0.s8 %v1610
          %v1612 = vlaneseq
          %v1613 = vshrl.u32 %v1612, 7
          %v1614 = vsub.s32 %v1611, %v1613
          %v1615 = vrot.slane %v1601, %v1614
          %v1616 = vcombine.high %v1608, %v1608
          %v1617 = vcombine.high %v1615, %v1615
          %v1618 = vcombine.high %v892, %v892
          %v1620 = vunpack.c.l.s4 1983009808
          %v1621 = vunpack.c.0.s8 %v1620
          %v1622 = vlaneseq
          %v1623 = vshrl.u32 %v1622, 7
          %v1624 = vsub.s32 %v1621, %v1623
          %v1625 = vrot.slane %v892, %v1624
          %v1627 = vunpack.c.l.s4 1983009808
          %v1628 = vunpack.c.0.s8 %v1627
          %v1629 = vlaneseq
          %v1630 = vshrl.u32 %v1629, 7
          %v1631 = vsub.s32 %v1628, %v1630
          %v1632 = vrot.slane %v1618, %v1631
          %v1633 = vcombine.high %v1625, %v1625
          %v1634 = vcombine.high %v1632, %v1632
          %v1635 = vcombine.high %v897, %v897
          %v1637 = vunpack.c.l.s4 1983009808
          %v1638 = vunpack.c.0.s8 %v1637
          %v1639 = vlaneseq
          %v1640 = vshrl.u32 %v1639, 7
          %v1641 = vsub.s32 %v1638, %v1640
          %v1642 = vrot.slane %v897, %v1641
          %v1644 = vunpack.c.l.s4 1983009808
          %v1645 = vunpack.c.0.s8 %v1644
          %v1646 = vlaneseq
          %v1647 = vshrl.u32 %v1646, 7
          %v1648 = vsub.s32 %v1645, %v1647
          %v1649 = vrot.slane %v1635, %v1648
          %v1650 = vcombine.high %v1642, %v1642
          %v1651 = vcombine.high %v1649, %v1649
          %v1652 = vcombine.high %v902, %v902
          %v1654 = vunpack.c.l.s4 1983009808
          %v1655 = vunpack.c.0.s8 %v1654
          %v1656 = vlaneseq
          %v1657 = vshrl.u32 %v1656, 7
          %v1658 = vsub.s32 %v1655, %v1657
          %v1659 = vrot.slane %v902, %v1658
          %v1661 = vunpack.c.l.s4 1983009808
          %v1662 = vunpack.c.0.s8 %v1661
          %v1663 = vlaneseq
          %v1664 = vshrl.u32 %v1663, 7
          %v1665 = vsub.s32 %v1662, %v1664
          %v1666 = vrot.slane %v1652, %v1665
          %v1667 = vcombine.high %v1659, %v1659
          %v1668 = vcombine.high %v1666, %v1666
          %v1669 = vcombine.high %v907, %v907
          %v1671 = vunpack.c.l.s4 1983009808
          %v1672 = vunpack.c.0.s8 %v1671
          %v1673 = vlaneseq
          %v1674 = vshrl.u32 %v1673, 7
          %v1675 = vsub.s32 %v1672, %v1674
          %v1676 = vrot.slane %v907, %v1675
          %v1678 = vunpack.c.l.s4 1983009808
          %v1679 = vunpack.c.0.s8 %v1678
          %v1680 = vlaneseq
          %v1681 = vshrl.u32 %v1680, 7
          %v1682 = vsub.s32 %v1679, %v1681
          %v1683 = vrot.slane %v1669, %v1682
          %v1684 = vcombine.high %v1676, %v1676
          %v1685 = vcombine.high %v1683, %v1683
          %v1686 = vcombine.high %v912, %v912
          %v1688 = vunpack.c.l.s4 1983009808
          %v1689 = vunpack.c.0.s8 %v1688
          %v1690 = vlaneseq
          %v1691 = vshrl.u32 %v1690, 7
          %v1692 = vsub.s32 %v1689, %v1691
          %v1693 = vrot.slane %v912, %v1692
          %v1695 = vunpack.c.l.s4 1983009808
          %v1696 = vunpack.c.0.s8 %v1695
          %v1697 = vlaneseq
          %v1698 = vshrl.u32 %v1697, 7
          %v1699 = vsub.s32 %v1696, %v1698
          %v1700 = vrot.slane %v1686, %v1699
          %v1701 = vcombine.high %v1693, %v1693
          %v1702 = vcombine.high %v1700, %v1700
          %v1703 = vcombine.high %v917, %v917
          %v1705 = vunpack.c.l.s4 1983009808
          %v1706 = vunpack.c.0.s8 %v1705
          %v1707 = vlaneseq
          %v1708 = vshrl.u32 %v1707, 7
          %v1709 = vsub.s32 %v1706, %v1708
          %v1710 = vrot.slane %v917, %v1709
          %v1712 = vunpack.c.l.s4 1983009808
          %v1713 = vunpack.c.0.s8 %v1712
          %v1714 = vlaneseq
          %v1715 = vshrl.u32 %v1714, 7
          %v1716 = vsub.s32 %v1713, %v1715
          %v1717 = vrot.slane %v1703, %v1716
          %v1718 = vcombine.high %v1710, %v1710
          %v1719 = vcombine.high %v1717, %v1717
          %v1720 = vcombine.high %v922, %v922
          %v1722 = vunpack.c.l.s4 1983009808
          %v1723 = vunpack.c.0.s8 %v1722
          %v1724 = vlaneseq
          %v1725 = vshrl.u32 %v1724, 7
          %v1726 = vsub.s32 %v1723, %v1725
          %v1727 = vrot.slane %v922, %v1726
          %v1729 = vunpack.c.l.s4 1983009808
          %v1730 = vunpack.c.0.s8 %v1729
          %v1731 = vlaneseq
          %v1732 = vshrl.u32 %v1731, 7
          %v1733 = vsub.s32 %v1730, %v1732
          %v1734 = vrot.slane %v1720, %v1733
          %v1735 = vcombine.high %v1727, %v1727
          %v1736 = vcombine.high %v1734, %v1734
          %v1737 = vcombine.high %v927, %v927
          %v1739 = vunpack.c.l.s4 1983009808
          %v1740 = vunpack.c.0.s8 %v1739
          %v1741 = vlaneseq
          %v1742 = vshrl.u32 %v1741, 7
          %v1743 = vsub.s32 %v1740, %v1742
          %v1744 = vrot.slane %v927, %v1743
          %v1746 = vunpack.c.l.s4 1983009808
          %v1747 = vunpack.c.0.s8 %v1746
          %v1748 = vlaneseq
          %v1749 = vshrl.u32 %v1748, 7
          %v1750 = vsub.s32 %v1747, %v1749
          %v1751 = vrot.slane %v1737, %v1750
          %v1752 = vcombine.high %v1744, %v1744
          %v1753 = vcombine.high %v1751, %v1751
          %v1754 = vcombine.high %v932, %v932
          %v1756 = vunpack.c.l.s4 1983009808
          %v1757 = vunpack.c.0.s8 %v1756
          %v1758 = vlaneseq
          %v1759 = vshrl.u32 %v1758, 7
          %v1760 = vsub.s32 %v1757, %v1759
          %v1761 = vrot.slane %v932, %v1760
          %v1763 = vunpack.c.l.s4 1983009808
          %v1764 = vunpack.c.0.s8 %v1763
          %v1765 = vlaneseq
          %v1766 = vshrl.u32 %v1765, 7
          %v1767 = vsub.s32 %v1764, %v1766
          %v1768 = vrot.slane %v1754, %v1767
          %v1769 = vcombine.high %v1761, %v1761
          %v1770 = vcombine.high %v1768, %v1768
          %v1771 = vcombine.high %v937, %v937
          %v1773 = vunpack.c.l.s4 1983009808
          %v1774 = vunpack.c.0.s8 %v1773
          %v1775 = vlaneseq
          %v1776 = vshrl.u32 %v1775, 7
          %v1777 = vsub.s32 %v1774, %v1776
          %v1778 = vrot.slane %v937, %v1777
          %v1780 = vunpack.c.l.s4 1983009808
          %v1781 = vunpack.c.0.s8 %v1780
          %v1782 = vlaneseq
          %v1783 = vshrl.u32 %v1782, 7
          %v1784 = vsub.s32 %v1781, %v1783
          %v1785 = vrot.slane %v1771, %v1784
          %v1786 = vcombine.high %v1778, %v1778
          %v1787 = vcombine.high %v1785, %v1785
          %v1788 = vcombine.high %v942, %v942
          %v1790 = vunpack.c.l.s4 1983009808
          %v1791 = vunpack.c.0.s8 %v1790
          %v1792 = vlaneseq
          %v1793 = vshrl.u32 %v1792, 7
          %v1794 = vsub.s32 %v1791, %v1793
          %v1795 = vrot.slane %v942, %v1794
          %v1797 = vunpack.c.l.s4 1983009808
          %v1798 = vunpack.c.0.s8 %v1797
          %v1799 = vlaneseq
          %v1800 = vshrl.u32 %v1799, 7
          %v1801 = vsub.s32 %v1798, %v1800
          %v1802 = vrot.slane %v1788, %v1801
          %v1803 = vcombine.high %v1795, %v1795
          %v1804 = vcombine.high %v1802, %v1802
          %v1933 = vrot.slane %v1268, 7
          %v1934 = vrot.slane %v1933, 2
          %v1935 = vrot.slane %v1276, 7
          %v1936 = vrot.slane %v1935, 2
          %v1937 = vrot.slane %v1275, 7
          %v1938 = vrot.slane %v1937, 2
          %v1939 = vrot.slane %v1277, 7
          %v1940 = vrot.slane %v1939, 2
          %v1941 = vrot.slane %v1285, 7
          %v1942 = vrot.slane %v1941, 2
          %v1943 = vrot.slane %v1293, 7
          %v1944 = vrot.slane %v1943, 2
          %v1945 = vrot.slane %v1292, 7
          %v1946 = vrot.slane %v1945, 2
          %v1947 = vrot.slane %v1294, 7
          %v1948 = vrot.slane %v1947, 2
          %v1949 = vrot.slane %v1302, 7
          %v1950 = vrot.slane %v1949, 2
          %v1951 = vrot.slane %v1310, 7
          %v1952 = vrot.slane %v1951, 2
          %v1953 = vrot.slane %v1309, 7
          %v1954 = vrot.slane %v1953, 2
          %v1955 = vrot.slane %v1311, 7
          %v1956 = vrot.slane %v1955, 2
          %v1957 = vrot.slane %v1319, 7
          %v1958 = vrot.slane %v1957, 2
          %v1959 = vrot.slane %v1327, 7
          %v1960 = vrot.slane %v1959, 2
          %v1961 = vrot.slane %v1326, 7
          %v1962 = vrot.slane %v1961, 2
          %v1963 = vrot.slane %v1328, 7
          %v1964 = vrot.slane %v1963, 2
          %v1965 = vrot.slane %v1336, 7
          %v1966 = vrot.slane %v1965, 2
          %v1967 = vrot.slane %v1344, 7
          %v1968 = vrot.slane %v1967, 2
          %v1969 = vrot.slane %v1343, 7
          %v1970 = vrot.slane %v1969, 2
          %v1971 = vrot.slane %v1345, 7
          %v1972 = vrot.slane %v1971, 2
          %v1973 = vrot.slane %v1353, 7
          %v1974 = vrot.slane %v1973, 2
          %v1975 = vrot.slane %v1361, 7
          %v1976 = vrot.slane %v1975, 2
          %v1977 = vrot.slane %v1360, 7
          %v1978 = vrot.slane %v1977, 2
          %v1979 = vrot.slane %v1362, 7
          %v1980 = vrot.slane %v1979, 2
          %v1981 = vrot.slane %v1370, 7
          %v1982 = vrot.slane %v1981, 2
          %v1983 = vrot.slane %v1378, 7
          %v1984 = vrot.slane %v1983, 2
          %v1985 = vrot.slane %v1377, 7
          %v1986 = vrot.slane %v1985, 2
          %v1987 = vrot.slane %v1379, 7
          %v1988 = vrot.slane %v1987, 2
          %v1989 = vrot.slane %v1387, 7
          %v1990 = vrot.slane %v1989, 2
          %v1991 = vrot.slane %v1395, 7
          %v1992 = vrot.slane %v1991, 2
          %v1993 = vrot.slane %v1394, 7
          %v1994 = vrot.slane %v1993, 2
          %v1995 = vrot.slane %v1396, 7
          %v1996 = vrot.slane %v1995, 2
          %v1997 = vrot.slane %v1404, 7
          %v1998 = vrot.slane %v1997, 2
          %v1999 = vrot.slane %v1412, 7
          %v2000 = vrot.slane %v1999, 2
          %v2001 = vrot.slane %v1411, 7
          %v2002 = vrot.slane %v2001, 2
          %v2003 = vrot.slane %v1413, 7
          %v2004 = vrot.slane %v2003, 2
          %v2005 = vrot.slane %v1421, 7
          %v2006 = vrot.slane %v2005, 2
          %v2007 = vrot.slane %v1429, 7
          %v2008 = vrot.slane %v2007, 2
          %v2009 = vrot.slane %v1428, 7
          %v2010 = vrot.slane %v2009, 2
          %v2011 = vrot.slane %v1430, 7
          %v2012 = vrot.slane %v2011, 2
          %v2013 = vrot.slane %v1438, 7
          %v2014 = vrot.slane %v2013, 2
          %v2015 = vrot.slane %v1446, 7
          %v2016 = vrot.slane %v2015, 2
          %v2017 = vrot.slane %v1445, 7
          %v2018 = vrot.slane %v2017, 2
          %v2019 = vrot.slane %v1447, 7
          %v2020 = vrot.slane %v2019, 2
          %v2021 = vrot.slane %v1455, 7
          %v2022 = vrot.slane %v2021, 2
          %v2023 = vrot.slane %v1463, 7
          %v2024 = vrot.slane %v2023, 2
          %v2025 = vrot.slane %v1462, 7
          %v2026 = vrot.slane %v2025, 2
          %v2027 = vrot.slane %v1464, 7
          %v2028 = vrot.slane %v2027, 2
          %v2029 = vrot.slane %v1472, 7
          %v2030 = vrot.slane %v2029, 2
          %v2031 = vrot.slane %v1480, 7
          %v2032 = vrot.slane %v2031, 2
          %v2033 = vrot.slane %v1479, 7
          %v2034 = vrot.slane %v2033, 2
          %v2035 = vrot.slane %v1481, 7
          %v2036 = vrot.slane %v2035, 2
          %v2037 = vrot.slane %v1489, 7
          %v2038 = vrot.slane %v2037, 2
          %v2039 = vrot.slane %v1497, 7
          %v2040 = vrot.slane %v2039, 2
          %v2041 = vrot.slane %v1496, 7
          %v2042 = vrot.slane %v2041, 2
          %v2043 = vrot.slane %v1498, 7
          %v2044 = vrot.slane %v2043, 2
          %v2045 = vrot.slane %v1506, 7
          %v2046 = vrot.slane %v2045, 2
          %v2047 = vrot.slane %v1514, 7
          %v2048 = vrot.slane %v2047, 2
          %v2049 = vrot.slane %v1513, 7
          %v2050 = vrot.slane %v2049, 2
          %v2051 = vrot.slane %v1515, 7
          %v2052 = vrot.slane %v2051, 2
          %v2053 = vrot.slane %v1523, 7
          %v2054 = vrot.slane %v2053, 2
          %v2055 = vrot.slane %v1531, 7
          %v2056 = vrot.slane %v2055, 2
          %v2057 = vrot.slane %v1530, 7
          %v2058 = vrot.slane %v2057, 2
          %v2059 = vrot.slane %v1532, 7
          %v2060 = vrot.slane %v2059, 2
          %v2061 = vrot.slane %v1540, 7
          %v2062 = vrot.slane %v2061, 2
          %v2063 = vrot.slane %v1548, 7
          %v2064 = vrot.slane %v2063, 2
          %v2065 = vrot.slane %v1547, 7
          %v2066 = vrot.slane %v2065, 2
          %v2067 = vrot.slane %v1549, 7
          %v2068 = vrot.slane %v2067, 2
          %v2069 = vrot.slane %v1557, 7
          %v2070 = vrot.slane %v2069, 2
          %v2071 = vrot.slane %v1565, 7
          %v2072 = vrot.slane %v2071, 2
          %v2073 = vrot.slane %v1564, 7
          %v2074 = vrot.slane %v2073, 2
          %v2075 = vrot.slane %v1566, 7
          %v2076 = vrot.slane %v2075, 2
          %v2077 = vrot.slane %v1574, 7
          %v2078 = vrot.slane %v2077, 2
          %v2079 = vrot.slane %v1582, 7
          %v2080 = vrot.slane %v2079, 2
          %v2081 = vrot.slane %v1581, 7
          %v2082 = vrot.slane %v2081, 2
          %v2083 = vrot.slane %v1583, 7
          %v2084 = vrot.slane %v2083, 2
          %v2085 = vrot.slane %v1591, 7
          %v2086 = vrot.slane %v2085, 2
          %v2087 = vrot.slane %v1599, 7
          %v2088 = vrot.slane %v2087, 2
          %v2089 = vrot.slane %v1598, 7
          %v2090 = vrot.slane %v2089, 2
          %v2091 = vrot.slane %v1600, 7
          %v2092 = vrot.slane %v2091, 2
          %v2093 = vrot.slane %v1608, 7
          %v2094 = vrot.slane %v2093, 2
          %v2095 = vrot.slane %v1616, 7
          %v2096 = vrot.slane %v2095, 2
          %v2097 = vrot.slane %v1615, 7
          %v2098 = vrot.slane %v2097, 2
          %v2099 = vrot.slane %v1617, 7
          %v2100 = vrot.slane %v2099, 2
          %v2101 = vrot.slane %v1625, 7
          %v2102 = vrot.slane %v2101, 2
          %v2103 = vrot.slane %v1633, 7
          %v2104 = vrot.slane %v2103, 2
          %v2105 = vrot.slane %v1632, 7
          %v2106 = vrot.slane %v2105, 2
          %v2107 = vrot.slane %v1634, 7
          %v2108 = vrot.slane %v2107, 2
          %v2109 = vrot.slane %v1642, 7
          %v2110 = vrot.slane %v2109, 2
          %v2111 = vrot.slane %v1650, 7
          %v2112 = vrot.slane %v2111, 2
          %v2113 = vrot.slane %v1649, 7
          %v2114 = vrot.slane %v2113, 2
          %v2115 = vrot.slane %v1651, 7
          %v2116 = vrot.slane %v2115, 2
          %v2117 = vrot.slane %v1659, 7
          %v2118 = vrot.slane %v2117, 2
          %v2119 = vrot.slane %v1667, 7
          %v2120 = vrot.slane %v2119, 2
          %v2121 = vrot.slane %v1666, 7
          %v2122 = vrot.slane %v2121, 2
          %v2123 = vrot.slane %v1668, 7
          %v2124 = vrot.slane %v2123, 2
          %v2125 = vrot.slane %v1676, 7
          %v2126 = vrot.slane %v2125, 2
          %v2127 = vrot.slane %v1684, 7
          %v2128 = vrot.slane %v2127, 2
          %v2129 = vrot.slane %v1683, 7
          %v2130 = vrot.slane %v2129, 2
          %v2131 = vrot.slane %v1685, 7
          %v2132 = vrot.slane %v2131, 2
          %v2133 = vrot.slane %v1693, 7
          %v2134 = vrot.slane %v2133, 2
          %v2135 = vrot.slane %v1701, 7
          %v2136 = vrot.slane %v2135, 2
          %v2137 = vrot.slane %v1700, 7
          %v2138 = vrot.slane %v2137, 2
          %v2139 = vrot.slane %v1702, 7
          %v2140 = vrot.slane %v2139, 2
          %v2141 = vrot.slane %v1710, 7
          %v2142 = vrot.slane %v2141, 2
          %v2143 = vrot.slane %v1718, 7
          %v2144 = vrot.slane %v2143, 2
          %v2145 = vrot.slane %v1717, 7
          %v2146 = vrot.slane %v2145, 2
          %v2147 = vrot.slane %v1719, 7
          %v2148 = vrot.slane %v2147, 2
          %v2149 = vrot.slane %v1727, 7
          %v2150 = vrot.slane %v2149, 2
          %v2151 = vrot.slane %v1735, 7
          %v2152 = vrot.slane %v2151, 2
          %v2153 = vrot.slane %v1734, 7
          %v2154 = vrot.slane %v2153, 2
          %v2155 = vrot.slane %v1736, 7
          %v2156 = vrot.slane %v2155, 2
          %v2157 = vrot.slane %v1744, 7
          %v2158 = vrot.slane %v2157, 2
          %v2159 = vrot.slane %v1752, 7
          %v2160 = vrot.slane %v2159, 2
          %v2161 = vrot.slane %v1751, 7
          %v2162 = vrot.slane %v2161, 2
          %v2163 = vrot.slane %v1753, 7
          %v2164 = vrot.slane %v2163, 2
          %v2165 = vrot.slane %v1761, 7
          %v2166 = vrot.slane %v2165, 2
          %v2167 = vrot.slane %v1769, 7
          %v2168 = vrot.slane %v2167, 2
          %v2169 = vrot.slane %v1768, 7
          %v2170 = vrot.slane %v2169, 2
          %v2171 = vrot.slane %v1770, 7
          %v2172 = vrot.slane %v2171, 2
          %v2173 = vrot.slane %v1778, 7
          %v2174 = vrot.slane %v2173, 2
          %v2175 = vrot.slane %v1786, 7
          %v2176 = vrot.slane %v2175, 2
          %v2177 = vrot.slane %v1785, 7
          %v2178 = vrot.slane %v2177, 2
          %v2179 = vrot.slane %v1787, 7
          %v2180 = vrot.slane %v2179, 2
          %v2181 = vrot.slane %v1795, 7
          %v2182 = vrot.slane %v2181, 2
          %v2183 = vrot.slane %v1803, 7
          %v2184 = vrot.slane %v2183, 2
          %v2185 = vrot.slane %v1802, 7
          %v2186 = vrot.slane %v2185, 2
          %v2187 = vrot.slane %v1804, 7
          %v2188 = vrot.slane %v2187, 2
          %v2317 = vmax.f32 %v1268, %v1934
          %v2318 = vmax.f32 %v1276, %v1936
          %v2319 = vmax.f32 %v1275, %v1938
          %v2320 = vmax.f32 %v1277, %v1940
          %v2321 = vmax.f32 %v1285, %v1942
          %v2322 = vmax.f32 %v1293, %v1944
          %v2323 = vmax.f32 %v1292, %v1946
          %v2324 = vmax.f32 %v1294, %v1948
          %v2325 = vmax.f32 %v1302, %v1950
          %v2326 = vmax.f32 %v1310, %v1952
          %v2327 = vmax.f32 %v1309, %v1954
          %v2328 = vmax.f32 %v1311, %v1956
          %v2329 = vmax.f32 %v1319, %v1958
          %v2330 = vmax.f32 %v1327, %v1960
          %v2331 = vmax.f32 %v1326, %v1962
          %v2332 = vmax.f32 %v1328, %v1964
          %v2333 = vmax.f32 %v1336, %v1966
          %v2334 = vmax.f32 %v1344, %v1968
          %v2335 = vmax.f32 %v1343, %v1970
          %v2336 = vmax.f32 %v1345, %v1972
          %v2337 = vmax.f32 %v1353, %v1974
          %v2338 = vmax.f32 %v1361, %v1976
          %v2339 = vmax.f32 %v1360, %v1978
          %v2340 = vmax.f32 %v1362, %v1980
          %v2341 = vmax.f32 %v1370, %v1982
          %v2342 = vmax.f32 %v1378, %v1984
          %v2343 = vmax.f32 %v1377, %v1986
          %v2344 = vmax.f32 %v1379, %v1988
          %v2345 = vmax.f32 %v1387, %v1990
          %v2346 = vmax.f32 %v1395, %v1992
          %v2347 = vmax.f32 %v1394, %v1994
          %v2348 = vmax.f32 %v1396, %v1996
          %v2349 = vmax.f32 %v1404, %v1998
          %v2350 = vmax.f32 %v1412, %v2000
          %v2351 = vmax.f32 %v1411, %v2002
          %v2352 = vmax.f32 %v1413, %v2004
          %v2353 = vmax.f32 %v1421, %v2006
          %v2354 = vmax.f32 %v1429, %v2008
          %v2355 = vmax.f32 %v1428, %v2010
          %v2356 = vmax.f32 %v1430, %v2012
          %v2357 = vmax.f32 %v1438, %v2014
          %v2358 = vmax.f32 %v1446, %v2016
          %v2359 = vmax.f32 %v1445, %v2018
          %v2360 = vmax.f32 %v1447, %v2020
          %v2361 = vmax.f32 %v1455, %v2022
          %v2362 = vmax.f32 %v1463, %v2024
          %v2363 = vmax.f32 %v1462, %v2026
          %v2364 = vmax.f32 %v1464, %v2028
          %v2365 = vmax.f32 %v1472, %v2030
          %v2366 = vmax.f32 %v1480, %v2032
          %v2367 = vmax.f32 %v1479, %v2034
          %v2368 = vmax.f32 %v1481, %v2036
          %v2369 = vmax.f32 %v1489, %v2038
          %v2370 = vmax.f32 %v1497, %v2040
          %v2371 = vmax.f32 %v1496, %v2042
          %v2372 = vmax.f32 %v1498, %v2044
          %v2373 = vmax.f32 %v1506, %v2046
          %v2374 = vmax.f32 %v1514, %v2048
          %v2375 = vmax.f32 %v1513, %v2050
          %v2376 = vmax.f32 %v1515, %v2052
          %v2377 = vmax.f32 %v1523, %v2054
          %v2378 = vmax.f32 %v1531, %v2056
          %v2379 = vmax.f32 %v1530, %v2058
          %v2380 = vmax.f32 %v1532, %v2060
          %v2381 = vmax.f32 %v1540, %v2062
          %v2382 = vmax.f32 %v1548, %v2064
          %v2383 = vmax.f32 %v1547, %v2066
          %v2384 = vmax.f32 %v1549, %v2068
          %v2385 = vmax.f32 %v1557, %v2070
          %v2386 = vmax.f32 %v1565, %v2072
          %v2387 = vmax.f32 %v1564, %v2074
          %v2388 = vmax.f32 %v1566, %v2076
          %v2389 = vmax.f32 %v1574, %v2078
          %v2390 = vmax.f32 %v1582, %v2080
          %v2391 = vmax.f32 %v1581, %v2082
          %v2392 = vmax.f32 %v1583, %v2084
          %v2393 = vmax.f32 %v1591, %v2086
          %v2394 = vmax.f32 %v1599, %v2088
          %v2395 = vmax.f32 %v1598, %v2090
          %v2396 = vmax.f32 %v1600, %v2092
          %v2397 = vmax.f32 %v1608, %v2094
          %v2398 = vmax.f32 %v1616, %v2096
          %v2399 = vmax.f32 %v1615, %v2098
          %v2400 = vmax.f32 %v1617, %v2100
          %v2401 = vmax.f32 %v1625, %v2102
          %v2402 = vmax.f32 %v1633, %v2104
          %v2403 = vmax.f32 %v1632, %v2106
          %v2404 = vmax.f32 %v1634, %v2108
          %v2405 = vmax.f32 %v1642, %v2110
          %v2406 = vmax.f32 %v1650, %v2112
          %v2407 = vmax.f32 %v1649, %v2114
          %v2408 = vmax.f32 %v1651, %v2116
          %v2409 = vmax.f32 %v1659, %v2118
          %v2410 = vmax.f32 %v1667, %v2120
          %v2411 = vmax.f32 %v1666, %v2122
          %v2412 = vmax.f32 %v1668, %v2124
          %v2413 = vmax.f32 %v1676, %v2126
          %v2414 = vmax.f32 %v1684, %v2128
          %v2415 = vmax.f32 %v1683, %v2130
          %v2416 = vmax.f32 %v1685, %v2132
          %v2417 = vmax.f32 %v1693, %v2134
          %v2418 = vmax.f32 %v1701, %v2136
          %v2419 = vmax.f32 %v1700, %v2138
          %v2420 = vmax.f32 %v1702, %v2140
          %v2421 = vmax.f32 %v1710, %v2142
          %v2422 = vmax.f32 %v1718, %v2144
          %v2423 = vmax.f32 %v1717, %v2146
          %v2424 = vmax.f32 %v1719, %v2148
          %v2425 = vmax.f32 %v1727, %v2150
          %v2426 = vmax.f32 %v1735, %v2152
          %v2427 = vmax.f32 %v1734, %v2154
          %v2428 = vmax.f32 %v1736, %v2156
          %v2429 = vmax.f32 %v1744, %v2158
          %v2430 = vmax.f32 %v1752, %v2160
          %v2431 = vmax.f32 %v1751, %v2162
          %v2432 = vmax.f32 %v1753, %v2164
          %v2433 = vmax.f32 %v1761, %v2166
          %v2434 = vmax.f32 %v1769, %v2168
          %v2435 = vmax.f32 %v1768, %v2170
          %v2436 = vmax.f32 %v1770, %v2172
          %v2437 = vmax.f32 %v1778, %v2174
          %v2438 = vmax.f32 %v1786, %v2176
          %v2439 = vmax.f32 %v1785, %v2178
          %v2440 = vmax.f32 %v1787, %v2180
          %v2441 = vmax.f32 %v1795, %v2182
          %v2442 = vmax.f32 %v1803, %v2184
          %v2443 = vmax.f32 %v1802, %v2186
          %v2444 = vmax.f32 %v1804, %v2188
          %v2445 = vmax.f32 %v2317, %v2325
          %v2446 = vmax.f32 %v2318, %v2326
          %v2447 = vmax.f32 %v2319, %v2327
          %v2448 = vmax.f32 %v2320, %v2328
          %v2449 = vmax.f32 %v2321, %v2329
          %v2450 = vmax.f32 %v2322, %v2330
          %v2451 = vmax.f32 %v2323, %v2331
          %v2452 = vmax.f32 %v2324, %v2332
          %v2453 = vmax.f32 %v2333, %v2341
          %v2454 = vmax.f32 %v2334, %v2342
          %v2455 = vmax.f32 %v2335, %v2343
          %v2456 = vmax.f32 %v2336, %v2344
          %v2457 = vmax.f32 %v2337, %v2345
          %v2458 = vmax.f32 %v2338, %v2346
          %v2459 = vmax.f32 %v2339, %v2347
          %v2460 = vmax.f32 %v2340, %v2348
          %v2461 = vmax.f32 %v2349, %v2357
          %v2462 = vmax.f32 %v2350, %v2358
          %v2463 = vmax.f32 %v2351, %v2359
          %v2464 = vmax.f32 %v2352, %v2360
          %v2465 = vmax.f32 %v2353, %v2361
          %v2466 = vmax.f32 %v2354, %v2362
          %v2467 = vmax.f32 %v2355, %v2363
          %v2468 = vmax.f32 %v2356, %v2364
          %v2469 = vmax.f32 %v2365, %v2373
          %v2470 = vmax.f32 %v2366, %v2374
          %v2471 = vmax.f32 %v2367, %v2375
          %v2472 = vmax.f32 %v2368, %v2376
          %v2473 = vmax.f32 %v2369, %v2377
          %v2474 = vmax.f32 %v2370, %v2378
          %v2475 = vmax.f32 %v2371, %v2379
          %v2476 = vmax.f32 %v2372, %v2380
          %v2477 = vmax.f32 %v2381, %v2389
          %v2478 = vmax.f32 %v2382, %v2390
          %v2479 = vmax.f32 %v2383, %v2391
          %v2480 = vmax.f32 %v2384, %v2392
          %v2481 = vmax.f32 %v2385, %v2393
          %v2482 = vmax.f32 %v2386, %v2394
          %v2483 = vmax.f32 %v2387, %v2395
          %v2484 = vmax.f32 %v2388, %v2396
          %v2485 = vmax.f32 %v2397, %v2405
          %v2486 = vmax.f32 %v2398, %v2406
          %v2487 = vmax.f32 %v2399, %v2407
          %v2488 = vmax.f32 %v2400, %v2408
          %v2489 = vmax.f32 %v2401, %v2409
          %v2490 = vmax.f32 %v2402, %v2410
          %v2491 = vmax.f32 %v2403, %v2411
          %v2492 = vmax.f32 %v2404, %v2412
          %v2493 = vmax.f32 %v2413, %v2421
          %v2494 = vmax.f32 %v2414, %v2422
          %v2495 = vmax.f32 %v2415, %v2423
          %v2496 = vmax.f32 %v2416, %v2424
          %v2497 = vmax.f32 %v2417, %v2425
          %v2498 = vmax.f32 %v2418, %v2426
          %v2499 = vmax.f32 %v2419, %v2427
          %v2500 = vmax.f32 %v2420, %v2428
          %v2501 = vmax.f32 %v2429, %v2437
          %v2502 = vmax.f32 %v2430, %v2438
          %v2503 = vmax.f32 %v2431, %v2439
          %v2504 = vmax.f32 %v2432, %v2440
          %v2505 = vmax.f32 %v2433, %v2441
          %v2506 = vmax.f32 %v2434, %v2442
          %v2507 = vmax.f32 %v2435, %v2443
          %v2508 = vmax.f32 %v2436, %v2444
          %v2509 = vpack.c.bf16 %v2445, %v2445
          %v2510 = vpack.c.bf16 %v2446, %v2446
          %v2511 = vpack.c.bf16 %v2447, %v2447
          %v2512 = vpack.c.bf16 %v2448, %v2448
          %v2513 = vpack.c.bf16 %v2449, %v2449
          %v2514 = vpack.c.bf16 %v2450, %v2450
          %v2515 = vpack.c.bf16 %v2451, %v2451
          %v2516 = vpack.c.bf16 %v2452, %v2452
          %v2517 = vpack.c.bf16 %v2453, %v2453
          %v2518 = vpack.c.bf16 %v2454, %v2454
          %v2519 = vpack.c.bf16 %v2455, %v2455
          %v2520 = vpack.c.bf16 %v2456, %v2456
          %v2521 = vpack.c.bf16 %v2457, %v2457
          %v2522 = vpack.c.bf16 %v2458, %v2458
          %v2523 = vpack.c.bf16 %v2459, %v2459
          %v2524 = vpack.c.bf16 %v2460, %v2460
          %v2525 = vpack.c.bf16 %v2461, %v2461
          %v2526 = vpack.c.bf16 %v2462, %v2462
          %v2527 = vpack.c.bf16 %v2463, %v2463
          %v2528 = vpack.c.bf16 %v2464, %v2464
          %v2529 = vpack.c.bf16 %v2465, %v2465
          %v2530 = vpack.c.bf16 %v2466, %v2466
          %v2531 = vpack.c.bf16 %v2467, %v2467
          %v2532 = vpack.c.bf16 %v2468, %v2468
          %v2533 = vpack.c.bf16 %v2469, %v2469
          %v2534 = vpack.c.bf16 %v2470, %v2470
          %v2535 = vpack.c.bf16 %v2471, %v2471
          %v2536 = vpack.c.bf16 %v2472, %v2472
          %v2537 = vpack.c.bf16 %v2473, %v2473
          %v2538 = vpack.c.bf16 %v2474, %v2474
          %v2539 = vpack.c.bf16 %v2475, %v2475
          %v2540 = vpack.c.bf16 %v2476, %v2476
          %v2541 = vpack.c.bf16 %v2477, %v2477
          %v2542 = vpack.c.bf16 %v2478, %v2478
          %v2543 = vpack.c.bf16 %v2479, %v2479
          %v2544 = vpack.c.bf16 %v2480, %v2480
          %v2545 = vpack.c.bf16 %v2481, %v2481
          %v2546 = vpack.c.bf16 %v2482, %v2482
          %v2547 = vpack.c.bf16 %v2483, %v2483
          %v2548 = vpack.c.bf16 %v2484, %v2484
          %v2549 = vpack.c.bf16 %v2485, %v2485
          %v2550 = vpack.c.bf16 %v2486, %v2486
          %v2551 = vpack.c.bf16 %v2487, %v2487
          %v2552 = vpack.c.bf16 %v2488, %v2488
          %v2553 = vpack.c.bf16 %v2489, %v2489
          %v2554 = vpack.c.bf16 %v2490, %v2490
          %v2555 = vpack.c.bf16 %v2491, %v2491
          %v2556 = vpack.c.bf16 %v2492, %v2492
          %v2557 = vpack.c.bf16 %v2493, %v2493
          %v2558 = vpack.c.bf16 %v2494, %v2494
          %v2559 = vpack.c.bf16 %v2495, %v2495
          %v2560 = vpack.c.bf16 %v2496, %v2496
          %v2561 = vpack.c.bf16 %v2497, %v2497
          %v2562 = vpack.c.bf16 %v2498, %v2498
          %v2563 = vpack.c.bf16 %v2499, %v2499
          %v2564 = vpack.c.bf16 %v2500, %v2500
          %v2565 = vpack.c.bf16 %v2501, %v2501
          %v2566 = vpack.c.bf16 %v2502, %v2502
          %v2567 = vpack.c.bf16 %v2503, %v2503
          %v2568 = vpack.c.bf16 %v2504, %v2504
          %v2569 = vpack.c.bf16 %v2505, %v2505
          %v2570 = vpack.c.bf16 %v2506, %v2506
          %v2571 = vpack.c.bf16 %v2507, %v2507
          %v2572 = vpack.c.bf16 %v2508, %v2508
          %v2637 = vunpack.c.l.b16 %v2509
          %v2638 = vunpack.c.l.b16 %v2510
          %v2639 = vunpack.c.l.b16 %v2511
          %v2640 = vunpack.c.l.b16 %v2512
          %v2641 = vunpack.c.l.b16 %v2513
          %v2642 = vunpack.c.l.b16 %v2514
          %v2643 = vunpack.c.l.b16 %v2515
          %v2644 = vunpack.c.l.b16 %v2516
          %v2645 = vunpack.c.l.b16 %v2517
          %v2646 = vunpack.c.l.b16 %v2518
          %v2647 = vunpack.c.l.b16 %v2519
          %v2648 = vunpack.c.l.b16 %v2520
          %v2649 = vunpack.c.l.b16 %v2521
          %v2650 = vunpack.c.l.b16 %v2522
          %v2651 = vunpack.c.l.b16 %v2523
          %v2652 = vunpack.c.l.b16 %v2524
          %v2653 = vunpack.c.l.b16 %v2525
          %v2654 = vunpack.c.l.b16 %v2526
          %v2655 = vunpack.c.l.b16 %v2527
          %v2656 = vunpack.c.l.b16 %v2528
          %v2657 = vunpack.c.l.b16 %v2529
          %v2658 = vunpack.c.l.b16 %v2530
          %v2659 = vunpack.c.l.b16 %v2531
          %v2660 = vunpack.c.l.b16 %v2532
          %v2661 = vunpack.c.l.b16 %v2533
          %v2662 = vunpack.c.l.b16 %v2534
          %v2663 = vunpack.c.l.b16 %v2535
          %v2664 = vunpack.c.l.b16 %v2536
          %v2665 = vunpack.c.l.b16 %v2537
          %v2666 = vunpack.c.l.b16 %v2538
          %v2667 = vunpack.c.l.b16 %v2539
          %v2668 = vunpack.c.l.b16 %v2540
          %v2669 = vunpack.c.l.b16 %v2541
          %v2670 = vunpack.c.l.b16 %v2542
          %v2671 = vunpack.c.l.b16 %v2543
          %v2672 = vunpack.c.l.b16 %v2544
          %v2673 = vunpack.c.l.b16 %v2545
          %v2674 = vunpack.c.l.b16 %v2546
          %v2675 = vunpack.c.l.b16 %v2547
          %v2676 = vunpack.c.l.b16 %v2548
          %v2677 = vunpack.c.l.b16 %v2549
          %v2678 = vunpack.c.l.b16 %v2550
          %v2679 = vunpack.c.l.b16 %v2551
          %v2680 = vunpack.c.l.b16 %v2552
          %v2681 = vunpack.c.l.b16 %v2553
          %v2682 = vunpack.c.l.b16 %v2554
          %v2683 = vunpack.c.l.b16 %v2555
          %v2684 = vunpack.c.l.b16 %v2556
          %v2685 = vunpack.c.l.b16 %v2557
          %v2686 = vunpack.c.l.b16 %v2558
          %v2687 = vunpack.c.l.b16 %v2559
          %v2688 = vunpack.c.l.b16 %v2560
          %v2689 = vunpack.c.l.b16 %v2561
          %v2690 = vunpack.c.l.b16 %v2562
          %v2691 = vunpack.c.l.b16 %v2563
          %v2692 = vunpack.c.l.b16 %v2564
          %v2693 = vunpack.c.l.b16 %v2565
          %v2694 = vunpack.c.l.b16 %v2566
          %v2695 = vunpack.c.l.b16 %v2567
          %v2696 = vunpack.c.l.b16 %v2568
          %v2697 = vunpack.c.l.b16 %v2569
          %v2698 = vunpack.c.l.b16 %v2570
          %v2699 = vunpack.c.l.b16 %v2571
          %v2700 = vunpack.c.l.b16 %v2572
          %v2701 = vrot.slane %v2638, 7
          %vm2702 = vcmask 1041409
          %v2703 = vsel %vm2702, %v2701, %v2637
          %v2704 = vrot.slane %v2639, 6
          %vm2705 = vcmask 1042434
          %v2706 = vsel %vm2705, %v2704, %v2703
          %v2707 = vrot.slane %v2640, 5
          %vm2708 = vcmask 1043459
          %v2709 = vsel %vm2708, %v2707, %v2706
          %v2710 = vrot.slane %v2641, 4
          %vm2711 = vcmask 1044484
          %v2712 = vsel %vm2711, %v2710, %v2709
          %v2713 = vrot.slane %v2642, 3
          %vm2714 = vcmask 1045509
          %v2715 = vsel %vm2714, %v2713, %v2712
          %v2716 = vrot.slane %v2643, 2
          %vm2717 = vcmask 1046534
          %v2718 = vsel %vm2717, %v2716, %v2715
          %v2719 = vrot.slane %v2644, 1
          %vm2720 = vcmask 1047559
          %v2721 = vsel %vm2720, %v2719, %v2718
          %v2722 = vrot.slane %v2646, 7
          %v2723 = vsel %vm2702, %v2722, %v2645
          %v2724 = vrot.slane %v2647, 6
          %v2725 = vsel %vm2705, %v2724, %v2723
          %v2726 = vrot.slane %v2648, 5
          %v2727 = vsel %vm2708, %v2726, %v2725
          %v2728 = vrot.slane %v2649, 4
          %v2729 = vsel %vm2711, %v2728, %v2727
          %v2730 = vrot.slane %v2650, 3
          %v2731 = vsel %vm2714, %v2730, %v2729
          %v2732 = vrot.slane %v2651, 2
          %v2733 = vsel %vm2717, %v2732, %v2731
          %v2734 = vrot.slane %v2652, 1
          %v2735 = vsel %vm2720, %v2734, %v2733
          %v2736 = vrot.slane %v2654, 7
          %v2737 = vsel %vm2702, %v2736, %v2653
          %v2738 = vrot.slane %v2655, 6
          %v2739 = vsel %vm2705, %v2738, %v2737
          %v2740 = vrot.slane %v2656, 5
          %v2741 = vsel %vm2708, %v2740, %v2739
          %v2742 = vrot.slane %v2657, 4
          %v2743 = vsel %vm2711, %v2742, %v2741
          %v2744 = vrot.slane %v2658, 3
          %v2745 = vsel %vm2714, %v2744, %v2743
          %v2746 = vrot.slane %v2659, 2
          %v2747 = vsel %vm2717, %v2746, %v2745
          %v2748 = vrot.slane %v2660, 1
          %v2749 = vsel %vm2720, %v2748, %v2747
          %v2750 = vrot.slane %v2662, 7
          %v2751 = vsel %vm2702, %v2750, %v2661
          %v2752 = vrot.slane %v2663, 6
          %v2753 = vsel %vm2705, %v2752, %v2751
          %v2754 = vrot.slane %v2664, 5
          %v2755 = vsel %vm2708, %v2754, %v2753
          %v2756 = vrot.slane %v2665, 4
          %v2757 = vsel %vm2711, %v2756, %v2755
          %v2758 = vrot.slane %v2666, 3
          %v2759 = vsel %vm2714, %v2758, %v2757
          %v2760 = vrot.slane %v2667, 2
          %v2761 = vsel %vm2717, %v2760, %v2759
          %v2762 = vrot.slane %v2668, 1
          %v2763 = vsel %vm2720, %v2762, %v2761
          %v2764 = vrot.slane %v2670, 7
          %v2765 = vsel %vm2702, %v2764, %v2669
          %v2766 = vrot.slane %v2671, 6
          %v2767 = vsel %vm2705, %v2766, %v2765
          %v2768 = vrot.slane %v2672, 5
          %v2769 = vsel %vm2708, %v2768, %v2767
          %v2770 = vrot.slane %v2673, 4
          %v2771 = vsel %vm2711, %v2770, %v2769
          %v2772 = vrot.slane %v2674, 3
          %v2773 = vsel %vm2714, %v2772, %v2771
          %v2774 = vrot.slane %v2675, 2
          %v2775 = vsel %vm2717, %v2774, %v2773
          %v2776 = vrot.slane %v2676, 1
          %v2777 = vsel %vm2720, %v2776, %v2775
          %v2778 = vrot.slane %v2678, 7
          %v2779 = vsel %vm2702, %v2778, %v2677
          %v2780 = vrot.slane %v2679, 6
          %v2781 = vsel %vm2705, %v2780, %v2779
          %v2782 = vrot.slane %v2680, 5
          %v2783 = vsel %vm2708, %v2782, %v2781
          %v2784 = vrot.slane %v2681, 4
          %v2785 = vsel %vm2711, %v2784, %v2783
          %v2786 = vrot.slane %v2682, 3
          %v2787 = vsel %vm2714, %v2786, %v2785
          %v2788 = vrot.slane %v2683, 2
          %v2789 = vsel %vm2717, %v2788, %v2787
          %v2790 = vrot.slane %v2684, 1
          %v2791 = vsel %vm2720, %v2790, %v2789
          %v2792 = vrot.slane %v2686, 7
          %v2793 = vsel %vm2702, %v2792, %v2685
          %v2794 = vrot.slane %v2687, 6
          %v2795 = vsel %vm2705, %v2794, %v2793
          %v2796 = vrot.slane %v2688, 5
          %v2797 = vsel %vm2708, %v2796, %v2795
          %v2798 = vrot.slane %v2689, 4
          %v2799 = vsel %vm2711, %v2798, %v2797
          %v2800 = vrot.slane %v2690, 3
          %v2801 = vsel %vm2714, %v2800, %v2799
          %v2802 = vrot.slane %v2691, 2
          %v2803 = vsel %vm2717, %v2802, %v2801
          %v2804 = vrot.slane %v2692, 1
          %v2805 = vsel %vm2720, %v2804, %v2803
          %v2806 = vrot.slane %v2694, 7
          %v2807 = vsel %vm2702, %v2806, %v2693
          %v2808 = vrot.slane %v2695, 6
          %v2809 = vsel %vm2705, %v2808, %v2807
          %v2810 = vrot.slane %v2696, 5
          %v2811 = vsel %vm2708, %v2810, %v2809
          %v2812 = vrot.slane %v2697, 4
          %v2813 = vsel %vm2711, %v2812, %v2811
          %v2814 = vrot.slane %v2698, 3
          %v2815 = vsel %vm2714, %v2814, %v2813
          %v2816 = vrot.slane %v2699, 2
          %v2817 = vsel %vm2717, %v2816, %v2815
          %v2818 = vrot.slane %v2700, 1
          %v2819 = vsel %vm2720, %v2818, %v2817
          %v2820 = vpack.c.b16 %v2735, %v2721
          %v2821 = vpack.c.b16 %v2763, %v2749
          %v2822 = vpack.c.b16 %v2791, %v2777
          %v2823 = vpack.c.b16 %v2819, %v2805
          %2828 = vst.msk [vmem:[#allocation3] sm:$0xff] %vm1196, %v2820
          %2829 = vst.msk [vmem:[#allocation3 + $0x8] sm:$0xff] %vm1196, %v2821
          %2830 = vst.msk [vmem:[#allocation3 + $0x10] sm:$0xff] %vm1196, %v2822
          %2831 = vst.msk [vmem:[#allocation3 + $0x18] sm:$0xff] %vm1196, %v2823
          %v2864 = vcombine.high %v1022, %v1022
          %v2866 = vunpack.c.l.s4 1983009808
          %v2867 = vunpack.c.0.s8 %v2866
          %v2868 = vlaneseq
          %v2869 = vshrl.u32 %v2868, 7
          %v2870 = vsub.s32 %v2867, %v2869
          %v2871 = vrot.slane %v1022, %v2870
          %v2873 = vunpack.c.l.s4 1983009808
          %v2874 = vunpack.c.0.s8 %v2873
          %v2875 = vlaneseq
          %v2876 = vshrl.u32 %v2875, 7
          %v2877 = vsub.s32 %v2874, %v2876
          %v2878 = vrot.slane %v2864, %v2877
          %v2879 = vcombine.high %v2871, %v2871
          %v2880 = vcombine.high %v2878, %v2878
          %v2881 = vcombine.high %v1027, %v1027
          %v2883 = vunpack.c.l.s4 1983009808
          %v2884 = vunpack.c.0.s8 %v2883
          %v2885 = vlaneseq
          %v2886 = vshrl.u32 %v2885, 7
          %v2887 = vsub.s32 %v2884, %v2886
          %v2888 = vrot.slane %v1027, %v2887
          %v2890 = vunpack.c.l.s4 1983009808
          %v2891 = vunpack.c.0.s8 %v2890
          %v2892 = vlaneseq
          %v2893 = vshrl.u32 %v2892, 7
          %v2894 = vsub.s32 %v2891, %v2893
          %v2895 = vrot.slane %v2881, %v2894
          %v2896 = vcombine.high %v2888, %v2888
          %v2897 = vcombine.high %v2895, %v2895
          %v2898 = vcombine.high %v1032, %v1032
          %v2900 = vunpack.c.l.s4 1983009808
          %v2901 = vunpack.c.0.s8 %v2900
          %v2902 = vlaneseq
          %v2903 = vshrl.u32 %v2902, 7
          %v2904 = vsub.s32 %v2901, %v2903
          %v2905 = vrot.slane %v1032, %v2904
          %v2907 = vunpack.c.l.s4 1983009808
          %v2908 = vunpack.c.0.s8 %v2907
          %v2909 = vlaneseq
          %v2910 = vshrl.u32 %v2909, 7
          %v2911 = vsub.s32 %v2908, %v2910
          %v2912 = vrot.slane %v2898, %v2911
          %v2913 = vcombine.high %v2905, %v2905
          %v2914 = vcombine.high %v2912, %v2912
          %v2915 = vcombine.high %v1037, %v1037
          %v2917 = vunpack.c.l.s4 1983009808
          %v2918 = vunpack.c.0.s8 %v2917
          %v2919 = vlaneseq
          %v2920 = vshrl.u32 %v2919, 7
          %v2921 = vsub.s32 %v2918, %v2920
          %v2922 = vrot.slane %v1037, %v2921
          %v2924 = vunpack.c.l.s4 1983009808
          %v2925 = vunpack.c.0.s8 %v2924
          %v2926 = vlaneseq
          %v2927 = vshrl.u32 %v2926, 7
          %v2928 = vsub.s32 %v2925, %v2927
          %v2929 = vrot.slane %v2915, %v2928
          %v2930 = vcombine.high %v2922, %v2922
          %v2931 = vcombine.high %v2929, %v2929
          %v2932 = vcombine.high %v1042, %v1042
          %v2934 = vunpack.c.l.s4 1983009808
          %v2935 = vunpack.c.0.s8 %v2934
          %v2936 = vlaneseq
          %v2937 = vshrl.u32 %v2936, 7
          %v2938 = vsub.s32 %v2935, %v2937
          %v2939 = vrot.slane %v1042, %v2938
          %v2941 = vunpack.c.l.s4 1983009808
          %v2942 = vunpack.c.0.s8 %v2941
          %v2943 = vlaneseq
          %v2944 = vshrl.u32 %v2943, 7
          %v2945 = vsub.s32 %v2942, %v2944
          %v2946 = vrot.slane %v2932, %v2945
          %v2947 = vcombine.high %v2939, %v2939
          %v2948 = vcombine.high %v2946, %v2946
          %v2949 = vcombine.high %v1047, %v1047
          %v2951 = vunpack.c.l.s4 1983009808
          %v2952 = vunpack.c.0.s8 %v2951
          %v2953 = vlaneseq
          %v2954 = vshrl.u32 %v2953, 7
          %v2955 = vsub.s32 %v2952, %v2954
          %v2956 = vrot.slane %v1047, %v2955
          %v2958 = vunpack.c.l.s4 1983009808
          %v2959 = vunpack.c.0.s8 %v2958
          %v2960 = vlaneseq
          %v2961 = vshrl.u32 %v2960, 7
          %v2962 = vsub.s32 %v2959, %v2961
          %v2963 = vrot.slane %v2949, %v2962
          %v2964 = vcombine.high %v2956, %v2956
          %v2965 = vcombine.high %v2963, %v2963
          %v2966 = vcombine.high %v1052, %v1052
          %v2968 = vunpack.c.l.s4 1983009808
          %v2969 = vunpack.c.0.s8 %v2968
          %v2970 = vlaneseq
          %v2971 = vshrl.u32 %v2970, 7
          %v2972 = vsub.s32 %v2969, %v2971
          %v2973 = vrot.slane %v1052, %v2972
          %v2975 = vunpack.c.l.s4 1983009808
          %v2976 = vunpack.c.0.s8 %v2975
          %v2977 = vlaneseq
          %v2978 = vshrl.u32 %v2977, 7
          %v2979 = vsub.s32 %v2976, %v2978
          %v2980 = vrot.slane %v2966, %v2979
          %v2981 = vcombine.high %v2973, %v2973
          %v2982 = vcombine.high %v2980, %v2980
          %v2983 = vcombine.high %v1057, %v1057
          %v2985 = vunpack.c.l.s4 1983009808
          %v2986 = vunpack.c.0.s8 %v2985
          %v2987 = vlaneseq
          %v2988 = vshrl.u32 %v2987, 7
          %v2989 = vsub.s32 %v2986, %v2988
          %v2990 = vrot.slane %v1057, %v2989
          %v2992 = vunpack.c.l.s4 1983009808
          %v2993 = vunpack.c.0.s8 %v2992
          %v2994 = vlaneseq
          %v2995 = vshrl.u32 %v2994, 7
          %v2996 = vsub.s32 %v2993, %v2995
          %v2997 = vrot.slane %v2983, %v2996
          %v2998 = vcombine.high %v2990, %v2990
          %v2999 = vcombine.high %v2997, %v2997
          %v3000 = vcombine.high %v1062, %v1062
          %v3002 = vunpack.c.l.s4 1983009808
          %v3003 = vunpack.c.0.s8 %v3002
          %v3004 = vlaneseq
          %v3005 = vshrl.u32 %v3004, 7
          %v3006 = vsub.s32 %v3003, %v3005
          %v3007 = vrot.slane %v1062, %v3006
          %v3009 = vunpack.c.l.s4 1983009808
          %v3010 = vunpack.c.0.s8 %v3009
          %v3011 = vlaneseq
          %v3012 = vshrl.u32 %v3011, 7
          %v3013 = vsub.s32 %v3010, %v3012
          %v3014 = vrot.slane %v3000, %v3013
          %v3015 = vcombine.high %v3007, %v3007
          %v3016 = vcombine.high %v3014, %v3014
          %v3017 = vcombine.high %v1067, %v1067
          %v3019 = vunpack.c.l.s4 1983009808
          %v3020 = vunpack.c.0.s8 %v3019
          %v3021 = vlaneseq
          %v3022 = vshrl.u32 %v3021, 7
          %v3023 = vsub.s32 %v3020, %v3022
          %v3024 = vrot.slane %v1067, %v3023
          %v3026 = vunpack.c.l.s4 1983009808
          %v3027 = vunpack.c.0.s8 %v3026
          %v3028 = vlaneseq
          %v3029 = vshrl.u32 %v3028, 7
          %v3030 = vsub.s32 %v3027, %v3029
          %v3031 = vrot.slane %v3017, %v3030
          %v3032 = vcombine.high %v3024, %v3024
          %v3033 = vcombine.high %v3031, %v3031
          %v3034 = vcombine.high %v1072, %v1072
          %v3036 = vunpack.c.l.s4 1983009808
          %v3037 = vunpack.c.0.s8 %v3036
          %v3038 = vlaneseq
          %v3039 = vshrl.u32 %v3038, 7
          %v3040 = vsub.s32 %v3037, %v3039
          %v3041 = vrot.slane %v1072, %v3040
          %v3043 = vunpack.c.l.s4 1983009808
          %v3044 = vunpack.c.0.s8 %v3043
          %v3045 = vlaneseq
          %v3046 = vshrl.u32 %v3045, 7
          %v3047 = vsub.s32 %v3044, %v3046
          %v3048 = vrot.slane %v3034, %v3047
          %v3049 = vcombine.high %v3041, %v3041
          %v3050 = vcombine.high %v3048, %v3048
          %v3051 = vcombine.high %v1077, %v1077
          %v3053 = vunpack.c.l.s4 1983009808
          %v3054 = vunpack.c.0.s8 %v3053
          %v3055 = vlaneseq
          %v3056 = vshrl.u32 %v3055, 7
          %v3057 = vsub.s32 %v3054, %v3056
          %v3058 = vrot.slane %v1077, %v3057
          %v3060 = vunpack.c.l.s4 1983009808
          %v3061 = vunpack.c.0.s8 %v3060
          %v3062 = vlaneseq
          %v3063 = vshrl.u32 %v3062, 7
          %v3064 = vsub.s32 %v3061, %v3063
          %v3065 = vrot.slane %v3051, %v3064
          %v3066 = vcombine.high %v3058, %v3058
          %v3067 = vcombine.high %v3065, %v3065
          %v3068 = vcombine.high %v1082, %v1082
          %v3070 = vunpack.c.l.s4 1983009808
          %v3071 = vunpack.c.0.s8 %v3070
          %v3072 = vlaneseq
          %v3073 = vshrl.u32 %v3072, 7
          %v3074 = vsub.s32 %v3071, %v3073
          %v3075 = vrot.slane %v1082, %v3074
          %v3077 = vunpack.c.l.s4 1983009808
          %v3078 = vunpack.c.0.s8 %v3077
          %v3079 = vlaneseq
          %v3080 = vshrl.u32 %v3079, 7
          %v3081 = vsub.s32 %v3078, %v3080
          %v3082 = vrot.slane %v3068, %v3081
          %v3083 = vcombine.high %v3075, %v3075
          %v3084 = vcombine.high %v3082, %v3082
          %v3085 = vcombine.high %v1087, %v1087
          %v3087 = vunpack.c.l.s4 1983009808
          %v3088 = vunpack.c.0.s8 %v3087
          %v3089 = vlaneseq
          %v3090 = vshrl.u32 %v3089, 7
          %v3091 = vsub.s32 %v3088, %v3090
          %v3092 = vrot.slane %v1087, %v3091
          %v3094 = vunpack.c.l.s4 1983009808
          %v3095 = vunpack.c.0.s8 %v3094
          %v3096 = vlaneseq
          %v3097 = vshrl.u32 %v3096, 7
          %v3098 = vsub.s32 %v3095, %v3097
          %v3099 = vrot.slane %v3085, %v3098
          %v3100 = vcombine.high %v3092, %v3092
          %v3101 = vcombine.high %v3099, %v3099
          %v3102 = vcombine.high %v1092, %v1092
          %v3104 = vunpack.c.l.s4 1983009808
          %v3105 = vunpack.c.0.s8 %v3104
          %v3106 = vlaneseq
          %v3107 = vshrl.u32 %v3106, 7
          %v3108 = vsub.s32 %v3105, %v3107
          %v3109 = vrot.slane %v1092, %v3108
          %v3111 = vunpack.c.l.s4 1983009808
          %v3112 = vunpack.c.0.s8 %v3111
          %v3113 = vlaneseq
          %v3114 = vshrl.u32 %v3113, 7
          %v3115 = vsub.s32 %v3112, %v3114
          %v3116 = vrot.slane %v3102, %v3115
          %v3117 = vcombine.high %v3109, %v3109
          %v3118 = vcombine.high %v3116, %v3116
          %v3119 = vcombine.high %v1097, %v1097
          %v3121 = vunpack.c.l.s4 1983009808
          %v3122 = vunpack.c.0.s8 %v3121
          %v3123 = vlaneseq
          %v3124 = vshrl.u32 %v3123, 7
          %v3125 = vsub.s32 %v3122, %v3124
          %v3126 = vrot.slane %v1097, %v3125
          %v3128 = vunpack.c.l.s4 1983009808
          %v3129 = vunpack.c.0.s8 %v3128
          %v3130 = vlaneseq
          %v3131 = vshrl.u32 %v3130, 7
          %v3132 = vsub.s32 %v3129, %v3131
          %v3133 = vrot.slane %v3119, %v3132
          %v3134 = vcombine.high %v3126, %v3126
          %v3135 = vcombine.high %v3133, %v3133
          %v3136 = vcombine.high %v1102, %v1102
          %v3138 = vunpack.c.l.s4 1983009808
          %v3139 = vunpack.c.0.s8 %v3138
          %v3140 = vlaneseq
          %v3141 = vshrl.u32 %v3140, 7
          %v3142 = vsub.s32 %v3139, %v3141
          %v3143 = vrot.slane %v1102, %v3142
          %v3145 = vunpack.c.l.s4 1983009808
          %v3146 = vunpack.c.0.s8 %v3145
          %v3147 = vlaneseq
          %v3148 = vshrl.u32 %v3147, 7
          %v3149 = vsub.s32 %v3146, %v3148
          %v3150 = vrot.slane %v3136, %v3149
          %v3151 = vcombine.high %v3143, %v3143
          %v3152 = vcombine.high %v3150, %v3150
          %v3153 = vcombine.high %v1107, %v1107
          %v3155 = vunpack.c.l.s4 1983009808
          %v3156 = vunpack.c.0.s8 %v3155
          %v3157 = vlaneseq
          %v3158 = vshrl.u32 %v3157, 7
          %v3159 = vsub.s32 %v3156, %v3158
          %v3160 = vrot.slane %v1107, %v3159
          %v3162 = vunpack.c.l.s4 1983009808
          %v3163 = vunpack.c.0.s8 %v3162
          %v3164 = vlaneseq
          %v3165 = vshrl.u32 %v3164, 7
          %v3166 = vsub.s32 %v3163, %v3165
          %v3167 = vrot.slane %v3153, %v3166
          %v3168 = vcombine.high %v3160, %v3160
          %v3169 = vcombine.high %v3167, %v3167
          %v3170 = vcombine.high %v1112, %v1112
          %v3172 = vunpack.c.l.s4 1983009808
          %v3173 = vunpack.c.0.s8 %v3172
          %v3174 = vlaneseq
          %v3175 = vshrl.u32 %v3174, 7
          %v3176 = vsub.s32 %v3173, %v3175
          %v3177 = vrot.slane %v1112, %v3176
          %v3179 = vunpack.c.l.s4 1983009808
          %v3180 = vunpack.c.0.s8 %v3179
          %v3181 = vlaneseq
          %v3182 = vshrl.u32 %v3181, 7
          %v3183 = vsub.s32 %v3180, %v3182
          %v3184 = vrot.slane %v3170, %v3183
          %v3185 = vcombine.high %v3177, %v3177
          %v3186 = vcombine.high %v3184, %v3184
          %v3187 = vcombine.high %v1117, %v1117
          %v3189 = vunpack.c.l.s4 1983009808
          %v3190 = vunpack.c.0.s8 %v3189
          %v3191 = vlaneseq
          %v3192 = vshrl.u32 %v3191, 7
          %v3193 = vsub.s32 %v3190, %v3192
          %v3194 = vrot.slane %v1117, %v3193
          %v3196 = vunpack.c.l.s4 1983009808
          %v3197 = vunpack.c.0.s8 %v3196
          %v3198 = vlaneseq
          %v3199 = vshrl.u32 %v3198, 7
          %v3200 = vsub.s32 %v3197, %v3199
          %v3201 = vrot.slane %v3187, %v3200
          %v3202 = vcombine.high %v3194, %v3194
          %v3203 = vcombine.high %v3201, %v3201
          %v3204 = vcombine.high %v1122, %v1122
          %v3206 = vunpack.c.l.s4 1983009808
          %v3207 = vunpack.c.0.s8 %v3206
          %v3208 = vlaneseq
          %v3209 = vshrl.u32 %v3208, 7
          %v3210 = vsub.s32 %v3207, %v3209
          %v3211 = vrot.slane %v1122, %v3210
          %v3213 = vunpack.c.l.s4 1983009808
          %v3214 = vunpack.c.0.s8 %v3213
          %v3215 = vlaneseq
          %v3216 = vshrl.u32 %v3215, 7
          %v3217 = vsub.s32 %v3214, %v3216
          %v3218 = vrot.slane %v3204, %v3217
          %v3219 = vcombine.high %v3211, %v3211
          %v3220 = vcombine.high %v3218, %v3218
          %v3221 = vcombine.high %v1127, %v1127
          %v3223 = vunpack.c.l.s4 1983009808
          %v3224 = vunpack.c.0.s8 %v3223
          %v3225 = vlaneseq
          %v3226 = vshrl.u32 %v3225, 7
          %v3227 = vsub.s32 %v3224, %v3226
          %v3228 = vrot.slane %v1127, %v3227
          %v3230 = vunpack.c.l.s4 1983009808
          %v3231 = vunpack.c.0.s8 %v3230
          %v3232 = vlaneseq
          %v3233 = vshrl.u32 %v3232, 7
          %v3234 = vsub.s32 %v3231, %v3233
          %v3235 = vrot.slane %v3221, %v3234
          %v3236 = vcombine.high %v3228, %v3228
          %v3237 = vcombine.high %v3235, %v3235
          %v3238 = vcombine.high %v1132, %v1132
          %v3240 = vunpack.c.l.s4 1983009808
          %v3241 = vunpack.c.0.s8 %v3240
          %v3242 = vlaneseq
          %v3243 = vshrl.u32 %v3242, 7
          %v3244 = vsub.s32 %v3241, %v3243
          %v3245 = vrot.slane %v1132, %v3244
          %v3247 = vunpack.c.l.s4 1983009808
          %v3248 = vunpack.c.0.s8 %v3247
          %v3249 = vlaneseq
          %v3250 = vshrl.u32 %v3249, 7
          %v3251 = vsub.s32 %v3248, %v3250
          %v3252 = vrot.slane %v3238, %v3251
          %v3253 = vcombine.high %v3245, %v3245
          %v3254 = vcombine.high %v3252, %v3252
          %v3255 = vcombine.high %v1137, %v1137
          %v3257 = vunpack.c.l.s4 1983009808
          %v3258 = vunpack.c.0.s8 %v3257
          %v3259 = vlaneseq
          %v3260 = vshrl.u32 %v3259, 7
          %v3261 = vsub.s32 %v3258, %v3260
          %v3262 = vrot.slane %v1137, %v3261
          %v3264 = vunpack.c.l.s4 1983009808
          %v3265 = vunpack.c.0.s8 %v3264
          %v3266 = vlaneseq
          %v3267 = vshrl.u32 %v3266, 7
          %v3268 = vsub.s32 %v3265, %v3267
          %v3269 = vrot.slane %v3255, %v3268
          %v3270 = vcombine.high %v3262, %v3262
          %v3271 = vcombine.high %v3269, %v3269
          %v3272 = vcombine.high %v1142, %v1142
          %v3274 = vunpack.c.l.s4 1983009808
          %v3275 = vunpack.c.0.s8 %v3274
          %v3276 = vlaneseq
          %v3277 = vshrl.u32 %v3276, 7
          %v3278 = vsub.s32 %v3275, %v3277
          %v3279 = vrot.slane %v1142, %v3278
          %v3281 = vunpack.c.l.s4 1983009808
          %v3282 = vunpack.c.0.s8 %v3281
          %v3283 = vlaneseq
          %v3284 = vshrl.u32 %v3283, 7
          %v3285 = vsub.s32 %v3282, %v3284
          %v3286 = vrot.slane %v3272, %v3285
          %v3287 = vcombine.high %v3279, %v3279
          %v3288 = vcombine.high %v3286, %v3286
          %v3289 = vcombine.high %v1147, %v1147
          %v3291 = vunpack.c.l.s4 1983009808
          %v3292 = vunpack.c.0.s8 %v3291
          %v3293 = vlaneseq
          %v3294 = vshrl.u32 %v3293, 7
          %v3295 = vsub.s32 %v3292, %v3294
          %v3296 = vrot.slane %v1147, %v3295
          %v3298 = vunpack.c.l.s4 1983009808
          %v3299 = vunpack.c.0.s8 %v3298
          %v3300 = vlaneseq
          %v3301 = vshrl.u32 %v3300, 7
          %v3302 = vsub.s32 %v3299, %v3301
          %v3303 = vrot.slane %v3289, %v3302
          %v3304 = vcombine.high %v3296, %v3296
          %v3305 = vcombine.high %v3303, %v3303
          %v3306 = vcombine.high %v1152, %v1152
          %v3308 = vunpack.c.l.s4 1983009808
          %v3309 = vunpack.c.0.s8 %v3308
          %v3310 = vlaneseq
          %v3311 = vshrl.u32 %v3310, 7
          %v3312 = vsub.s32 %v3309, %v3311
          %v3313 = vrot.slane %v1152, %v3312
          %v3315 = vunpack.c.l.s4 1983009808
          %v3316 = vunpack.c.0.s8 %v3315
          %v3317 = vlaneseq
          %v3318 = vshrl.u32 %v3317, 7
          %v3319 = vsub.s32 %v3316, %v3318
          %v3320 = vrot.slane %v3306, %v3319
          %v3321 = vcombine.high %v3313, %v3313
          %v3322 = vcombine.high %v3320, %v3320
          %v3323 = vcombine.high %v1157, %v1157
          %v3325 = vunpack.c.l.s4 1983009808
          %v3326 = vunpack.c.0.s8 %v3325
          %v3327 = vlaneseq
          %v3328 = vshrl.u32 %v3327, 7
          %v3329 = vsub.s32 %v3326, %v3328
          %v3330 = vrot.slane %v1157, %v3329
          %v3332 = vunpack.c.l.s4 1983009808
          %v3333 = vunpack.c.0.s8 %v3332
          %v3334 = vlaneseq
          %v3335 = vshrl.u32 %v3334, 7
          %v3336 = vsub.s32 %v3333, %v3335
          %v3337 = vrot.slane %v3323, %v3336
          %v3338 = vcombine.high %v3330, %v3330
          %v3339 = vcombine.high %v3337, %v3337
          %v3340 = vcombine.high %v1162, %v1162
          %v3342 = vunpack.c.l.s4 1983009808
          %v3343 = vunpack.c.0.s8 %v3342
          %v3344 = vlaneseq
          %v3345 = vshrl.u32 %v3344, 7
          %v3346 = vsub.s32 %v3343, %v3345
          %v3347 = vrot.slane %v1162, %v3346
          %v3349 = vunpack.c.l.s4 1983009808
          %v3350 = vunpack.c.0.s8 %v3349
          %v3351 = vlaneseq
          %v3352 = vshrl.u32 %v3351, 7
          %v3353 = vsub.s32 %v3350, %v3352
          %v3354 = vrot.slane %v3340, %v3353
          %v3355 = vcombine.high %v3347, %v3347
          %v3356 = vcombine.high %v3354, %v3354
          %v3357 = vcombine.high %v1167, %v1167
          %v3359 = vunpack.c.l.s4 1983009808
          %v3360 = vunpack.c.0.s8 %v3359
          %v3361 = vlaneseq
          %v3362 = vshrl.u32 %v3361, 7
          %v3363 = vsub.s32 %v3360, %v3362
          %v3364 = vrot.slane %v1167, %v3363
          %v3366 = vunpack.c.l.s4 1983009808
          %v3367 = vunpack.c.0.s8 %v3366
          %v3368 = vlaneseq
          %v3369 = vshrl.u32 %v3368, 7
          %v3370 = vsub.s32 %v3367, %v3369
          %v3371 = vrot.slane %v3357, %v3370
          %v3372 = vcombine.high %v3364, %v3364
          %v3373 = vcombine.high %v3371, %v3371
          %v3374 = vcombine.high %v1172, %v1172
          %v3376 = vunpack.c.l.s4 1983009808
          %v3377 = vunpack.c.0.s8 %v3376
          %v3378 = vlaneseq
          %v3379 = vshrl.u32 %v3378, 7
          %v3380 = vsub.s32 %v3377, %v3379
          %v3381 = vrot.slane %v1172, %v3380
          %v3383 = vunpack.c.l.s4 1983009808
          %v3384 = vunpack.c.0.s8 %v3383
          %v3385 = vlaneseq
          %v3386 = vshrl.u32 %v3385, 7
          %v3387 = vsub.s32 %v3384, %v3386
          %v3388 = vrot.slane %v3374, %v3387
          %v3389 = vcombine.high %v3381, %v3381
          %v3390 = vcombine.high %v3388, %v3388
          %v3391 = vcombine.high %v1177, %v1177
          %v3393 = vunpack.c.l.s4 1983009808
          %v3394 = vunpack.c.0.s8 %v3393
          %v3395 = vlaneseq
          %v3396 = vshrl.u32 %v3395, 7
          %v3397 = vsub.s32 %v3394, %v3396
          %v3398 = vrot.slane %v1177, %v3397
          %v3400 = vunpack.c.l.s4 1983009808
          %v3401 = vunpack.c.0.s8 %v3400
          %v3402 = vlaneseq
          %v3403 = vshrl.u32 %v3402, 7
          %v3404 = vsub.s32 %v3401, %v3403
          %v3405 = vrot.slane %v3391, %v3404
          %v3406 = vcombine.high %v3398, %v3398
          %v3407 = vcombine.high %v3405, %v3405
          %v3536 = vrot.slane %v2871, 7
          %v3537 = vrot.slane %v3536, 2
          %v3538 = vrot.slane %v2879, 7
          %v3539 = vrot.slane %v3538, 2
          %v3540 = vrot.slane %v2878, 7
          %v3541 = vrot.slane %v3540, 2
          %v3542 = vrot.slane %v2880, 7
          %v3543 = vrot.slane %v3542, 2
          %v3544 = vrot.slane %v2888, 7
          %v3545 = vrot.slane %v3544, 2
          %v3546 = vrot.slane %v2896, 7
          %v3547 = vrot.slane %v3546, 2
          %v3548 = vrot.slane %v2895, 7
          %v3549 = vrot.slane %v3548, 2
          %v3550 = vrot.slane %v2897, 7
          %v3551 = vrot.slane %v3550, 2
          %v3552 = vrot.slane %v2905, 7
          %v3553 = vrot.slane %v3552, 2
          %v3554 = vrot.slane %v2913, 7
          %v3555 = vrot.slane %v3554, 2
          %v3556 = vrot.slane %v2912, 7
          %v3557 = vrot.slane %v3556, 2
          %v3558 = vrot.slane %v2914, 7
          %v3559 = vrot.slane %v3558, 2
          %v3560 = vrot.slane %v2922, 7
          %v3561 = vrot.slane %v3560, 2
          %v3562 = vrot.slane %v2930, 7
          %v3563 = vrot.slane %v3562, 2
          %v3564 = vrot.slane %v2929, 7
          %v3565 = vrot.slane %v3564, 2
          %v3566 = vrot.slane %v2931, 7
          %v3567 = vrot.slane %v3566, 2
          %v3568 = vrot.slane %v2939, 7
          %v3569 = vrot.slane %v3568, 2
          %v3570 = vrot.slane %v2947, 7
          %v3571 = vrot.slane %v3570, 2
          %v3572 = vrot.slane %v2946, 7
          %v3573 = vrot.slane %v3572, 2
          %v3574 = vrot.slane %v2948, 7
          %v3575 = vrot.slane %v3574, 2
          %v3576 = vrot.slane %v2956, 7
          %v3577 = vrot.slane %v3576, 2
          %v3578 = vrot.slane %v2964, 7
          %v3579 = vrot.slane %v3578, 2
          %v3580 = vrot.slane %v2963, 7
          %v3581 = vrot.slane %v3580, 2
          %v3582 = vrot.slane %v2965, 7
          %v3583 = vrot.slane %v3582, 2
          %v3584 = vrot.slane %v2973, 7
          %v3585 = vrot.slane %v3584, 2
          %v3586 = vrot.slane %v2981, 7
          %v3587 = vrot.slane %v3586, 2
          %v3588 = vrot.slane %v2980, 7
          %v3589 = vrot.slane %v3588, 2
          %v3590 = vrot.slane %v2982, 7
          %v3591 = vrot.slane %v3590, 2
          %v3592 = vrot.slane %v2990, 7
          %v3593 = vrot.slane %v3592, 2
          %v3594 = vrot.slane %v2998, 7
          %v3595 = vrot.slane %v3594, 2
          %v3596 = vrot.slane %v2997, 7
          %v3597 = vrot.slane %v3596, 2
          %v3598 = vrot.slane %v2999, 7
          %v3599 = vrot.slane %v3598, 2
          %v3600 = vrot.slane %v3007, 7
          %v3601 = vrot.slane %v3600, 2
          %v3602 = vrot.slane %v3015, 7
          %v3603 = vrot.slane %v3602, 2
          %v3604 = vrot.slane %v3014, 7
          %v3605 = vrot.slane %v3604, 2
          %v3606 = vrot.slane %v3016, 7
          %v3607 = vrot.slane %v3606, 2
          %v3608 = vrot.slane %v3024, 7
          %v3609 = vrot.slane %v3608, 2
          %v3610 = vrot.slane %v3032, 7
          %v3611 = vrot.slane %v3610, 2
          %v3612 = vrot.slane %v3031, 7
          %v3613 = vrot.slane %v3612, 2
          %v3614 = vrot.slane %v3033, 7
          %v3615 = vrot.slane %v3614, 2
          %v3616 = vrot.slane %v3041, 7
          %v3617 = vrot.slane %v3616, 2
          %v3618 = vrot.slane %v3049, 7
          %v3619 = vrot.slane %v3618, 2
          %v3620 = vrot.slane %v3048, 7
          %v3621 = vrot.slane %v3620, 2
          %v3622 = vrot.slane %v3050, 7
          %v3623 = vrot.slane %v3622, 2
          %v3624 = vrot.slane %v3058, 7
          %v3625 = vrot.slane %v3624, 2
          %v3626 = vrot.slane %v3066, 7
          %v3627 = vrot.slane %v3626, 2
          %v3628 = vrot.slane %v3065, 7
          %v3629 = vrot.slane %v3628, 2
          %v3630 = vrot.slane %v3067, 7
          %v3631 = vrot.slane %v3630, 2
          %v3632 = vrot.slane %v3075, 7
          %v3633 = vrot.slane %v3632, 2
          %v3634 = vrot.slane %v3083, 7
          %v3635 = vrot.slane %v3634, 2
          %v3636 = vrot.slane %v3082, 7
          %v3637 = vrot.slane %v3636, 2
          %v3638 = vrot.slane %v3084, 7
          %v3639 = vrot.slane %v3638, 2
          %v3640 = vrot.slane %v3092, 7
          %v3641 = vrot.slane %v3640, 2
          %v3642 = vrot.slane %v3100, 7
          %v3643 = vrot.slane %v3642, 2
          %v3644 = vrot.slane %v3099, 7
          %v3645 = vrot.slane %v3644, 2
          %v3646 = vrot.slane %v3101, 7
          %v3647 = vrot.slane %v3646, 2
          %v3648 = vrot.slane %v3109, 7
          %v3649 = vrot.slane %v3648, 2
          %v3650 = vrot.slane %v3117, 7
          %v3651 = vrot.slane %v3650, 2
          %v3652 = vrot.slane %v3116, 7
          %v3653 = vrot.slane %v3652, 2
          %v3654 = vrot.slane %v3118, 7
          %v3655 = vrot.slane %v3654, 2
          %v3656 = vrot.slane %v3126, 7
          %v3657 = vrot.slane %v3656, 2
          %v3658 = vrot.slane %v3134, 7
          %v3659 = vrot.slane %v3658, 2
          %v3660 = vrot.slane %v3133, 7
          %v3661 = vrot.slane %v3660, 2
          %v3662 = vrot.slane %v3135, 7
          %v3663 = vrot.slane %v3662, 2
          %v3664 = vrot.slane %v3143, 7
          %v3665 = vrot.slane %v3664, 2
          %v3666 = vrot.slane %v3151, 7
          %v3667 = vrot.slane %v3666, 2
          %v3668 = vrot.slane %v3150, 7
          %v3669 = vrot.slane %v3668, 2
          %v3670 = vrot.slane %v3152, 7
          %v3671 = vrot.slane %v3670, 2
          %v3672 = vrot.slane %v3160, 7
          %v3673 = vrot.slane %v3672, 2
          %v3674 = vrot.slane %v3168, 7
          %v3675 = vrot.slane %v3674, 2
          %v3676 = vrot.slane %v3167, 7
          %v3677 = vrot.slane %v3676, 2
          %v3678 = vrot.slane %v3169, 7
          %v3679 = vrot.slane %v3678, 2
          %v3680 = vrot.slane %v3177, 7
          %v3681 = vrot.slane %v3680, 2
          %v3682 = vrot.slane %v3185, 7
          %v3683 = vrot.slane %v3682, 2
          %v3684 = vrot.slane %v3184, 7
          %v3685 = vrot.slane %v3684, 2
          %v3686 = vrot.slane %v3186, 7
          %v3687 = vrot.slane %v3686, 2
          %v3688 = vrot.slane %v3194, 7
          %v3689 = vrot.slane %v3688, 2
          %v3690 = vrot.slane %v3202, 7
          %v3691 = vrot.slane %v3690, 2
          %v3692 = vrot.slane %v3201, 7
          %v3693 = vrot.slane %v3692, 2
          %v3694 = vrot.slane %v3203, 7
          %v3695 = vrot.slane %v3694, 2
          %v3696 = vrot.slane %v3211, 7
          %v3697 = vrot.slane %v3696, 2
          %v3698 = vrot.slane %v3219, 7
          %v3699 = vrot.slane %v3698, 2
          %v3700 = vrot.slane %v3218, 7
          %v3701 = vrot.slane %v3700, 2
          %v3702 = vrot.slane %v3220, 7
          %v3703 = vrot.slane %v3702, 2
          %v3704 = vrot.slane %v3228, 7
          %v3705 = vrot.slane %v3704, 2
          %v3706 = vrot.slane %v3236, 7
          %v3707 = vrot.slane %v3706, 2
          %v3708 = vrot.slane %v3235, 7
          %v3709 = vrot.slane %v3708, 2
          %v3710 = vrot.slane %v3237, 7
          %v3711 = vrot.slane %v3710, 2
          %v3712 = vrot.slane %v3245, 7
          %v3713 = vrot.slane %v3712, 2
          %v3714 = vrot.slane %v3253, 7
          %v3715 = vrot.slane %v3714, 2
          %v3716 = vrot.slane %v3252, 7
          %v3717 = vrot.slane %v3716, 2
          %v3718 = vrot.slane %v3254, 7
          %v3719 = vrot.slane %v3718, 2
          %v3720 = vrot.slane %v3262, 7
          %v3721 = vrot.slane %v3720, 2
          %v3722 = vrot.slane %v3270, 7
          %v3723 = vrot.slane %v3722, 2
          %v3724 = vrot.slane %v3269, 7
          %v3725 = vrot.slane %v3724, 2
          %v3726 = vrot.slane %v3271, 7
          %v3727 = vrot.slane %v3726, 2
          %v3728 = vrot.slane %v3279, 7
          %v3729 = vrot.slane %v3728, 2
          %v3730 = vrot.slane %v3287, 7
          %v3731 = vrot.slane %v3730, 2
          %v3732 = vrot.slane %v3286, 7
          %v3733 = vrot.slane %v3732, 2
          %v3734 = vrot.slane %v3288, 7
          %v3735 = vrot.slane %v3734, 2
          %v3736 = vrot.slane %v3296, 7
          %v3737 = vrot.slane %v3736, 2
          %v3738 = vrot.slane %v3304, 7
          %v3739 = vrot.slane %v3738, 2
          %v3740 = vrot.slane %v3303, 7
          %v3741 = vrot.slane %v3740, 2
          %v3742 = vrot.slane %v3305, 7
          %v3743 = vrot.slane %v3742, 2
          %v3744 = vrot.slane %v3313, 7
          %v3745 = vrot.slane %v3744, 2
          %v3746 = vrot.slane %v3321, 7
          %v3747 = vrot.slane %v3746, 2
          %v3748 = vrot.slane %v3320, 7
          %v3749 = vrot.slane %v3748, 2
          %v3750 = vrot.slane %v3322, 7
          %v3751 = vrot.slane %v3750, 2
          %v3752 = vrot.slane %v3330, 7
          %v3753 = vrot.slane %v3752, 2
          %v3754 = vrot.slane %v3338, 7
          %v3755 = vrot.slane %v3754, 2
          %v3756 = vrot.slane %v3337, 7
          %v3757 = vrot.slane %v3756, 2
          %v3758 = vrot.slane %v3339, 7
          %v3759 = vrot.slane %v3758, 2
          %v3760 = vrot.slane %v3347, 7
          %v3761 = vrot.slane %v3760, 2
          %v3762 = vrot.slane %v3355, 7
          %v3763 = vrot.slane %v3762, 2
          %v3764 = vrot.slane %v3354, 7
          %v3765 = vrot.slane %v3764, 2
          %v3766 = vrot.slane %v3356, 7
          %v3767 = vrot.slane %v3766, 2
          %v3768 = vrot.slane %v3364, 7
          %v3769 = vrot.slane %v3768, 2
          %v3770 = vrot.slane %v3372, 7
          %v3771 = vrot.slane %v3770, 2
          %v3772 = vrot.slane %v3371, 7
          %v3773 = vrot.slane %v3772, 2
          %v3774 = vrot.slane %v3373, 7
          %v3775 = vrot.slane %v3774, 2
          %v3776 = vrot.slane %v3381, 7
          %v3777 = vrot.slane %v3776, 2
          %v3778 = vrot.slane %v3389, 7
          %v3779 = vrot.slane %v3778, 2
          %v3780 = vrot.slane %v3388, 7
          %v3781 = vrot.slane %v3780, 2
          %v3782 = vrot.slane %v3390, 7
          %v3783 = vrot.slane %v3782, 2
          %v3784 = vrot.slane %v3398, 7
          %v3785 = vrot.slane %v3784, 2
          %v3786 = vrot.slane %v3406, 7
          %v3787 = vrot.slane %v3786, 2
          %v3788 = vrot.slane %v3405, 7
          %v3789 = vrot.slane %v3788, 2
          %v3790 = vrot.slane %v3407, 7
          %v3791 = vrot.slane %v3790, 2
          %v3920 = vmax.f32 %v2871, %v3537
          %v3921 = vmax.f32 %v2879, %v3539
          %v3922 = vmax.f32 %v2878, %v3541
          %v3923 = vmax.f32 %v2880, %v3543
          %v3924 = vmax.f32 %v2888, %v3545
          %v3925 = vmax.f32 %v2896, %v3547
          %v3926 = vmax.f32 %v2895, %v3549
          %v3927 = vmax.f32 %v2897, %v3551
          %v3928 = vmax.f32 %v2905, %v3553
          %v3929 = vmax.f32 %v2913, %v3555
          %v3930 = vmax.f32 %v2912, %v3557
          %v3931 = vmax.f32 %v2914, %v3559
          %v3932 = vmax.f32 %v2922, %v3561
          %v3933 = vmax.f32 %v2930, %v3563
          %v3934 = vmax.f32 %v2929, %v3565
          %v3935 = vmax.f32 %v2931, %v3567
          %v3936 = vmax.f32 %v2939, %v3569
          %v3937 = vmax.f32 %v2947, %v3571
          %v3938 = vmax.f32 %v2946, %v3573
          %v3939 = vmax.f32 %v2948, %v3575
          %v3940 = vmax.f32 %v2956, %v3577
          %v3941 = vmax.f32 %v2964, %v3579
          %v3942 = vmax.f32 %v2963, %v3581
          %v3943 = vmax.f32 %v2965, %v3583
          %v3944 = vmax.f32 %v2973, %v3585
          %v3945 = vmax.f32 %v2981, %v3587
          %v3946 = vmax.f32 %v2980, %v3589
          %v3947 = vmax.f32 %v2982, %v3591
          %v3948 = vmax.f32 %v2990, %v3593
          %v3949 = vmax.f32 %v2998, %v3595
          %v3950 = vmax.f32 %v2997, %v3597
          %v3951 = vmax.f32 %v2999, %v3599
          %v3952 = vmax.f32 %v3007, %v3601
          %v3953 = vmax.f32 %v3015, %v3603
          %v3954 = vmax.f32 %v3014, %v3605
          %v3955 = vmax.f32 %v3016, %v3607
          %v3956 = vmax.f32 %v3024, %v3609
          %v3957 = vmax.f32 %v3032, %v3611
          %v3958 = vmax.f32 %v3031, %v3613
          %v3959 = vmax.f32 %v3033, %v3615
          %v3960 = vmax.f32 %v3041, %v3617
          %v3961 = vmax.f32 %v3049, %v3619
          %v3962 = vmax.f32 %v3048, %v3621
          %v3963 = vmax.f32 %v3050, %v3623
          %v3964 = vmax.f32 %v3058, %v3625
          %v3965 = vmax.f32 %v3066, %v3627
          %v3966 = vmax.f32 %v3065, %v3629
          %v3967 = vmax.f32 %v3067, %v3631
          %v3968 = vmax.f32 %v3075, %v3633
          %v3969 = vmax.f32 %v3083, %v3635
          %v3970 = vmax.f32 %v3082, %v3637
          %v3971 = vmax.f32 %v3084, %v3639
          %v3972 = vmax.f32 %v3092, %v3641
          %v3973 = vmax.f32 %v3100, %v3643
          %v3974 = vmax.f32 %v3099, %v3645
          %v3975 = vmax.f32 %v3101, %v3647
          %v3976 = vmax.f32 %v3109, %v3649
          %v3977 = vmax.f32 %v3117, %v3651
          %v3978 = vmax.f32 %v3116, %v3653
          %v3979 = vmax.f32 %v3118, %v3655
          %v3980 = vmax.f32 %v3126, %v3657
          %v3981 = vmax.f32 %v3134, %v3659
          %v3982 = vmax.f32 %v3133, %v3661
          %v3983 = vmax.f32 %v3135, %v3663
          %v3984 = vmax.f32 %v3143, %v3665
          %v3985 = vmax.f32 %v3151, %v3667
          %v3986 = vmax.f32 %v3150, %v3669
          %v3987 = vmax.f32 %v3152, %v3671
          %v3988 = vmax.f32 %v3160, %v3673
          %v3989 = vmax.f32 %v3168, %v3675
          %v3990 = vmax.f32 %v3167, %v3677
          %v3991 = vmax.f32 %v3169, %v3679
          %v3992 = vmax.f32 %v3177, %v3681
          %v3993 = vmax.f32 %v3185, %v3683
          %v3994 = vmax.f32 %v3184, %v3685
          %v3995 = vmax.f32 %v3186, %v3687
          %v3996 = vmax.f32 %v3194, %v3689
          %v3997 = vmax.f32 %v3202, %v3691
          %v3998 = vmax.f32 %v3201, %v3693
          %v3999 = vmax.f32 %v3203, %v3695
          %v4000 = vmax.f32 %v3211, %v3697
          %v4001 = vmax.f32 %v3219, %v3699
          %v4002 = vmax.f32 %v3218, %v3701
          %v4003 = vmax.f32 %v3220, %v3703
          %v4004 = vmax.f32 %v3228, %v3705
          %v4005 = vmax.f32 %v3236, %v3707
          %v4006 = vmax.f32 %v3235, %v3709
          %v4007 = vmax.f32 %v3237, %v3711
          %v4008 = vmax.f32 %v3245, %v3713
          %v4009 = vmax.f32 %v3253, %v3715
          %v4010 = vmax.f32 %v3252, %v3717
          %v4011 = vmax.f32 %v3254, %v3719
          %v4012 = vmax.f32 %v3262, %v3721
          %v4013 = vmax.f32 %v3270, %v3723
          %v4014 = vmax.f32 %v3269, %v3725
          %v4015 = vmax.f32 %v3271, %v3727
          %v4016 = vmax.f32 %v3279, %v3729
          %v4017 = vmax.f32 %v3287, %v3731
          %v4018 = vmax.f32 %v3286, %v3733
          %v4019 = vmax.f32 %v3288, %v3735
          %v4020 = vmax.f32 %v3296, %v3737
          %v4021 = vmax.f32 %v3304, %v3739
          %v4022 = vmax.f32 %v3303, %v3741
          %v4023 = vmax.f32 %v3305, %v3743
          %v4024 = vmax.f32 %v3313, %v3745
          %v4025 = vmax.f32 %v3321, %v3747
          %v4026 = vmax.f32 %v3320, %v3749
          %v4027 = vmax.f32 %v3322, %v3751
          %v4028 = vmax.f32 %v3330, %v3753
          %v4029 = vmax.f32 %v3338, %v3755
          %v4030 = vmax.f32 %v3337, %v3757
          %v4031 = vmax.f32 %v3339, %v3759
          %v4032 = vmax.f32 %v3347, %v3761
          %v4033 = vmax.f32 %v3355, %v3763
          %v4034 = vmax.f32 %v3354, %v3765
          %v4035 = vmax.f32 %v3356, %v3767
          %v4036 = vmax.f32 %v3364, %v3769
          %v4037 = vmax.f32 %v3372, %v3771
          %v4038 = vmax.f32 %v3371, %v3773
          %v4039 = vmax.f32 %v3373, %v3775
          %v4040 = vmax.f32 %v3381, %v3777
          %v4041 = vmax.f32 %v3389, %v3779
          %v4042 = vmax.f32 %v3388, %v3781
          %v4043 = vmax.f32 %v3390, %v3783
          %v4044 = vmax.f32 %v3398, %v3785
          %v4045 = vmax.f32 %v3406, %v3787
          %v4046 = vmax.f32 %v3405, %v3789
          %v4047 = vmax.f32 %v3407, %v3791
          %v4048 = vmax.f32 %v3920, %v3928
          %v4049 = vmax.f32 %v3921, %v3929
          %v4050 = vmax.f32 %v3922, %v3930
          %v4051 = vmax.f32 %v3923, %v3931
          %v4052 = vmax.f32 %v3924, %v3932
          %v4053 = vmax.f32 %v3925, %v3933
          %v4054 = vmax.f32 %v3926, %v3934
          %v4055 = vmax.f32 %v3927, %v3935
          %v4056 = vmax.f32 %v3936, %v3944
          %v4057 = vmax.f32 %v3937, %v3945
          %v4058 = vmax.f32 %v3938, %v3946
          %v4059 = vmax.f32 %v3939, %v3947
          %v4060 = vmax.f32 %v3940, %v3948
          %v4061 = vmax.f32 %v3941, %v3949
          %v4062 = vmax.f32 %v3942, %v3950
          %v4063 = vmax.f32 %v3943, %v3951
          %v4064 = vmax.f32 %v3952, %v3960
          %v4065 = vmax.f32 %v3953, %v3961
          %v4066 = vmax.f32 %v3954, %v3962
          %v4067 = vmax.f32 %v3955, %v3963
          %v4068 = vmax.f32 %v3956, %v3964
          %v4069 = vmax.f32 %v3957, %v3965
          %v4070 = vmax.f32 %v3958, %v3966
          %v4071 = vmax.f32 %v3959, %v3967
          %v4072 = vmax.f32 %v3968, %v3976
          %v4073 = vmax.f32 %v3969, %v3977
          %v4074 = vmax.f32 %v3970, %v3978
          %v4075 = vmax.f32 %v3971, %v3979
          %v4076 = vmax.f32 %v3972, %v3980
          %v4077 = vmax.f32 %v3973, %v3981
          %v4078 = vmax.f32 %v3974, %v3982
          %v4079 = vmax.f32 %v3975, %v3983
          %v4080 = vmax.f32 %v3984, %v3992
          %v4081 = vmax.f32 %v3985, %v3993
          %v4082 = vmax.f32 %v3986, %v3994
          %v4083 = vmax.f32 %v3987, %v3995
          %v4084 = vmax.f32 %v3988, %v3996
          %v4085 = vmax.f32 %v3989, %v3997
          %v4086 = vmax.f32 %v3990, %v3998
          %v4087 = vmax.f32 %v3991, %v3999
          %v4088 = vmax.f32 %v4000, %v4008
          %v4089 = vmax.f32 %v4001, %v4009
          %v4090 = vmax.f32 %v4002, %v4010
          %v4091 = vmax.f32 %v4003, %v4011
          %v4092 = vmax.f32 %v4004, %v4012
          %v4093 = vmax.f32 %v4005, %v4013
          %v4094 = vmax.f32 %v4006, %v4014
          %v4095 = vmax.f32 %v4007, %v4015
          %v4096 = vmax.f32 %v4016, %v4024
          %v4097 = vmax.f32 %v4017, %v4025
          %v4098 = vmax.f32 %v4018, %v4026
          %v4099 = vmax.f32 %v4019, %v4027
          %v4100 = vmax.f32 %v4020, %v4028
          %v4101 = vmax.f32 %v4021, %v4029
          %v4102 = vmax.f32 %v4022, %v4030
          %v4103 = vmax.f32 %v4023, %v4031
          %v4104 = vmax.f32 %v4032, %v4040
          %v4105 = vmax.f32 %v4033, %v4041
          %v4106 = vmax.f32 %v4034, %v4042
          %v4107 = vmax.f32 %v4035, %v4043
          %v4108 = vmax.f32 %v4036, %v4044
          %v4109 = vmax.f32 %v4037, %v4045
          %v4110 = vmax.f32 %v4038, %v4046
          %v4111 = vmax.f32 %v4039, %v4047
          %v4112 = vpack.c.bf16 %v4048, %v4048
          %v4113 = vpack.c.bf16 %v4049, %v4049
          %v4114 = vpack.c.bf16 %v4050, %v4050
          %v4115 = vpack.c.bf16 %v4051, %v4051
          %v4116 = vpack.c.bf16 %v4052, %v4052
          %v4117 = vpack.c.bf16 %v4053, %v4053
          %v4118 = vpack.c.bf16 %v4054, %v4054
          %v4119 = vpack.c.bf16 %v4055, %v4055
          %v4120 = vpack.c.bf16 %v4056, %v4056
          %v4121 = vpack.c.bf16 %v4057, %v4057
          %v4122 = vpack.c.bf16 %v4058, %v4058
          %v4123 = vpack.c.bf16 %v4059, %v4059
          %v4124 = vpack.c.bf16 %v4060, %v4060
          %v4125 = vpack.c.bf16 %v4061, %v4061
          %v4126 = vpack.c.bf16 %v4062, %v4062
          %v4127 = vpack.c.bf16 %v4063, %v4063
          %v4128 = vpack.c.bf16 %v4064, %v4064
          %v4129 = vpack.c.bf16 %v4065, %v4065
          %v4130 = vpack.c.bf16 %v4066, %v4066
          %v4131 = vpack.c.bf16 %v4067, %v4067
          %v4132 = vpack.c.bf16 %v4068, %v4068
          %v4133 = vpack.c.bf16 %v4069, %v4069
          %v4134 = vpack.c.bf16 %v4070, %v4070
          %v4135 = vpack.c.bf16 %v4071, %v4071
          %v4136 = vpack.c.bf16 %v4072, %v4072
          %v4137 = vpack.c.bf16 %v4073, %v4073
          %v4138 = vpack.c.bf16 %v4074, %v4074
          %v4139 = vpack.c.bf16 %v4075, %v4075
          %v4140 = vpack.c.bf16 %v4076, %v4076
          %v4141 = vpack.c.bf16 %v4077, %v4077
          %v4142 = vpack.c.bf16 %v4078, %v4078
          %v4143 = vpack.c.bf16 %v4079, %v4079
          %v4144 = vpack.c.bf16 %v4080, %v4080
          %v4145 = vpack.c.bf16 %v4081, %v4081
          %v4146 = vpack.c.bf16 %v4082, %v4082
          %v4147 = vpack.c.bf16 %v4083, %v4083
          %v4148 = vpack.c.bf16 %v4084, %v4084
          %v4149 = vpack.c.bf16 %v4085, %v4085
          %v4150 = vpack.c.bf16 %v4086, %v4086
          %v4151 = vpack.c.bf16 %v4087, %v4087
          %v4152 = vpack.c.bf16 %v4088, %v4088
          %v4153 = vpack.c.bf16 %v4089, %v4089
          %v4154 = vpack.c.bf16 %v4090, %v4090
          %v4155 = vpack.c.bf16 %v4091, %v4091
          %v4156 = vpack.c.bf16 %v4092, %v4092
          %v4157 = vpack.c.bf16 %v4093, %v4093
          %v4158 = vpack.c.bf16 %v4094, %v4094
          %v4159 = vpack.c.bf16 %v4095, %v4095
          %v4160 = vpack.c.bf16 %v4096, %v4096
          %v4161 = vpack.c.bf16 %v4097, %v4097
          %v4162 = vpack.c.bf16 %v4098, %v4098
          %v4163 = vpack.c.bf16 %v4099, %v4099
          %v4164 = vpack.c.bf16 %v4100, %v4100
          %v4165 = vpack.c.bf16 %v4101, %v4101
          %v4166 = vpack.c.bf16 %v4102, %v4102
          %v4167 = vpack.c.bf16 %v4103, %v4103
          %v4168 = vpack.c.bf16 %v4104, %v4104
          %v4169 = vpack.c.bf16 %v4105, %v4105
          %v4170 = vpack.c.bf16 %v4106, %v4106
          %v4171 = vpack.c.bf16 %v4107, %v4107
          %v4172 = vpack.c.bf16 %v4108, %v4108
          %v4173 = vpack.c.bf16 %v4109, %v4109
          %v4174 = vpack.c.bf16 %v4110, %v4110
          %v4175 = vpack.c.bf16 %v4111, %v4111
          %v4240 = vunpack.c.l.b16 %v4112
          %v4241 = vunpack.c.l.b16 %v4113
          %v4242 = vunpack.c.l.b16 %v4114
          %v4243 = vunpack.c.l.b16 %v4115
          %v4244 = vunpack.c.l.b16 %v4116
          %v4245 = vunpack.c.l.b16 %v4117
          %v4246 = vunpack.c.l.b16 %v4118
          %v4247 = vunpack.c.l.b16 %v4119
          %v4248 = vunpack.c.l.b16 %v4120
          %v4249 = vunpack.c.l.b16 %v4121
          %v4250 = vunpack.c.l.b16 %v4122
          %v4251 = vunpack.c.l.b16 %v4123
          %v4252 = vunpack.c.l.b16 %v4124
          %v4253 = vunpack.c.l.b16 %v4125
          %v4254 = vunpack.c.l.b16 %v4126
          %v4255 = vunpack.c.l.b16 %v4127
          %v4256 = vunpack.c.l.b16 %v4128
          %v4257 = vunpack.c.l.b16 %v4129
          %v4258 = vunpack.c.l.b16 %v4130
          %v4259 = vunpack.c.l.b16 %v4131
          %v4260 = vunpack.c.l.b16 %v4132
          %v4261 = vunpack.c.l.b16 %v4133
          %v4262 = vunpack.c.l.b16 %v4134
          %v4263 = vunpack.c.l.b16 %v4135
          %v4264 = vunpack.c.l.b16 %v4136
          %v4265 = vunpack.c.l.b16 %v4137
          %v4266 = vunpack.c.l.b16 %v4138
          %v4267 = vunpack.c.l.b16 %v4139
          %v4268 = vunpack.c.l.b16 %v4140
          %v4269 = vunpack.c.l.b16 %v4141
          %v4270 = vunpack.c.l.b16 %v4142
          %v4271 = vunpack.c.l.b16 %v4143
          %v4272 = vunpack.c.l.b16 %v4144
          %v4273 = vunpack.c.l.b16 %v4145
          %v4274 = vunpack.c.l.b16 %v4146
          %v4275 = vunpack.c.l.b16 %v4147
          %v4276 = vunpack.c.l.b16 %v4148
          %v4277 = vunpack.c.l.b16 %v4149
          %v4278 = vunpack.c.l.b16 %v4150
          %v4279 = vunpack.c.l.b16 %v4151
          %v4280 = vunpack.c.l.b16 %v4152
          %v4281 = vunpack.c.l.b16 %v4153
          %v4282 = vunpack.c.l.b16 %v4154
          %v4283 = vunpack.c.l.b16 %v4155
          %v4284 = vunpack.c.l.b16 %v4156
          %v4285 = vunpack.c.l.b16 %v4157
          %v4286 = vunpack.c.l.b16 %v4158
          %v4287 = vunpack.c.l.b16 %v4159
          %v4288 = vunpack.c.l.b16 %v4160
          %v4289 = vunpack.c.l.b16 %v4161
          %v4290 = vunpack.c.l.b16 %v4162
          %v4291 = vunpack.c.l.b16 %v4163
          %v4292 = vunpack.c.l.b16 %v4164
          %v4293 = vunpack.c.l.b16 %v4165
          %v4294 = vunpack.c.l.b16 %v4166
          %v4295 = vunpack.c.l.b16 %v4167
          %v4296 = vunpack.c.l.b16 %v4168
          %v4297 = vunpack.c.l.b16 %v4169
          %v4298 = vunpack.c.l.b16 %v4170
          %v4299 = vunpack.c.l.b16 %v4171
          %v4300 = vunpack.c.l.b16 %v4172
          %v4301 = vunpack.c.l.b16 %v4173
          %v4302 = vunpack.c.l.b16 %v4174
          %v4303 = vunpack.c.l.b16 %v4175
          %v4304 = vrot.slane %v4241, 7
          %v4305 = vsel %vm2702, %v4304, %v4240
          %v4306 = vrot.slane %v4242, 6
          %v4307 = vsel %vm2705, %v4306, %v4305
          %v4308 = vrot.slane %v4243, 5
          %v4309 = vsel %vm2708, %v4308, %v4307
          %v4310 = vrot.slane %v4244, 4
          %v4311 = vsel %vm2711, %v4310, %v4309
          %v4312 = vrot.slane %v4245, 3
          %v4313 = vsel %vm2714, %v4312, %v4311
          %v4314 = vrot.slane %v4246, 2
          %v4315 = vsel %vm2717, %v4314, %v4313
          %v4316 = vrot.slane %v4247, 1
          %v4317 = vsel %vm2720, %v4316, %v4315
          %v4318 = vrot.slane %v4249, 7
          %v4319 = vsel %vm2702, %v4318, %v4248
          %v4320 = vrot.slane %v4250, 6
          %v4321 = vsel %vm2705, %v4320, %v4319
          %v4322 = vrot.slane %v4251, 5
          %v4323 = vsel %vm2708, %v4322, %v4321
          %v4324 = vrot.slane %v4252, 4
          %v4325 = vsel %vm2711, %v4324, %v4323
          %v4326 = vrot.slane %v4253, 3
          %v4327 = vsel %vm2714, %v4326, %v4325
          %v4328 = vrot.slane %v4254, 2
          %v4329 = vsel %vm2717, %v4328, %v4327
          %v4330 = vrot.slane %v4255, 1
          %v4331 = vsel %vm2720, %v4330, %v4329
          %v4332 = vrot.slane %v4257, 7
          %v4333 = vsel %vm2702, %v4332, %v4256
          %v4334 = vrot.slane %v4258, 6
          %v4335 = vsel %vm2705, %v4334, %v4333
          %v4336 = vrot.slane %v4259, 5
          %v4337 = vsel %vm2708, %v4336, %v4335
          %v4338 = vrot.slane %v4260, 4
          %v4339 = vsel %vm2711, %v4338, %v4337
          %v4340 = vrot.slane %v4261, 3
          %v4341 = vsel %vm2714, %v4340, %v4339
          %v4342 = vrot.slane %v4262, 2
          %v4343 = vsel %vm2717, %v4342, %v4341
          %v4344 = vrot.slane %v4263, 1
          %v4345 = vsel %vm2720, %v4344, %v4343
          %v4346 = vrot.slane %v4265, 7
          %v4347 = vsel %vm2702, %v4346, %v4264
          %v4348 = vrot.slane %v4266, 6
          %v4349 = vsel %vm2705, %v4348, %v4347
          %v4350 = vrot.slane %v4267, 5
          %v4351 = vsel %vm2708, %v4350, %v4349
          %v4352 = vrot.slane %v4268, 4
          %v4353 = vsel %vm2711, %v4352, %v4351
          %v4354 = vrot.slane %v4269, 3
          %v4355 = vsel %vm2714, %v4354, %v4353
          %v4356 = vrot.slane %v4270, 2
          %v4357 = vsel %vm2717, %v4356, %v4355
          %v4358 = vrot.slane %v4271, 1
          %v4359 = vsel %vm2720, %v4358, %v4357
          %v4360 = vrot.slane %v4273, 7
          %v4361 = vsel %vm2702, %v4360, %v4272
          %v4362 = vrot.slane %v4274, 6
          %v4363 = vsel %vm2705, %v4362, %v4361
          %v4364 = vrot.slane %v4275, 5
          %v4365 = vsel %vm2708, %v4364, %v4363
          %v4366 = vrot.slane %v4276, 4
          %v4367 = vsel %vm2711, %v4366, %v4365
          %v4368 = vrot.slane %v4277, 3
          %v4369 = vsel %vm2714, %v4368, %v4367
          %v4370 = vrot.slane %v4278, 2
          %v4371 = vsel %vm2717, %v4370, %v4369
          %v4372 = vrot.slane %v4279, 1
          %v4373 = vsel %vm2720, %v4372, %v4371
          %v4374 = vrot.slane %v4281, 7
          %v4375 = vsel %vm2702, %v4374, %v4280
          %v4376 = vrot.slane %v4282, 6
          %v4377 = vsel %vm2705, %v4376, %v4375
          %v4378 = vrot.slane %v4283, 5
          %v4379 = vsel %vm2708, %v4378, %v4377
          %v4380 = vrot.slane %v4284, 4
          %v4381 = vsel %vm2711, %v4380, %v4379
          %v4382 = vrot.slane %v4285, 3
          %v4383 = vsel %vm2714, %v4382, %v4381
          %v4384 = vrot.slane %v4286, 2
          %v4385 = vsel %vm2717, %v4384, %v4383
          %v4386 = vrot.slane %v4287, 1
          %v4387 = vsel %vm2720, %v4386, %v4385
          %v4388 = vrot.slane %v4289, 7
          %v4389 = vsel %vm2702, %v4388, %v4288
          %v4390 = vrot.slane %v4290, 6
          %v4391 = vsel %vm2705, %v4390, %v4389
          %v4392 = vrot.slane %v4291, 5
          %v4393 = vsel %vm2708, %v4392, %v4391
          %v4394 = vrot.slane %v4292, 4
          %v4395 = vsel %vm2711, %v4394, %v4393
          %v4396 = vrot.slane %v4293, 3
          %v4397 = vsel %vm2714, %v4396, %v4395
          %v4398 = vrot.slane %v4294, 2
          %v4399 = vsel %vm2717, %v4398, %v4397
          %v4400 = vrot.slane %v4295, 1
          %v4401 = vsel %vm2720, %v4400, %v4399
          %v4402 = vrot.slane %v4297, 7
          %v4403 = vsel %vm2702, %v4402, %v4296
          %v4404 = vrot.slane %v4298, 6
          %v4405 = vsel %vm2705, %v4404, %v4403
          %v4406 = vrot.slane %v4299, 5
          %v4407 = vsel %vm2708, %v4406, %v4405
          %v4408 = vrot.slane %v4300, 4
          %v4409 = vsel %vm2711, %v4408, %v4407
          %v4410 = vrot.slane %v4301, 3
          %v4411 = vsel %vm2714, %v4410, %v4409
          %v4412 = vrot.slane %v4302, 2
          %v4413 = vsel %vm2717, %v4412, %v4411
          %v4414 = vrot.slane %v4303, 1
          %v4415 = vsel %vm2720, %v4414, %v4413
          %v4416 = vpack.c.b16 %v4331, %v4317
          %v4417 = vpack.c.b16 %v4359, %v4345
          %v4418 = vpack.c.b16 %v4387, %v4373
          %v4419 = vpack.c.b16 %v4415, %v4401
          %4424 = vst.msk [vmem:[#allocation4] sm:$0xff] %vm1196, %v4416
          %4425 = vst.msk [vmem:[#allocation4 + $0x8] sm:$0xff] %vm1196, %v4417
          %4426 = vst.msk [vmem:[#allocation4 + $0x10] sm:$0xff] %vm1196, %v4418
          %4427 = vst.msk [vmem:[#allocation4 + $0x18] sm:$0xff] %vm1196, %v4419
        $region48: #{tpu_custom_call.1} parent=43 // pred_fallthru
          _
        %s4428 = smul.u32 %s25, 256
        %s4429 = sshra.s32 %s4428, 4
        %s4430 = sand.u32 %s4428, 15
        %s4431 = smul.addr %s4429, 8
        %s4432 = scalar_lea.vmem [#allocation2], %s4431
        %v4433 = vld [vmem:[%s4432] sm:$0xff]
        %v4434 = vld [vmem:[%s4432 + $0x8] sm:$0xff]
        %v4435 = vld [vmem:[%s4432 + $0x10] sm:$0xff]
        %v4436 = vld [vmem:[%s4432 + $0x18] sm:$0xff]
        %v4437 = vld [vmem:[%s4432 + $0x20] sm:$0xff]
        %v4438 = vld [vmem:[%s4432 + $0x28] sm:$0xff]
        %v4439 = vld [vmem:[%s4432 + $0x30] sm:$0xff]
        %v4440 = vld [vmem:[%s4432 + $0x38] sm:$0xff]
        %v4441 = vld [vmem:[%s4432 + $0x40] sm:$0xff]
        %v4442 = vld [vmem:[%s4432 + $0x48] sm:$0xff]
        %v4443 = vld [vmem:[%s4432 + $0x50] sm:$0xff]
        %v4444 = vld [vmem:[%s4432 + $0x58] sm:$0xff]
        %v4445 = vld [vmem:[%s4432 + $0x60] sm:$0xff]
        %v4446 = vld [vmem:[%s4432 + $0x68] sm:$0xff]
        %v4447 = vld [vmem:[%s4432 + $0x70] sm:$0xff]
        %v4448 = vld [vmem:[%s4432 + $0x78] sm:$0xff]
        %v4449 = vld [vmem:[#allocation3] sm:$0xff]
        %v4450 = vld [vmem:[#allocation3 + $0x8] sm:$0xff]
        %v4451 = vld [vmem:[#allocation3 + $0x10] sm:$0xff]
        %v4452 = vld [vmem:[#allocation3 + $0x18] sm:$0xff]
        %v4453 = vld [vmem:[#allocation3 + $0x20] sm:$0xff]
        %v4454 = vld [vmem:[#allocation3 + $0x28] sm:$0xff]
        %v4455 = vld [vmem:[#allocation3 + $0x30] sm:$0xff]
        %v4456 = vld [vmem:[#allocation3 + $0x38] sm:$0xff]
        %v4457 = vld [vmem:[%s5] sm:$0x1]
        %v4459 = vlaneseq
        %v4460 = vshrl.u32 %v4459, 7
        %v4461 = vsub.s32 0, %v4460
        %v4462 = vrot.slane %v4457, %v4461
        %vm4464 = vcmask 64512
        %v4466 = vsel %vm4464, %v4433, 0
        %v4469 = vsel %vm4464, %v4434, 0
        %v4472 = vsel %vm4464, %v4435, 0
        %v4475 = vsel %vm4464, %v4436, 0
        %v4478 = vsel %vm4464, %v4437, 0
        %v4481 = vsel %vm4464, %v4438, 0
        %v4484 = vsel %vm4464, %v4439, 0
        %v4487 = vsel %vm4464, %v4440, 0
        %v4490 = vsel %vm4464, %v4441, 0
        %v4493 = vsel %vm4464, %v4442, 0
        %v4496 = vsel %vm4464, %v4443, 0
        %v4499 = vsel %vm4464, %v4444, 0
        %v4502 = vsel %vm4464, %v4445, 0
        %v4505 = vsel %vm4464, %v4446, 0
        %v4508 = vsel %vm4464, %v4447, 0
        %v4511 = vsel %vm4464, %v4448, 0
        %v4514 = vsel %vm4464, %v4449, 0
        %v4517 = vsel %vm4464, %v4450, 0
        %v4520 = vsel %vm4464, %v4451, 0
        %v4523 = vsel %vm4464, %v4452, 0
        %v4526 = vsel %vm4464, %v4453, 0
        %v4529 = vsel %vm4464, %v4454, 0
        %v4532 = vsel %vm4464, %v4455, 0
        %v4535 = vsel %vm4464, %v4456, 0
        %4537 = vmatprep.subr.bf16.mxu0 0
        %4538 = vmatpush1.bf16.xpose.msra.mxu0 %v4514
        %4539 = vmatprep.subr.bf16.mxu0 0
        %4540 = vmatpush1.bf16.xpose.msra.mxu0 %v4517
        %4541 = vmatprep.subr.bf16.mxu0 0
        %4542 = vmatpush1.bf16.xpose.msra.mxu0 %v4520
        %4543 = vmatprep.subr.bf16.mxu0 0
        %4544 = vmatpush1.bf16.xpose.msra.mxu0 %v4523
        %4545 = vmatprep.subr.bf16.mxu0 0
        %4546 = vmatpush1.bf16.xpose.msra.mxu0 %v4526
        %4547 = vmatprep.subr.bf16.mxu0 0
        %4548 = vmatpush1.bf16.xpose.msra.mxu0 %v4529
        %4549 = vmatprep.subr.bf16.mxu0 0
        %4550 = vmatpush1.bf16.xpose.msra.mxu0 %v4532
        %4551 = vmatprep.subr.bf16.mxu0 0
        %4552 = vmatpush1.bf16.xpose.msra.mxu0 %v4535
        %4553 = vmatprep.subr.bf16.mxu0 0
        %4554 = vmatpush1.bf16.xpose.msra.mxu0 0
        %4555 = vmatprep.subr.bf16.mxu0 0
        %4556 = vmatpush1.bf16.xpose.msra.mxu0 0
        %4557 = vmatprep.subr.bf16.mxu0 0
        %4558 = vmatpush1.bf16.xpose.msra.mxu0 0
        %4559 = vmatprep.subr.bf16.mxu0 0
        %4560 = vmatpush1.bf16.xpose.msra.mxu0 0
        %4561 = vmatprep.subr.bf16.mxu0 0
        %4562 = vmatpush1.bf16.xpose.msra.mxu0 0
        %4563 = vmatprep.subr.bf16.mxu0 0
        %4564 = vmatpush1.bf16.xpose.msra.mxu0 0
        %4565 = vmatprep.subr.bf16.mxu0 0
        %4566 = vmatpush1.bf16.xpose.msra.mxu0 0
        %4567 = vmatprep.subr.bf16.mxu0 0
        %4568 = vmatpush1.bf16.xpose.msra.mxu0 0
        %4569 = vmatprep.mubr.bf16.mxu0 0
        %4570 = vmatmul.mubr.bf16.gmra.mrb[0].mxu0 %v4466
        %v4571 = vpop.f32.mrb[0].mxu0
        %v4572 = vadd.f32 %v4462, %v4571
        %v4573 = vpop.f32.mrb[0].mxu0
        %v4574 = vpop.f32.mrb[0].mxu0
        %v4575 = vadd.f32 %v4462, %v4574
        %v4576 = vpop.f32.mrb[0].mxu0
        %4577 = vmatprep.mubr.bf16.mxu0 0
        %4578 = vmatmul.mubr.bf16.gmra.mrb[0].mxu0 %v4469
        %v4579 = vpop.f32.mrb[0].mxu0
        %v4580 = vadd.f32 %v4462, %v4579
        %v4581 = vpop.f32.mrb[0].mxu0
        %v4582 = vpop.f32.mrb[0].mxu0
        %v4583 = vadd.f32 %v4462, %v4582
        %v4584 = vpop.f32.mrb[0].mxu0
        %4585 = vmatprep.mubr.bf16.mxu0 0
        %4586 = vmatmul.mubr.bf16.gmra.mrb[0].mxu0 %v4472
        %v4587 = vpop.f32.mrb[0].mxu0
        %v4588 = vadd.f32 %v4462, %v4587
        %v4589 = vpop.f32.mrb[0].mxu0
        %v4590 = vpop.f32.mrb[0].mxu0
        %v4591 = vadd.f32 %v4462, %v4590
        %v4592 = vpop.f32.mrb[0].mxu0
        %4593 = vmatprep.mubr.bf16.mxu0 0
        %4594 = vmatmul.mubr.bf16.gmra.mrb[0].mxu0 %v4475
        %v4595 = vpop.f32.mrb[0].mxu0
        %v4596 = vadd.f32 %v4462, %v4595
        %v4597 = vpop.f32.mrb[0].mxu0
        %v4598 = vpop.f32.mrb[0].mxu0
        %v4599 = vadd.f32 %v4462, %v4598
        %v4600 = vpop.f32.mrb[0].mxu0
        %4601 = vmatprep.mubr.bf16.mxu0 0
        %4602 = vmatmul.mubr.bf16.gmra.mrb[0].mxu0 %v4478
        %v4603 = vpop.f32.mrb[0].mxu0
        %v4604 = vadd.f32 %v4462, %v4603
        %v4605 = vpop.f32.mrb[0].mxu0
        %v4606 = vpop.f32.mrb[0].mxu0
        %v4607 = vadd.f32 %v4462, %v4606
        %v4608 = vpop.f32.mrb[0].mxu0
        %4609 = vmatprep.mubr.bf16.mxu0 0
        %4610 = vmatmul.mubr.bf16.gmra.mrb[0].mxu0 %v4481
        %v4611 = vpop.f32.mrb[0].mxu0
        %v4612 = vadd.f32 %v4462, %v4611
        %v4613 = vpop.f32.mrb[0].mxu0
        %v4614 = vpop.f32.mrb[0].mxu0
        %v4615 = vadd.f32 %v4462, %v4614
        %v4616 = vpop.f32.mrb[0].mxu0
        %4617 = vmatprep.mubr.bf16.mxu0 0
        %4618 = vmatmul.mubr.bf16.gmra.mrb[0].mxu0 %v4484
        %v4619 = vpop.f32.mrb[0].mxu0
        %v4620 = vadd.f32 %v4462, %v4619
        %v4621 = vpop.f32.mrb[0].mxu0
        %v4622 = vpop.f32.mrb[0].mxu0
        %v4623 = vadd.f32 %v4462, %v4622
        %v4624 = vpop.f32.mrb[0].mxu0
        %4625 = vmatprep.mubr.bf16.mxu0 0
        %4626 = vmatmul.mubr.bf16.gmra.mrb[0].mxu0 %v4487
        %v4627 = vpop.f32.mrb[0].mxu0
        %v4628 = vadd.f32 %v4462, %v4627
        %v4629 = vpop.f32.mrb[0].mxu0
        %v4630 = vpop.f32.mrb[0].mxu0
        %v4631 = vadd.f32 %v4462, %v4630
        %v4632 = vpop.f32.mrb[0].mxu0
        %4633 = vmatprep.mubr.bf16.mxu0 0
        %4634 = vmatmul.mubr.bf16.gmra.mrb[0].mxu0 %v4490
        %v4635 = vpop.f32.mrb[0].mxu0
        %v4636 = vadd.f32 %v4462, %v4635
        %v4637 = vpop.f32.mrb[0].mxu0
        %v4638 = vpop.f32.mrb[0].mxu0
        %v4639 = vadd.f32 %v4462, %v4638
        %v4640 = vpop.f32.mrb[0].mxu0
        %4641 = vmatprep.mubr.bf16.mxu0 0
        %4642 = vmatmul.mubr.bf16.gmra.mrb[0].mxu0 %v4493
        %v4643 = vpop.f32.mrb[0].mxu0
        %v4644 = vadd.f32 %v4462, %v4643
        %v4645 = vpop.f32.mrb[0].mxu0
        %v4646 = vpop.f32.mrb[0].mxu0
        %v4647 = vadd.f32 %v4462, %v4646
        %v4648 = vpop.f32.mrb[0].mxu0
        %4649 = vmatprep.mubr.bf16.mxu0 0
        %4650 = vmatmul.mubr.bf16.gmra.mrb[0].mxu0 %v4496
        %v4651 = vpop.f32.mrb[0].mxu0
        %v4652 = vadd.f32 %v4462, %v4651
        %v4653 = vpop.f32.mrb[0].mxu0
        %v4654 = vpop.f32.mrb[0].mxu0
        %v4655 = vadd.f32 %v4462, %v4654
        %v4656 = vpop.f32.mrb[0].mxu0
        %4657 = vmatprep.mubr.bf16.mxu0 0
        %4658 = vmatmul.mubr.bf16.gmra.mrb[0].mxu0 %v4499
        %v4659 = vpop.f32.mrb[0].mxu0
        %v4660 = vadd.f32 %v4462, %v4659
        %v4661 = vpop.f32.mrb[0].mxu0
        %v4662 = vpop.f32.mrb[0].mxu0
        %v4663 = vadd.f32 %v4462, %v4662
        %v4664 = vpop.f32.mrb[0].mxu0
        %4665 = vmatprep.mubr.bf16.mxu0 0
        %4666 = vmatmul.mubr.bf16.gmra.mrb[0].mxu0 %v4502
        %v4667 = vpop.f32.mrb[0].mxu0
        %v4668 = vadd.f32 %v4462, %v4667
        %v4669 = vpop.f32.mrb[0].mxu0
        %v4670 = vpop.f32.mrb[0].mxu0
        %v4671 = vadd.f32 %v4462, %v4670
        %v4672 = vpop.f32.mrb[0].mxu0
        %4673 = vmatprep.mubr.bf16.mxu0 0
        %4674 = vmatmul.mubr.bf16.gmra.mrb[0].mxu0 %v4505
        %v4675 = vpop.f32.mrb[0].mxu0
        %v4676 = vadd.f32 %v4462, %v4675
        %v4677 = vpop.f32.mrb[0].mxu0
        %v4678 = vpop.f32.mrb[0].mxu0
        %v4679 = vadd.f32 %v4462, %v4678
        %v4680 = vpop.f32.mrb[0].mxu0
        %4681 = vmatprep.mubr.bf16.mxu0 0
        %4682 = vmatmul.mubr.bf16.gmra.mrb[0].mxu0 %v4508
        %v4683 = vpop.f32.mrb[0].mxu0
        %v4684 = vadd.f32 %v4462, %v4683
        %v4685 = vpop.f32.mrb[0].mxu0
        %v4686 = vpop.f32.mrb[0].mxu0
        %v4687 = vadd.f32 %v4462, %v4686
        %v4688 = vpop.f32.mrb[0].mxu0
        %4689 = vmatprep.mubr.bf16.mxu0 0
        %4690 = vmatmul.mubr.bf16.gmra.mrb[0].mxu0 %v4511
        %v4691 = vpop.f32.mrb[0].mxu0
        %v4692 = vadd.f32 %v4462, %v4691
        %v4693 = vpop.f32.mrb[0].mxu0
        %v4694 = vpop.f32.mrb[0].mxu0
        %v4695 = vadd.f32 %v4462, %v4694
        %v4696 = vpop.f32.mrb[0].mxu0
        %4697 = vdwg.mxu0
        %4698 = vmax.xlane.f32.xlu0 %v4572
        %v4699 = vpop.xlane.xlu0 %4698
        %4700 = vmax.xlane.f32.xlu0 %v4575
        %v4701 = vpop.xlane.xlu0 %4700
        %4702 = vmax.xlane.f32.xlu0 %v4580
        %v4703 = vpop.xlane.xlu0 %4702
        %4704 = vmax.xlane.f32.xlu0 %v4583
        %v4705 = vpop.xlane.xlu0 %4704
        %4706 = vmax.xlane.f32.xlu0 %v4588
        %v4707 = vpop.xlane.xlu0 %4706
        %4708 = vmax.xlane.f32.xlu0 %v4591
        %v4709 = vpop.xlane.xlu0 %4708
        %4710 = vmax.xlane.f32.xlu0 %v4596
        %v4711 = vpop.xlane.xlu0 %4710
        %4712 = vmax.xlane.f32.xlu0 %v4599
        %v4713 = vpop.xlane.xlu0 %4712
        %4714 = vmax.xlane.f32.xlu0 %v4604
        %v4715 = vpop.xlane.xlu0 %4714
        %4716 = vmax.xlane.f32.xlu0 %v4607
        %v4717 = vpop.xlane.xlu0 %4716
        %4718 = vmax.xlane.f32.xlu0 %v4612
        %v4719 = vpop.xlane.xlu0 %4718
        %4720 = vmax.xlane.f32.xlu0 %v4615
        %v4721 = vpop.xlane.xlu0 %4720
        %4722 = vmax.xlane.f32.xlu0 %v4620
        %v4723 = vpop.xlane.xlu0 %4722
        %4724 = vmax.xlane.f32.xlu0 %v4623
        %v4725 = vpop.xlane.xlu0 %4724
        %4726 = vmax.xlane.f32.xlu0 %v4628
        %v4727 = vpop.xlane.xlu0 %4726
        %4728 = vmax.xlane.f32.xlu0 %v4631
        %v4729 = vpop.xlane.xlu0 %4728
        %4730 = vmax.xlane.f32.xlu0 %v4636
        %v4731 = vpop.xlane.xlu0 %4730
        %4732 = vmax.xlane.f32.xlu0 %v4639
        %v4733 = vpop.xlane.xlu0 %4732
        %4734 = vmax.xlane.f32.xlu0 %v4644
        %v4735 = vpop.xlane.xlu0 %4734
        %4736 = vmax.xlane.f32.xlu0 %v4647
        %v4737 = vpop.xlane.xlu0 %4736
        %4738 = vmax.xlane.f32.xlu0 %v4652
        %v4739 = vpop.xlane.xlu0 %4738
        %4740 = vmax.xlane.f32.xlu0 %v4655
        %v4741 = vpop.xlane.xlu0 %4740
        %4742 = vmax.xlane.f32.xlu0 %v4660
        %v4743 = vpop.xlane.xlu0 %4742
        %4744 = vmax.xlane.f32.xlu0 %v4663
        %v4745 = vpop.xlane.xlu0 %4744
        %4746 = vmax.xlane.f32.xlu0 %v4668
        %v4747 = vpop.xlane.xlu0 %4746
        %4748 = vmax.xlane.f32.xlu0 %v4671
        %v4749 = vpop.xlane.xlu0 %4748
        %4750 = vmax.xlane.f32.xlu0 %v4676
        %v4751 = vpop.xlane.xlu0 %4750
        %4752 = vmax.xlane.f32.xlu0 %v4679
        %v4753 = vpop.xlane.xlu0 %4752
        %4754 = vmax.xlane.f32.xlu0 %v4684
        %v4755 = vpop.xlane.xlu0 %4754
        %4756 = vmax.xlane.f32.xlu0 %v4687
        %v4757 = vpop.xlane.xlu0 %4756
        %4758 = vmax.xlane.f32.xlu0 %v4692
        %v4759 = vpop.xlane.xlu0 %4758
        %4760 = vmax.xlane.f32.xlu0 %v4695
        %v4761 = vpop.xlane.xlu0 %4760
        %v4762 = vsub.f32 %v4572, %v4699
        %v4763 = vsub.f32 %v4575, %v4701
        %v4764 = vsub.f32 %v4580, %v4703
        %v4765 = vsub.f32 %v4583, %v4705
        %v4766 = vsub.f32 %v4588, %v4707
        %v4767 = vsub.f32 %v4591, %v4709
        %v4768 = vsub.f32 %v4596, %v4711
        %v4769 = vsub.f32 %v4599, %v4713
        %v4770 = vsub.f32 %v4604, %v4715
        %v4771 = vsub.f32 %v4607, %v4717
        %v4772 = vsub.f32 %v4612, %v4719
        %v4773 = vsub.f32 %v4615, %v4721
        %v4774 = vsub.f32 %v4620, %v4723
        %v4775 = vsub.f32 %v4623, %v4725
        %v4776 = vsub.f32 %v4628, %v4727
        %v4777 = vsub.f32 %v4631, %v4729
        %v4778 = vsub.f32 %v4636, %v4731
        %v4779 = vsub.f32 %v4639, %v4733
        %v4780 = vsub.f32 %v4644, %v4735
        %v4781 = vsub.f32 %v4647, %v4737
        %v4782 = vsub.f32 %v4652, %v4739
        %v4783 = vsub.f32 %v4655, %v4741
        %v4784 = vsub.f32 %v4660, %v4743
        %v4785 = vsub.f32 %v4663, %v4745
        %v4786 = vsub.f32 %v4668, %v4747
        %v4787 = vsub.f32 %v4671, %v4749
        %v4788 = vsub.f32 %v4676, %v4751
        %v4789 = vsub.f32 %v4679, %v4753
        %v4790 = vsub.f32 %v4684, %v4755
        %v4791 = vsub.f32 %v4687, %v4757
        %v4792 = vsub.f32 %v4692, %v4759
        %v4793 = vsub.f32 %v4695, %v4761
        %v4794 = vmul.f32 %v4762, 1.442695
        %v4795 = vpow.pop %v4794
        %v4796 = vmul.f32 %v4763, 1.442695
        %v4797 = vpow.pop %v4796
        %v4798 = vmul.f32 %v4764, 1.442695
        %v4799 = vpow.pop %v4798
        %v4800 = vmul.f32 %v4765, 1.442695
        %v4801 = vpow.pop %v4800
        %v4802 = vmul.f32 %v4766, 1.442695
        %v4803 = vpow.pop %v4802
        %v4804 = vmul.f32 %v4767, 1.442695
        %v4805 = vpow.pop %v4804
        %v4806 = vmul.f32 %v4768, 1.442695
        %v4807 = vpow.pop %v4806
        %v4808 = vmul.f32 %v4769, 1.442695
        %v4809 = vpow.pop %v4808
        %v4810 = vmul.f32 %v4770, 1.442695
        %v4811 = vpow.pop %v4810
        %v4812 = vmul.f32 %v4771, 1.442695
        %v4813 = vpow.pop %v4812
        %v4814 = vmul.f32 %v4772, 1.442695
        %v4815 = vpow.pop %v4814
        %v4816 = vmul.f32 %v4773, 1.442695
        %v4817 = vpow.pop %v4816
        %v4818 = vmul.f32 %v4774, 1.442695
        %v4819 = vpow.pop %v4818
        %v4820 = vmul.f32 %v4775, 1.442695
        %v4821 = vpow.pop %v4820
        %v4822 = vmul.f32 %v4776, 1.442695
        %v4823 = vpow.pop %v4822
        %v4824 = vmul.f32 %v4777, 1.442695
        %v4825 = vpow.pop %v4824
        %v4826 = vmul.f32 %v4778, 1.442695
        %v4827 = vpow.pop %v4826
        %v4828 = vmul.f32 %v4779, 1.442695
        %v4829 = vpow.pop %v4828
        %v4830 = vmul.f32 %v4780, 1.442695
        %v4831 = vpow.pop %v4830
        %v4832 = vmul.f32 %v4781, 1.442695
        %v4833 = vpow.pop %v4832
        %v4834 = vmul.f32 %v4782, 1.442695
        %v4835 = vpow.pop %v4834
        %v4836 = vmul.f32 %v4783, 1.442695
        %v4837 = vpow.pop %v4836
        %v4838 = vmul.f32 %v4784, 1.442695
        %v4839 = vpow.pop %v4838
        %v4840 = vmul.f32 %v4785, 1.442695
        %v4841 = vpow.pop %v4840
        %v4842 = vmul.f32 %v4786, 1.442695
        %v4843 = vpow.pop %v4842
        %v4844 = vmul.f32 %v4787, 1.442695
        %v4845 = vpow.pop %v4844
        %v4846 = vmul.f32 %v4788, 1.442695
        %v4847 = vpow.pop %v4846
        %v4848 = vmul.f32 %v4789, 1.442695
        %v4849 = vpow.pop %v4848
        %v4850 = vmul.f32 %v4790, 1.442695
        %v4851 = vpow.pop %v4850
        %v4852 = vmul.f32 %v4791, 1.442695
        %v4853 = vpow.pop %v4852
        %v4854 = vmul.f32 %v4792, 1.442695
        %v4855 = vpow.pop %v4854
        %v4856 = vmul.f32 %v4793, 1.442695
        %v4857 = vpow.pop %v4856
        %4858 = vadd.xlane.f32.xlu0 %v4795
        %v4859 = vpop.xlane.xlu0 %4858
        %4860 = vadd.xlane.f32.xlu0 %v4797
        %v4861 = vpop.xlane.xlu0 %4860
        %4862 = vadd.xlane.f32.xlu0 %v4799
        %v4863 = vpop.xlane.xlu0 %4862
        %4864 = vadd.xlane.f32.xlu0 %v4801
        %v4865 = vpop.xlane.xlu0 %4864
        %4866 = vadd.xlane.f32.xlu0 %v4803
        %v4867 = vpop.xlane.xlu0 %4866
        %4868 = vadd.xlane.f32.xlu0 %v4805
        %v4869 = vpop.xlane.xlu0 %4868
        %4870 = vadd.xlane.f32.xlu0 %v4807
        %v4871 = vpop.xlane.xlu0 %4870
        %4872 = vadd.xlane.f32.xlu0 %v4809
        %v4873 = vpop.xlane.xlu0 %4872
        %4874 = vadd.xlane.f32.xlu0 %v4811
        %v4875 = vpop.xlane.xlu0 %4874
        %4876 = vadd.xlane.f32.xlu0 %v4813
        %v4877 = vpop.xlane.xlu0 %4876
        %4878 = vadd.xlane.f32.xlu0 %v4815
        %v4879 = vpop.xlane.xlu0 %4878
        %4880 = vadd.xlane.f32.xlu0 %v4817
        %v4881 = vpop.xlane.xlu0 %4880
        %4882 = vadd.xlane.f32.xlu0 %v4819
        %v4883 = vpop.xlane.xlu0 %4882
        %4884 = vadd.xlane.f32.xlu0 %v4821
        %v4885 = vpop.xlane.xlu0 %4884
        %4886 = vadd.xlane.f32.xlu0 %v4823
        %v4887 = vpop.xlane.xlu0 %4886
        %4888 = vadd.xlane.f32.xlu0 %v4825
        %v4889 = vpop.xlane.xlu0 %4888
        %4890 = vadd.xlane.f32.xlu0 %v4827
        %v4891 = vpop.xlane.xlu0 %4890
        %4892 = vadd.xlane.f32.xlu0 %v4829
        %v4893 = vpop.xlane.xlu0 %4892
        %4894 = vadd.xlane.f32.xlu0 %v4831
        %v4895 = vpop.xlane.xlu0 %4894
        %4896 = vadd.xlane.f32.xlu0 %v4833
        %v4897 = vpop.xlane.xlu0 %4896
        %4898 = vadd.xlane.f32.xlu0 %v4835
        %v4899 = vpop.xlane.xlu0 %4898
        %4900 = vadd.xlane.f32.xlu0 %v4837
        %v4901 = vpop.xlane.xlu0 %4900
        %4902 = vadd.xlane.f32.xlu0 %v4839
        %v4903 = vpop.xlane.xlu0 %4902
        %4904 = vadd.xlane.f32.xlu0 %v4841
        %v4905 = vpop.xlane.xlu0 %4904
        %4906 = vadd.xlane.f32.xlu0 %v4843
        %v4907 = vpop.xlane.xlu0 %4906
        %4908 = vadd.xlane.f32.xlu0 %v4845
        %v4909 = vpop.xlane.xlu0 %4908
        %4910 = vadd.xlane.f32.xlu0 %v4847
        %v4911 = vpop.xlane.xlu0 %4910
        %4912 = vadd.xlane.f32.xlu0 %v4849
        %v4913 = vpop.xlane.xlu0 %4912
        %4914 = vadd.xlane.f32.xlu0 %v4851
        %v4915 = vpop.xlane.xlu0 %4914
        %4916 = vadd.xlane.f32.xlu0 %v4853
        %v4917 = vpop.xlane.xlu0 %4916
        %4918 = vadd.xlane.f32.xlu0 %v4855
        %v4919 = vpop.xlane.xlu0 %4918
        %4920 = vadd.xlane.f32.xlu0 %v4857
        %v4921 = vpop.xlane.xlu0 %4920
        %v4922 = vpack.c.bf16 %v4797, %v4795
        %v4923 = vpack.c.bf16 %v4801, %v4799
        %v4924 = vpack.c.bf16 %v4805, %v4803
        %v4925 = vpack.c.bf16 %v4809, %v4807
        %v4926 = vpack.c.bf16 %v4813, %v4811
        %v4927 = vpack.c.bf16 %v4817, %v4815
        %v4928 = vpack.c.bf16 %v4821, %v4819
        %v4929 = vpack.c.bf16 %v4825, %v4823
        %v4930 = vpack.c.bf16 %v4829, %v4827
        %v4931 = vpack.c.bf16 %v4833, %v4831
        %v4932 = vpack.c.bf16 %v4837, %v4835
        %v4933 = vpack.c.bf16 %v4841, %v4839
        %v4934 = vpack.c.bf16 %v4845, %v4843
        %v4935 = vpack.c.bf16 %v4849, %v4847
        %v4936 = vpack.c.bf16 %v4853, %v4851
        %v4937 = vpack.c.bf16 %v4857, %v4855
        %v4938 = vld [vmem:[#allocation4] sm:$0xff]
        %v4939 = vld [vmem:[#allocation4 + $0x8] sm:$0xff]
        %v4940 = vld [vmem:[#allocation4 + $0x10] sm:$0xff]
        %v4941 = vld [vmem:[#allocation4 + $0x18] sm:$0xff]
        %v4942 = vld [vmem:[#allocation4 + $0x20] sm:$0xff]
        %v4943 = vld [vmem:[#allocation4 + $0x28] sm:$0xff]
        %v4944 = vld [vmem:[#allocation4 + $0x30] sm:$0xff]
        %v4945 = vld [vmem:[#allocation4 + $0x38] sm:$0xff]
        %4946 = vmatprep.subr.bf16.mxu0 0
        %4947 = vmatpush1.bf16.msra.mxu0 %v4938
        %4948 = vmatprep.subr.bf16.mxu0 0
        %4949 = vmatpush1.bf16.msra.mxu0 %v4939
        %4950 = vmatprep.subr.bf16.mxu0 0
        %4951 = vmatpush1.bf16.msra.mxu0 %v4940
        %4952 = vmatprep.subr.bf16.mxu0 0
        %4953 = vmatpush1.bf16.msra.mxu0 %v4941
        %4954 = vmatprep.subr.bf16.mxu0 0
        %4955 = vmatpush1.bf16.msra.mxu0 %v4942
        %4956 = vmatprep.subr.bf16.mxu0 0
        %4957 = vmatpush1.bf16.msra.mxu0 %v4943
        %4958 = vmatprep.subr.bf16.mxu0 0
        %4959 = vmatpush1.bf16.msra.mxu0 %v4944
        %4960 = vmatprep.subr.bf16.mxu0 0
        %4961 = vmatpush1.bf16.msra.mxu0 %v4945
        %4962 = vmatprep.subr.bf16.mxu0 0
        %4963 = vmatpush1.bf16.msra.mxu0 0
        %4964 = vmatprep.subr.bf16.mxu0 0
        %4965 = vmatpush1.bf16.msra.mxu0 0
        %4966 = vmatprep.subr.bf16.mxu0 0
        %4967 = vmatpush1.bf16.msra.mxu0 0
        %4968 = vmatprep.subr.bf16.mxu0 0
        %4969 = vmatpush1.bf16.msra.mxu0 0
        %4970 = vmatprep.subr.bf16.mxu0 0
        %4971 = vmatpush1.bf16.msra.mxu0 0
        %4972 = vmatprep.subr.bf16.mxu0 0
        %4973 = vmatpush1.bf16.msra.mxu0 0
        %4974 = vmatprep.subr.bf16.mxu0 0
        %4975 = vmatpush1.bf16.msra.mxu0 0
        %4976 = vmatprep.subr.bf16.mxu0 0
        %4977 = vmatpush1.bf16.msra.mxu0 0
        %4978 = vmatprep.mubr.bf16.mxu0 0
        %4979 = vmatmul.mubr.bf16.gmra.mrb[0].mxu0 %v4922
        %v4980 = vpop.f32.mrb[0].mxu0
        %v4981 = vadd.f32 0.0, %v4980
        %v4982 = vpop.f32.mrb[0].mxu0
        %v4983 = vpop.f32.mrb[0].mxu0
        %v4984 = vadd.f32 0.0, %v4983
        %v4985 = vpop.f32.mrb[0].mxu0
        %4986 = vmatprep.mubr.bf16.mxu0 0
        %4987 = vmatmul.mubr.bf16.gmra.mrb[0].mxu0 %v4923
        %v4988 = vpop.f32.mrb[0].mxu0
        %v4989 = vadd.f32 0.0, %v4988
        %v4990 = vpop.f32.mrb[0].mxu0
        %v4991 = vpop.f32.mrb[0].mxu0
        %v4992 = vadd.f32 0.0, %v4991
        %v4993 = vpop.f32.mrb[0].mxu0
        %4994 = vmatprep.mubr.bf16.mxu0 0
        %4995 = vmatmul.mubr.bf16.gmra.mrb[0].mxu0 %v4924
        %v4996 = vpop.f32.mrb[0].mxu0
        %v4997 = vadd.f32 0.0, %v4996
        %v4998 = vpop.f32.mrb[0].mxu0
        %v4999 = vpop.f32.mrb[0].mxu0
        %v5000 = vadd.f32 0.0, %v4999
        %v5001 = vpop.f32.mrb[0].mxu0
        %5002 = vmatprep.mubr.bf16.mxu0 0
        %5003 = vmatmul.mubr.bf16.gmra.mrb[0].mxu0 %v4925
        %v5004 = vpop.f32.mrb[0].mxu0
        %v5005 = vadd.f32 0.0, %v5004
        %v5006 = vpop.f32.mrb[0].mxu0
        %v5007 = vpop.f32.mrb[0].mxu0
        %v5008 = vadd.f32 0.0, %v5007
        %v5009 = vpop.f32.mrb[0].mxu0
        %5010 = vmatprep.mubr.bf16.mxu0 0
        %5011 = vmatmul.mubr.bf16.gmra.mrb[0].mxu0 %v4926
        %v5012 = vpop.f32.mrb[0].mxu0
        %v5013 = vadd.f32 0.0, %v5012
        %v5014 = vpop.f32.mrb[0].mxu0
        %v5015 = vpop.f32.mrb[0].mxu0
        %v5016 = vadd.f32 0.0, %v5015
        %v5017 = vpop.f32.mrb[0].mxu0
        %5018 = vmatprep.mubr.bf16.mxu0 0
        %5019 = vmatmul.mubr.bf16.gmra.mrb[0].mxu0 %v4927
        %v5020 = vpop.f32.mrb[0].mxu0
        %v5021 = vadd.f32 0.0, %v5020
        %v5022 = vpop.f32.mrb[0].mxu0
        %v5023 = vpop.f32.mrb[0].mxu0
        %v5024 = vadd.f32 0.0, %v5023
        %v5025 = vpop.f32.mrb[0].mxu0
        %5026 = vmatprep.mubr.bf16.mxu0 0
        %5027 = vmatmul.mubr.bf16.gmra.mrb[0].mxu0 %v4928
        %v5028 = vpop.f32.mrb[0].mxu0
        %v5029 = vadd.f32 0.0, %v5028
        %v5030 = vpop.f32.mrb[0].mxu0
        %v5031 = vpop.f32.mrb[0].mxu0
        %v5032 = vadd.f32 0.0, %v5031
        %v5033 = vpop.f32.mrb[0].mxu0
        %5034 = vmatprep.mubr.bf16.mxu0 0
        %5035 = vmatmul.mubr.bf16.gmra.mrb[0].mxu0 %v4929
        %v5036 = vpop.f32.mrb[0].mxu0
        %v5037 = vadd.f32 0.0, %v5036
        %v5038 = vpop.f32.mrb[0].mxu0
        %v5039 = vpop.f32.mrb[0].mxu0
        %v5040 = vadd.f32 0.0, %v5039
        %v5041 = vpop.f32.mrb[0].mxu0
        %5042 = vmatprep.mubr.bf16.mxu0 0
        %5043 = vmatmul.mubr.bf16.gmra.mrb[0].mxu0 %v4930
        %v5044 = vpop.f32.mrb[0].mxu0
        %v5045 = vadd.f32 0.0, %v5044
        %v5046 = vpop.f32.mrb[0].mxu0
        %v5047 = vpop.f32.mrb[0].mxu0
        %v5048 = vadd.f32 0.0, %v5047
        %v5049 = vpop.f32.mrb[0].mxu0
        %5050 = vmatprep.mubr.bf16.mxu0 0
        %5051 = vmatmul.mubr.bf16.gmra.mrb[0].mxu0 %v4931
        %v5052 = vpop.f32.mrb[0].mxu0
        %v5053 = vadd.f32 0.0, %v5052
        %v5054 = vpop.f32.mrb[0].mxu0
        %v5055 = vpop.f32.mrb[0].mxu0
        %v5056 = vadd.f32 0.0, %v5055
        %v5057 = vpop.f32.mrb[0].mxu0
        %5058 = vmatprep.mubr.bf16.mxu0 0
        %5059 = vmatmul.mubr.bf16.gmra.mrb[0].mxu0 %v4932
        %v5060 = vpop.f32.mrb[0].mxu0
        %v5061 = vadd.f32 0.0, %v5060
        %v5062 = vpop.f32.mrb[0].mxu0
        %v5063 = vpop.f32.mrb[0].mxu0
        %v5064 = vadd.f32 0.0, %v5063
        %v5065 = vpop.f32.mrb[0].mxu0
        %5066 = vmatprep.mubr.bf16.mxu0 0
        %5067 = vmatmul.mubr.bf16.gmra.mrb[0].mxu0 %v4933
        %v5068 = vpop.f32.mrb[0].mxu0
        %v5069 = vadd.f32 0.0, %v5068
        %v5070 = vpop.f32.mrb[0].mxu0
        %v5071 = vpop.f32.mrb[0].mxu0
        %v5072 = vadd.f32 0.0, %v5071
        %v5073 = vpop.f32.mrb[0].mxu0
        %5074 = vmatprep.mubr.bf16.mxu0 0
        %5075 = vmatmul.mubr.bf16.gmra.mrb[0].mxu0 %v4934
        %v5076 = vpop.f32.mrb[0].mxu0
        %v5077 = vadd.f32 0.0, %v5076
        %v5078 = vpop.f32.mrb[0].mxu0
        %v5079 = vpop.f32.mrb[0].mxu0
        %v5080 = vadd.f32 0.0, %v5079
        %v5081 = vpop.f32.mrb[0].mxu0
        %5082 = vmatprep.mubr.bf16.mxu0 0
        %5083 = vmatmul.mubr.bf16.gmra.mrb[0].mxu0 %v4935
        %v5084 = vpop.f32.mrb[0].mxu0
        %v5085 = vadd.f32 0.0, %v5084
        %v5086 = vpop.f32.mrb[0].mxu0
        %v5087 = vpop.f32.mrb[0].mxu0
        %v5088 = vadd.f32 0.0, %v5087
        %v5089 = vpop.f32.mrb[0].mxu0
        %5090 = vmatprep.mubr.bf16.mxu0 0
        %5091 = vmatmul.mubr.bf16.gmra.mrb[0].mxu0 %v4936
        %v5092 = vpop.f32.mrb[0].mxu0
        %v5093 = vadd.f32 0.0, %v5092
        %v5094 = vpop.f32.mrb[0].mxu0
        %v5095 = vpop.f32.mrb[0].mxu0
        %v5096 = vadd.f32 0.0, %v5095
        %v5097 = vpop.f32.mrb[0].mxu0
        %5098 = vmatprep.mubr.bf16.mxu0 0
        %5099 = vmatmul.mubr.bf16.gmra.mrb[0].mxu0 %v4937
        %v5100 = vpop.f32.mrb[0].mxu0
        %v5101 = vadd.f32 0.0, %v5100
        %v5102 = vpop.f32.mrb[0].mxu0
        %v5103 = vpop.f32.mrb[0].mxu0
        %v5104 = vadd.f32 0.0, %v5103
        %v5105 = vpop.f32.mrb[0].mxu0
        %5106 = vdwg.mxu0
        %v5107 = vrcp.pop %v4859
        %v5108 = vrcp.pop %v4861
        %v5109 = vrcp.pop %v4863
        %v5110 = vrcp.pop %v4865
        %v5111 = vrcp.pop %v4867
        %v5112 = vrcp.pop %v4869
        %v5113 = vrcp.pop %v4871
        %v5114 = vrcp.pop %v4873
        %v5115 = vrcp.pop %v4875
        %v5116 = vrcp.pop %v4877
        %v5117 = vrcp.pop %v4879
        %v5118 = vrcp.pop %v4881
        %v5119 = vrcp.pop %v4883
        %v5120 = vrcp.pop %v4885
        %v5121 = vrcp.pop %v4887
        %v5122 = vrcp.pop %v4889
        %v5123 = vrcp.pop %v4891
        %v5124 = vrcp.pop %v4893
        %v5125 = vrcp.pop %v4895
        %v5126 = vrcp.pop %v4897
        %v5127 = vrcp.pop %v4899
        %v5128 = vrcp.pop %v4901
        %v5129 = vrcp.pop %v4903
        %v5130 = vrcp.pop %v4905
        %v5131 = vrcp.pop %v4907
        %v5132 = vrcp.pop %v4909
        %v5133 = vrcp.pop %v4911
        %v5134 = vrcp.pop %v4913
        %v5135 = vrcp.pop %v4915
        %v5136 = vrcp.pop %v4917
        %v5137 = vrcp.pop %v4919
        %v5138 = vrcp.pop %v4921
        %v5139 = vmul.f32 %v4981, %v5107
        %v5140 = vmul.f32 %v4984, %v5108
        %v5141 = vmul.f32 %v4989, %v5109
        %v5142 = vmul.f32 %v4992, %v5110
        %v5143 = vmul.f32 %v4997, %v5111
        %v5144 = vmul.f32 %v5000, %v5112
        %v5145 = vmul.f32 %v5005, %v5113
        %v5146 = vmul.f32 %v5008, %v5114
        %v5147 = vmul.f32 %v5013, %v5115
        %v5148 = vmul.f32 %v5016, %v5116
        %v5149 = vmul.f32 %v5021, %v5117
        %v5150 = vmul.f32 %v5024, %v5118
        %v5151 = vmul.f32 %v5029, %v5119
        %v5152 = vmul.f32 %v5032, %v5120
        %v5153 = vmul.f32 %v5037, %v5121
        %v5154 = vmul.f32 %v5040, %v5122
        %v5155 = vmul.f32 %v5045, %v5123
        %v5156 = vmul.f32 %v5048, %v5124
        %v5157 = vmul.f32 %v5053, %v5125
        %v5158 = vmul.f32 %v5056, %v5126
        %v5159 = vmul.f32 %v5061, %v5127
        %v5160 = vmul.f32 %v5064, %v5128
        %v5161 = vmul.f32 %v5069, %v5129
        %v5162 = vmul.f32 %v5072, %v5130
        %v5163 = vmul.f32 %v5077, %v5131
        %v5164 = vmul.f32 %v5080, %v5132
        %v5165 = vmul.f32 %v5085, %v5133
        %v5166 = vmul.f32 %v5088, %v5134
        %v5167 = vmul.f32 %v5093, %v5135
        %v5168 = vmul.f32 %v5096, %v5136
        %v5169 = vmul.f32 %v5101, %v5137
        %v5170 = vmul.f32 %v5104, %v5138
        %v5171 = vld [vmem:[%s3] sm:$0xf]
        %v5172 = vld [vmem:[%s3 + $0x4] sm:$0xf]
        %v5173 = vpack.c.bf16 %v5140, %v5139
        %v5174 = vpack.c.bf16 %v5142, %v5141
        %v5175 = vpack.c.bf16 %v5144, %v5143
        %v5176 = vpack.c.bf16 %v5146, %v5145
        %v5177 = vpack.c.bf16 %v5148, %v5147
        %v5178 = vpack.c.bf16 %v5150, %v5149
        %v5179 = vpack.c.bf16 %v5152, %v5151
        %v5180 = vpack.c.bf16 %v5154, %v5153
        %v5181 = vpack.c.bf16 %v5156, %v5155
        %v5182 = vpack.c.bf16 %v5158, %v5157
        %v5183 = vpack.c.bf16 %v5160, %v5159
        %v5184 = vpack.c.bf16 %v5162, %v5161
        %v5185 = vpack.c.bf16 %v5164, %v5163
        %v5186 = vpack.c.bf16 %v5166, %v5165
        %v5187 = vpack.c.bf16 %v5168, %v5167
        %v5188 = vpack.c.bf16 %v5170, %v5169
        %v5189 = vld [vmem:[%s4] sm:$0xff]
        %v5190 = vld [vmem:[%s4 + $0x8] sm:$0xff]
        %5192 = vset.pattern.permute.xlu0 0
        %5193 = vperm.xlu0 %5192, %v5189
        %v5194 = vpop.permute.xlu0 %5193
        %5197 = vset.pattern.permute.xlu0 0
        %5198 = vperm.xlu0 %5197, %v5190
        %v5199 = vpop.permute.xlu0 %5198
        %v5203 = vunpack.c.l.b16 %v5171
        %v5204 = vunpack.c.l.b16 %v5172
        %v5205 = vpack.c.b16 %v5204, %v5203
        %v5207 = vsel %vm4464, %v5205, 0
        %v5210 = vsel %vm4464, %v5173, 0
        %v5213 = vsel %vm4464, %v5174, 0
        %v5216 = vsel %vm4464, %v5175, 0
        %v5219 = vsel %vm4464, %v5176, 0
        %v5222 = vsel %vm4464, %v5177, 0
        %v5225 = vsel %vm4464, %v5178, 0
        %v5228 = vsel %vm4464, %v5179, 0
        %v5231 = vsel %vm4464, %v5180, 0
        %v5234 = vsel %vm4464, %v5181, 0
        %v5237 = vsel %vm4464, %v5182, 0
        %v5240 = vsel %vm4464, %v5183, 0
        %v5243 = vsel %vm4464, %v5184, 0
        %v5246 = vsel %vm4464, %v5185, 0
        %v5249 = vsel %vm4464, %v5186, 0
        %v5252 = vsel %vm4464, %v5187, 0
        %v5255 = vsel %vm4464, %v5188, 0
        %5257 = vmatprep.subr.bf16.mxu0 0
        %5258 = vmatpush1.bf16.xpose.msra.mxu0 %v5210
        %5259 = vmatprep.subr.bf16.mxu0 0
        %5260 = vmatpush1.bf16.xpose.msra.mxu0 %v5213
        %5261 = vmatprep.subr.bf16.mxu0 0
        %5262 = vmatpush1.bf16.xpose.msra.mxu0 %v5216
        %5263 = vmatprep.subr.bf16.mxu0 0
        %5264 = vmatpush1.bf16.xpose.msra.mxu0 %v5219
        %5265 = vmatprep.subr.bf16.mxu0 0
        %5266 = vmatpush1.bf16.xpose.msra.mxu0 %v5222
        %5267 = vmatprep.subr.bf16.mxu0 0
        %5268 = vmatpush1.bf16.xpose.msra.mxu0 %v5225
        %5269 = vmatprep.subr.bf16.mxu0 0
        %5270 = vmatpush1.bf16.xpose.msra.mxu0 %v5228
        %5271 = vmatprep.subr.bf16.mxu0 0
        %5272 = vmatpush1.bf16.xpose.msra.mxu0 %v5231
        %5273 = vmatprep.subr.bf16.mxu0 0
        %5274 = vmatpush1.bf16.xpose.msra.mxu0 %v5234
        %5275 = vmatprep.subr.bf16.mxu0 0
        %5276 = vmatpush1.bf16.xpose.msra.mxu0 %v5237
        %5277 = vmatprep.subr.bf16.mxu0 0
        %5278 = vmatpush1.bf16.xpose.msra.mxu0 %v5240
        %5279 = vmatprep.subr.bf16.mxu0 0
        %5280 = vmatpush1.bf16.xpose.msra.mxu0 %v5243
        %5281 = vmatprep.subr.bf16.mxu0 0
        %5282 = vmatpush1.bf16.xpose.msra.mxu0 %v5246
        %5283 = vmatprep.subr.bf16.mxu0 0
        %5284 = vmatpush1.bf16.xpose.msra.mxu0 %v5249
        %5285 = vmatprep.subr.bf16.mxu0 0
        %5286 = vmatpush1.bf16.xpose.msra.mxu0 %v5252
        %5287 = vmatprep.subr.bf16.mxu0 0
        %5288 = vmatpush1.bf16.xpose.msra.mxu0 %v5255
        %5289 = vmatprep.mubr.bf16.mxu0 0
        %5290 = vmatmul.mubr.bf16.gmra.mrb[0].mxu0 %v5207
        %v5291 = vpop.f32.mrb[0].mxu0
        %v5292 = vadd.f32 %v5194, %v5291
        %v5293 = vpop.f32.mrb[0].mxu0
        %v5294 = vadd.f32 %v5194, %v5293
        %v5295 = vpop.f32.mrb[0].mxu0
        %v5296 = vadd.f32 %v5199, %v5295
        %v5297 = vpop.f32.mrb[0].mxu0
        %v5298 = vadd.f32 %v5199, %v5297
        %5299 = vdwg.mxu0
        %v5300 = vpack.c.bf16 %v5296, %v5292
        %v5301 = vpack.c.bf16 %v5298, %v5294
        %v5304 = vunpack.c.l.b16 %v5300
        %v5305 = vunpack.c.l.b16 %v5301
        %v5306 = vunpack.c.h.b16 %v5300
        %v5307 = vunpack.c.h.b16 %v5301
        %v5308 = vpack.c.b16 %v5305, %v5304
        %v5309 = vpack.c.b16 %v5307, %v5306
        %5312 = vst [vmem:[%s258] sm:$0xff] %v5308
        %5313 = vst [vmem:[%s258 + $0x8] sm:$0xff] %v5309
        %s5314 = sand.u32 %s173, 1
        %s5315 = scalar_lea.sflag [#allocation6], %s5314
        %s5316 = sand.u32 %s173, 1
        %s5317 = smul.addr %s5316, 16
        %s5318 = scalar_lea.vmem [#allocation5], %s5317
        // Predicated region
        $region49: #{tpu_custom_call.1} parent=43 // pred_check
          %p5319 = pneg %p183
        $region50: #{tpu_custom_call.1} parent=43 // pred_check_branch
          %5321 = sbr.rel (%p5319) target = $region52
        $region51: #{tpu_custom_call.1} parent=43 // pred_region
          %s5322 = smul.u32 2, %s25
          %s5324 = ssub.s32 256, 256
          %5325 = vsyncadd %s5315, %s5324
          %s5326 = smul.addr %s24, 4
          %s5327 = sadd.s32 %s5322, %s5326
          %s5328 = smul.addr %s5327, 64
          %s5329 = scalar_lea.hbm %s6, %s5328
          %s5330 = sshll.u32 %s5318, 4
          %s5331 = int_to_ptr.vmem [resolvable:$true] %s5330
          %5336 = dma.vmem_to_hbm [thread:$0]  %s5331, 256, %s5329, %s5315, 128, 128, 8
        $region52: #{tpu_custom_call.1} parent=43 // pred_fallthru
          _
      $region44: #{tpu_custom_call.1} parent=5 // pred_fallthru
        _
      %p5337 = scmp.le.s32.totalorder 2, %s15
      // Predicated region
      $region53: #{tpu_custom_call.1} parent=5 // pred_check
        %p5338 = pneg %p5337
      $region54: #{tpu_custom_call.1} parent=5 // pred_check_branch
        %5340 = sbr.rel (%p5338) target = $region56
      $region55: #{tpu_custom_call.1} parent=5 // pred_region
        %s5341 = ssub.s32 %s15, 2
        // Predicated region
        $region57: #{tpu_custom_call.1} parent=55 // pred_check
          %p5342 = pneg %p189
        $region58: #{tpu_custom_call.1} parent=55 // pred_check_branch
          %5344 = sbr.rel (%p5342) target = $region60
        $region59: #{tpu_custom_call.1} parent=55 // pred_region
          %s5345 = sand.u32 %s174, 1
          %s5346 = scalar_lea.sflag [#allocation6], %s5345
          %s5347 = sand.u32 %s174, 1
          %s5348 = smul.addr %s5347, 16
          %s5349 = scalar_lea.vmem [#allocation5], %s5348
          %5350 = dma.done %s5346, 256
        $region60: #{tpu_custom_call.1} parent=55 // pred_fallthru
          _
      $region56: #{tpu_custom_call.1} parent=5 // pred_fallthru
        _
    $region6: #{tpu_custom_call.1} parent=1 // loop_footer
      %s19 = sadd.s32 1, %s15
    $region7: #{tpu_custom_call.1} parent=1 // loop_footer_branch
      %14 = sbr.rel target = $region3
    $region8: #{tpu_custom_call.1} parent=1 // loop_exit
      _
    %5351 = vsyncpa [#allocation6], 1
    %s5352 = scalar_lea.sflag [#allocation6], 1
    %5353 = vsyncpa %s5352, 1

</llo_original>
